<compile_context>
chip_gen: v7x
topology: tpu7x:2x2x1
jax: 0.10.0
libtpu: 0.0.40
codegen_flags: <defaults>
</compile_context>

<pallas_src>
import functools

import numpy as np
import jax
import jax.numpy as jnp
from jax.experimental import pallas as pl
from jax.experimental.pallas import tpu as pltpu

F32 = jnp.float32


def _layernorm_cm(x, w, b, eps=1e-5):
    # x: (C, N) channel-major; w, b: (C, 1). WithBias LayerNorm over channels.
    mu = jnp.mean(x, axis=0, keepdims=True)
    var = jnp.mean((x - mu) ** 2, axis=0, keepdims=True)
    return (x - mu) * jax.lax.rsqrt(var + eps) * w + b


# ------------------------------ fused kernel --------------------------------

def fused_block_kernel(x_ref, p_ref, ln1w_ref, ln1b_ref, wqkv_ref, wdw_ref,
                       maskm_ref, maskp_ref, tempb_ref, bias_ref, wproj_ref,
                       ln2w_ref, ln2b_ref, win_ref, wcon_ref, wout_ref,
                       o_ref, pad_ref, *, H, W, C, heads):
    HW = H * W
    C3 = 3 * C
    C6 = 2 * C3
    C2 = 2 * C

    # ---- channel-major loads: (C, HW) with HW on the lane axis (no transpose) --
    x_cm = x_ref[0]
    p_cm = p_ref[0]

    # ---- LayerNorm1 (over the C sublanes) + 1x1 qkv conv -----------------------
    ln1w = ln1w_ref[...]
    ln1b = ln1b_ref[...]
    xn1 = _layernorm_cm(x_cm, ln1w, ln1b)
    pn1 = _layernorm_cm(p_cm, ln1w, ln1b)

    wqkvT = wqkv_ref[...]                                        # (3C, C)
    qkv_x = jnp.dot(wqkvT, xn1, preferred_element_type=F32)      # (3C, HW)
    qkv_p = jnp.dot(wqkvT, pn1, preferred_element_type=F32)

    # ---- 3x3 depthwise conv in token space, both streams stacked channel-wise --
    img = jnp.concatenate([qkv_x.T, qkv_p.T], axis=1)            # (HW, 2*3C)

    # in-kernel zero padding (token space): W+1 zero rows front/back.
    pad_ref[0:W + 1, :] = jnp.zeros((W + 1, C6), F32)
    pad_ref[W + 1 + HW:HW + 2 * W + 2, :] = jnp.zeros((W + 1, C6), F32)
    pad_ref[W + 1:W + 1 + HW, :] = img

    wdw = wdw_ref[...]                                           # (3, 3, 2*3C)
    mask_m = maskm_ref[...]                                      # (HW,1): valid dj=-1
    mask_p = maskp_ref[...]                                      # (HW,1): valid dj=+1
    masks = {-1: mask_m, 0: None, 1: mask_p}

    acc = jnp.zeros((HW, C6), F32)
    for dj in (-1, 0, 1):
        colacc = jnp.zeros((HW, C6), F32)
        for di in (-1, 0, 1):
            start = (1 + di) * W + dj + 1                        # static, >= 0
            tap = pad_ref[start:start + HW, :]                   # (HW, 2*3C)
            colacc = colacc + tap * wdw[di + 1:di + 2, dj + 1]   # (1, 2*3C) bcast
        if masks[dj] is not None:
            colacc = colacc * masks[dj]                          # width-wrap fix
        acc = acc + colacc

    # ---- multi-head channel attention: all (stream, head) pairs in ONE matmul --
    accT = acc.T                                                 # (2*3C, HW)
    q_all = jnp.concatenate([accT[0:C],          accT[C3:C3 + C]],         axis=0)
    k_all = jnp.concatenate([accT[C:2 * C],      accT[C3 + C:C3 + 2 * C]], axis=0)
    v_all = jnp.concatenate([accT[2 * C:C3],     accT[C3 + 2 * C:C6]],     axis=0)

    # F.normalize(dim=-1), eps=1e-12  ==  x * rsqrt(max(sumsq, eps^2))
    qn = q_all * jax.lax.rsqrt(
        jnp.maximum(jnp.sum(q_all * q_all, axis=-1, keepdims=True), 1e-24))
    kn = k_all * jax.lax.rsqrt(
        jnp.maximum(jnp.sum(k_all * k_all, axis=-1, keepdims=True), 1e-24))

    # q @ k.T (contract HW) for all 2*heads blocks at once.
    a = jax.lax.dot_general(qn, kn, (((1,), (1,)), ((), ())),
                            preferred_element_type=F32)          # (2C, 2C)
    a = a * tempb_ref[...] + bias_ref[...]        # per-row temperature + block mask
    a = a - jnp.max(a, axis=-1, keepdims=True)
    e = jnp.exp(a)                                 # off-block entries underflow to 0
    inv = pl.reciprocal(jnp.sum(e, axis=-1, keepdims=True), approx=True)
    out_c = jnp.dot(e * inv, v_all, preferred_element_type=F32)  # (2C, HW)

    # ---- project_out (1x1) + residual, channel-major ---------------------------
    wprojT = wproj_ref[...]
    z1x = jnp.dot(wprojT, out_c[0:C], preferred_element_type=F32) + x_cm   # (C, HW)
    z1p = jnp.dot(wprojT, out_c[C:C2], preferred_element_type=F32) + p_cm

    # ---- x = x + ffn(norm2(x), norm2(p)), channel-major ------------------------
    ln2w = ln2w_ref[...]
    ln2b = ln2b_ref[...]
    xn2 = _layernorm_cm(z1x, ln2w, ln2b)
    pn2 = _layernorm_cm(z1p, ln2w, ln2b)

    xh = jnp.dot(win_ref[...], xn2, preferred_element_type=F32)   # (hidden, HW)
    ph = jnp.dot(wcon_ref[...], pn2, preferred_element_type=F32)
    g = 0.5 * xh * (1.0 + jax.lax.erf(xh * 0.7071067811865476))   # exact GELU
    y = g * ph
    out = jnp.dot(wout_ref[...], y, preferred_element_type=F32) + z1x

    # lane-dense store: (C, HW) with HW on the 128-lane axis, no transpose.
    o_ref[0] = out


# ------------------------------ full forward ---------------------------------

def transformer_block_forward(x_nchw, p_nchw, P):
    """x, p: (B, C, H, W) float32 (NCHW, like the PyTorch module). Returns NCHW."""
    B, C, H, W = x_nchw.shape
    HW = H * W
    heads = P['num_heads']
    ch = C // heads
    hidden = P['w_in'].shape[1]
    C3 = 3 * C
    C6 = 2 * C3
    C2 = 2 * C

    # NCHW -> (B, C, HW): pure reshape, no transpose / pad / split in the wrapper.
    x2 = x_nchw.reshape(B, C, HW)
    p2 = p_nchw.reshape(B, C, HW)

    # --- tiny weight layout plumbing (traced once per call, negligible) --------
    ln1w = P['ln1_w'].reshape(C, 1)
    ln1b = P['ln1_b'].reshape(C, 1)
    ln2w = P['ln2_w'].reshape(C, 1)
    ln2b = P['ln2_b'].reshape(C, 1)
    wqkvT = P['w_qkv'].T                                        # (3C, C)
    wdw2 = jnp.concatenate([P['w_dw'], P['w_dw']], axis=-1)     # (3, 3, 2*3C)
    wprojT = P['w_proj'].T                                      # (C, C)
    w_inT = P['w_in'].T                                         # (hidden, C)
    w_conT = P['w_con'].T                                       # (hidden, C)
    w_outT = P['w_out'].T                                       # (C, hidden)

    # per-row temperature for the stacked (2 streams x heads) attention.
    temp_b = jnp.tile(jnp.repeat(P['temperature'], ch), 2).reshape(C2, 1)
    # additive block-diagonal mask: 0 inside each (stream, head) block, -1e30 off.
    blk = np.kron(np.eye(2 * heads, dtype=np.float32),
                  np.ones((ch, ch), np.float32))
    attn_bias = jnp.asarray((1.0 - blk) * (-1e30))

    # width-wrap masks for the token-space depthwise conv (static, tiny).
    wpos = np.arange(HW, dtype=np.int32) % W
    mask_m = jnp.asarray((wpos >= 1).astype(np.float32).reshape(HW, 1))
    mask_p = jnp.asarray((wpos <= W - 2).astype(np.float32).reshape(HW, 1))

    kern = functools.partial(fused_block_kernel, H=H, W=W, C=C, heads=heads)

    full2 = lambda b: (0, 0)
    full3 = lambda b: (0, 0, 0)

    out = pl.pallas_call(
        kern,
        out_shape=jax.ShapeDtypeStruct((B, C, HW), F32),
        grid=(B,),
        in_specs=[
            pl.BlockSpec((1, C, HW), lambda b: (b, 0, 0)),     # x (channel-major)
            pl.BlockSpec((1, C, HW), lambda b: (b, 0, 0)),     # p
            pl.BlockSpec((C, 1), full2),                       # ln1 weight
            pl.BlockSpec((C, 1), full2),                       # ln1 bias
            pl.BlockSpec((C3, C), full2),                      # qkv 1x1 (transposed)
            pl.BlockSpec((3, 3, C6), full3),                   # depthwise 3x3 (x2 streams)
            pl.BlockSpec((HW, 1), full2),                      # mask dj=-1
            pl.BlockSpec((HW, 1), full2),                      # mask dj=+1
            pl.BlockSpec((C2, 1), full2),                      # per-row temperature
            pl.BlockSpec((C2, C2), full2),                     # block-diag attn bias
            pl.BlockSpec((C, C), full2),                       # project_out (transposed)
            pl.BlockSpec((C, 1), full2),                       # ln2 weight
            pl.BlockSpec((C, 1), full2),                       # ln2 bias
            pl.BlockSpec((hidden, C), full2),                  # ffn.project_in (transposed)
            pl.BlockSpec((hidden, C), full2),                  # ffn.con1x1 (transposed)
            pl.BlockSpec((C, hidden), full2),                  # ffn.project_out (transposed)
        ],
        out_specs=pl.BlockSpec((1, C, HW), lambda b: (b, 0, 0)),
        scratch_shapes=[pltpu.VMEM((HW + 2 * W + 2, C6), F32)],
        compiler_params=pltpu.CompilerParams(dimension_semantics=("parallel",)),
    )(x2, p2, ln1w, ln1b, wqkvT, wdw2, mask_m, mask_p, temp_b, attn_bias,
      wprojT, ln2w, ln2b, w_inT, w_conT, w_outT)

    return out.reshape(B, C, H, W)


# ---------------------------- pure-JAX reference ------------------------------

def ref_forward(x_nchw, p_nchw, P):
    B, C, H, W = x_nchw.shape
    HW = H * W
    heads = P['num_heads']
    ch = C // heads

    def to_tok(t):
        return jnp.transpose(t, (0, 2, 3, 1)).reshape(t.shape[0], HW, C)

    def ln(z, w, b):
        mu = z.mean(-1, keepdims=True)
        var = ((z - mu) ** 2).mean(-1, keepdims=True)
        return (z - mu) / jnp.sqrt(var + 1e-5) * w + b

    def attn(z_tok):
        N = z_tok.shape[0]
        zn = ln(z_tok, P['ln1_w'], P['ln1_b'])
        qkv = zn @ P['w_qkv']
        img = qkv.reshape(N, H, W, 3 * C)
        pad = jnp.pad(img, ((0, 0), (1, 1), (1, 1), (0, 0)))
        dw = sum(pad[:, i:i + H, j:j + W, :] * P['w_dw'][i, j]
                 for i in range(3) for j in range(3))
        flat = dw.reshape(N, HW, 3 * C)
        q, k, v = jnp.split(flat, 3, -1)

        def toh(t):
            return jnp.transpose(t, (0, 2, 1)).reshape(N, heads, ch, HW)

        q, k, v = toh(q), toh(k), toh(v)
        qn = q / jnp.maximum(jnp.linalg.norm(q, axis=-1, keepdims=True), 1e-12)
        kn = k / jnp.maximum(jnp.linalg.norm(k, axis=-1, keepdims=True), 1e-12)
        a = jnp.einsum('nhcx,nhdx->nhcd', qn, kn) * P['temperature'].reshape(1, heads, 1, 1)
        a = jax.nn.softmax(a, axis=-1)
        o = jnp.einsum('nhcd,nhdx->nhcx', a, v)
        o = jnp.transpose(o.reshape(N, C, HW), (0, 2, 1))
        return o @ P['w_proj']

    xs, ps = to_tok(x_nchw), to_tok(p_nchw)
    x1 = xs + attn(xs)
    p1 = ps + attn(ps)
    xn = ln(x1, P['ln2_w'], P['ln2_b'])
    pn = ln(p1, P['ln2_w'], P['ln2_b'])
    xh = xn @ P['w_in']
    ph = pn @ P['w_con']
    g = 0.5 * xh * (1.0 + jax.lax.erf(xh * 0.7071067811865476))
    out = x1 + (g * ph) @ P['w_out']
    return jnp.transpose(out.reshape(B, H, W, C), (0, 3, 1, 2))


# ----------------------------------- main -------------------------------------

if __name__ == "__main__":
    B, C, H, W = 2, 16, 16, 12       # dim=16
    heads = 2                        # num_heads=2
    ffn_expansion_factor = 2.0       # hidden_features = 32
    hidden = int(C * ffn_expansion_factor)

    key = jax.random.PRNGKey(0)
    ks = jax.random.split(key, 10)

    P = dict(
        num_heads=heads,
        # LayerNorm params follow the module init (WithBias: weight=1, bias=0)
        ln1_w=jnp.ones((1, C), F32), ln1_b=jnp.zeros((1, C), F32),
        ln2_w=jnp.ones((1, C), F32), ln2_b=jnp.zeros((1, C), F32),
        temperature=jnp.ones((heads,), F32),
        # conv weights (deterministic synthetic init), stored channels-last friendly:
        w_qkv=0.1 * jax.random.normal(ks[0], (C, 3 * C), F32),        # 1x1 conv dim->3dim
        w_dw=0.1 * jax.random.normal(ks[1], (3, 3, 3 * C), F32),      # 3x3 depthwise, groups=3dim
        w_proj=0.1 * jax.random.normal(ks[2], (C, C), F32),           # 1x1 project_out
        w_in=0.1 * jax.random.normal(ks[3], (C, hidden), F32),        # ffn.project_in
        w_con=0.1 * jax.random.normal(ks[4], (C, hidden), F32),       # ffn.con1x1
        w_out=0.1 * jax.random.normal(ks[5], (hidden, C), F32),       # ffn.project_out
    )

    x = jax.random.normal(ks[6], (B, C, H, W), F32)
    p = jax.random.normal(ks[7], (B, C, H, W), F32)

    out = transformer_block_forward(x, p, P)
    out = jax.block_until_ready(out)

    ref = ref_forward(x, p, P)
    assert out.shape == (B, C, H, W)
    err = float(jnp.max(jnp.abs(out - ref)))
    # tolerance accounts for pl.reciprocal(approx=True) in the softmax denominator
    assert jnp.allclose(out, ref, atol=2e-3, rtol=2e-3), f"max abs err {err}"
    print("KERNEL_OK")
</pallas_src>

<mosaic_0001>
module attributes {stable_mosaic.version = 11 : i64} {
  func.func @fused_block_kernel(%arg0: i32, %arg1: memref<1x16x192xf32, #tpu.memory_space<vmem>>, %arg2: memref<1x16x192xf32, #tpu.memory_space<vmem>>, %arg3: memref<16x1xf32, #tpu.memory_space<vmem>>, %arg4: memref<16x1xf32, #tpu.memory_space<vmem>>, %arg5: memref<48x16xf32, #tpu.memory_space<vmem>>, %arg6: memref<3x3x96xf32, #tpu.memory_space<vmem>>, %arg7: memref<192x1xf32, #tpu.memory_space<vmem>>, %arg8: memref<192x1xf32, #tpu.memory_space<vmem>>, %arg9: memref<32x1xf32, #tpu.memory_space<vmem>>, %arg10: memref<32x32xf32, #tpu.memory_space<vmem>>, %arg11: memref<16x16xf32, #tpu.memory_space<vmem>>, %arg12: memref<16x1xf32, #tpu.memory_space<vmem>>, %arg13: memref<16x1xf32, #tpu.memory_space<vmem>>, %arg14: memref<32x16xf32, #tpu.memory_space<vmem>>, %arg15: memref<32x16xf32, #tpu.memory_space<vmem>>, %arg16: memref<16x32xf32, #tpu.memory_space<vmem>>, %arg17: memref<1x16x192xf32, #tpu.memory_space<vmem>>, %arg18: memref<218x96xf32, #tpu.memory_space<vmem>>) attributes {dimension_semantics = [#tpu.dimension_semantics<parallel>], iteration_bounds = array<i64: 2>, scalar_prefetch = 0 : i64, scratch_operands = 1 : i64, tpu.core_type = #tpu.core_type<tc>, window_params = [{transform_indices = @transform_0, window_bounds = array<i64: 1, 16, 192>}, {transform_indices = @transform_1, window_bounds = array<i64: 1, 16, 192>}, {pipeline_mode = #tpu.pipeline_mode<synchronous>, transform_indices = @transform_2, window_bounds = array<i64: 16, 1>}, {pipeline_mode = #tpu.pipeline_mode<synchronous>, transform_indices = @transform_3, window_bounds = array<i64: 16, 1>}, {pipeline_mode = #tpu.pipeline_mode<synchronous>, transform_indices = @transform_4, window_bounds = array<i64: 48, 16>}, {pipeline_mode = #tpu.pipeline_mode<synchronous>, transform_indices = @transform_5, window_bounds = array<i64: 3, 3, 96>}, {pipeline_mode = #tpu.pipeline_mode<synchronous>, transform_indices = @transform_6, window_bounds = array<i64: 192, 1>}, {pipeline_mode = #tpu.pipeline_mode<synchronous>, transform_indices = @transform_7, window_bounds = array<i64: 192, 1>}, {pipeline_mode = #tpu.pipeline_mode<synchronous>, transform_indices = @transform_8, window_bounds = array<i64: 32, 1>}, {pipeline_mode = #tpu.pipeline_mode<synchronous>, transform_indices = @transform_9, window_bounds = array<i64: 32, 32>}, {pipeline_mode = #tpu.pipeline_mode<synchronous>, transform_indices = @transform_10, window_bounds = array<i64: 16, 16>}, {pipeline_mode = #tpu.pipeline_mode<synchronous>, transform_indices = @transform_11, window_bounds = array<i64: 16, 1>}, {pipeline_mode = #tpu.pipeline_mode<synchronous>, transform_indices = @transform_12, window_bounds = array<i64: 16, 1>}, {pipeline_mode = #tpu.pipeline_mode<synchronous>, transform_indices = @transform_13, window_bounds = array<i64: 32, 16>}, {pipeline_mode = #tpu.pipeline_mode<synchronous>, transform_indices = @transform_14, window_bounds = array<i64: 32, 16>}, {pipeline_mode = #tpu.pipeline_mode<synchronous>, transform_indices = @transform_15, window_bounds = array<i64: 16, 32>}, {transform_indices = @transform_16, window_bounds = array<i64: 1, 16, 192>}]} {
    %c0 = arith.constant 0 : index
    %c0_0 = arith.constant 0 : index
    %c0_1 = arith.constant 0 : index
    %0 = vector.load %arg1[%c0, %c0_0, %c0_1] : memref<1x16x192xf32, #tpu.memory_space<vmem>>, vector<1x16x192xf32>
    %1 = vector.shape_cast %0 : vector<1x16x192xf32> to vector<16x192xf32>
    %c0_2 = arith.constant 0 : index
    %c0_3 = arith.constant 0 : index
    %c0_4 = arith.constant 0 : index
    %2 = vector.load %arg2[%c0_2, %c0_3, %c0_4] : memref<1x16x192xf32, #tpu.memory_space<vmem>>, vector<1x16x192xf32>
    %3 = vector.shape_cast %2 : vector<1x16x192xf32> to vector<16x192xf32>
    %c0_5 = arith.constant 0 : index
    %c0_6 = arith.constant 0 : index
    %4 = vector.load %arg3[%c0_5, %c0_6] : memref<16x1xf32, #tpu.memory_space<vmem>>, vector<16x1xf32>
    %c0_7 = arith.constant 0 : index
    %c0_8 = arith.constant 0 : index
    %5 = vector.load %arg4[%c0_7, %c0_8] : memref<16x1xf32, #tpu.memory_space<vmem>>, vector<16x1xf32>
    %cst = arith.constant dense<0.000000e+00> : vector<192xf32>
    %6 = vector.multi_reduction <add>, %1, %cst [0] : vector<16x192xf32> to vector<192xf32>
    %7 = vector.shape_cast %6 : vector<192xf32> to vector<1x192xf32>
    %cst_9 = arith.constant 1.600000e+01 : f32
    %8 = vector.broadcast %cst_9 : f32 to vector<1x192xf32>
    %9 = arith.divf %7, %8 : vector<1x192xf32>
    %10 = vector.broadcast %9 : vector<1x192xf32> to vector<16x192xf32>
    %11 = arith.subf %1, %10 : vector<16x192xf32>
    %12 = arith.mulf %11, %11 : vector<16x192xf32>
    %cst_10 = arith.constant dense<0.000000e+00> : vector<192xf32>
    %13 = vector.multi_reduction <add>, %12, %cst_10 [0] : vector<16x192xf32> to vector<192xf32>
    %14 = vector.shape_cast %13 : vector<192xf32> to vector<1x192xf32>
    %cst_11 = arith.constant 1.600000e+01 : f32
    %15 = vector.broadcast %cst_11 : f32 to vector<1x192xf32>
    %16 = arith.divf %14, %15 : vector<1x192xf32>
    %17 = vector.broadcast %9 : vector<1x192xf32> to vector<16x192xf32>
    %18 = arith.subf %1, %17 : vector<16x192xf32>
    %cst_12 = arith.constant 9.99999974E-6 : f32
    %19 = vector.broadcast %cst_12 : f32 to vector<1x192xf32>
    %20 = arith.addf %16, %19 : vector<1x192xf32>
    %21 = math.rsqrt %20 : vector<1x192xf32>
    %22 = vector.broadcast %21 : vector<1x192xf32> to vector<16x192xf32>
    %23 = arith.mulf %18, %22 : vector<16x192xf32>
    %24 = vector.broadcast %4 : vector<16x1xf32> to vector<16x192xf32>
    %25 = arith.mulf %23, %24 : vector<16x192xf32>
    %26 = vector.broadcast %5 : vector<16x1xf32> to vector<16x192xf32>
    %27 = arith.addf %25, %26 : vector<16x192xf32>
    %cst_13 = arith.constant dense<0.000000e+00> : vector<192xf32>
    %28 = vector.multi_reduction <add>, %3, %cst_13 [0] : vector<16x192xf32> to vector<192xf32>
    %29 = vector.shape_cast %28 : vector<192xf32> to vector<1x192xf32>
    %cst_14 = arith.constant 1.600000e+01 : f32
    %30 = vector.broadcast %cst_14 : f32 to vector<1x192xf32>
    %31 = arith.divf %29, %30 : vector<1x192xf32>
    %32 = vector.broadcast %31 : vector<1x192xf32> to vector<16x192xf32>
    %33 = arith.subf %3, %32 : vector<16x192xf32>
    %34 = arith.mulf %33, %33 : vector<16x192xf32>
    %cst_15 = arith.constant dense<0.000000e+00> : vector<192xf32>
    %35 = vector.multi_reduction <add>, %34, %cst_15 [0] : vector<16x192xf32> to vector<192xf32>
    %36 = vector.shape_cast %35 : vector<192xf32> to vector<1x192xf32>
    %cst_16 = arith.constant 1.600000e+01 : f32
    %37 = vector.broadcast %cst_16 : f32 to vector<1x192xf32>
    %38 = arith.divf %36, %37 : vector<1x192xf32>
    %39 = vector.broadcast %31 : vector<1x192xf32> to vector<16x192xf32>
    %40 = arith.subf %3, %39 : vector<16x192xf32>
    %cst_17 = arith.constant 9.99999974E-6 : f32
    %41 = vector.broadcast %cst_17 : f32 to vector<1x192xf32>
    %42 = arith.addf %38, %41 : vector<1x192xf32>
    %43 = math.rsqrt %42 : vector<1x192xf32>
    %44 = vector.broadcast %43 : vector<1x192xf32> to vector<16x192xf32>
    %45 = arith.mulf %40, %44 : vector<16x192xf32>
    %46 = vector.broadcast %4 : vector<16x1xf32> to vector<16x192xf32>
    %47 = arith.mulf %45, %46 : vector<16x192xf32>
    %48 = vector.broadcast %5 : vector<16x1xf32> to vector<16x192xf32>
    %49 = arith.addf %47, %48 : vector<16x192xf32>
    %c0_18 = arith.constant 0 : index
    %c0_19 = arith.constant 0 : index
    %50 = vector.load %arg5[%c0_18, %c0_19] : memref<48x16xf32, #tpu.memory_space<vmem>>, vector<48x16xf32>
    %cst_20 = arith.constant dense<0.000000e+00> : vector<48x192xf32>
    %51 = tpu.matmul %50, %27, %cst_20 {dimension_numbers = #tpu.dot_dimension_numbers<[1], [0], [0], [1], [0, 0, 1, 1], [], []>} : vector<48x16xf32>, vector<16x192xf32>, vector<48x192xf32> -> vector<48x192xf32>
    %cst_21 = arith.constant dense<0.000000e+00> : vector<48x192xf32>
    %52 = tpu.matmul %50, %49, %cst_21 {dimension_numbers = #tpu.dot_dimension_numbers<[1], [0], [0], [1], [0, 0, 1, 1], [], []>} : vector<48x16xf32>, vector<16x192xf32>, vector<48x192xf32> -> vector<48x192xf32>
    %53 = tpu.transpose %51, [1, 0] : vector<48x192xf32> -> vector<192x48xf32>
    %54 = tpu.transpose %52, [1, 0] : vector<48x192xf32> -> vector<192x48xf32>
    %55 = tpu.concatenate %53, %54 in 1 : vector<192x48xf32>, vector<192x48xf32> -> vector<192x96xf32>
    %cst_22 = arith.constant 0.000000e+00 : f32
    %56 = vector.broadcast %cst_22 : f32 to vector<13x96xf32>
    %c0_23 = arith.constant 0 : index
    %c0_24 = arith.constant 0 : index
    %57 = vector.load %arg18[%c0_23, %c0_24] : memref<218x96xf32, #tpu.memory_space<vmem>>, vector<13x96xf32>
    tpu.vector_store %arg18[%c0_23, %c0_24], %56 {strides = array<i32>} : memref<218x96xf32, #tpu.memory_space<vmem>>, vector<13x96xf32>,
    %cst_25 = arith.constant 0.000000e+00 : f32
    %58 = vector.broadcast %cst_25 : f32 to vector<13x96xf32>
    %c205 = arith.constant 205 : index
    %c0_26 = arith.constant 0 : index
    %59 = vector.load %arg18[%c205, %c0_26] : memref<218x96xf32, #tpu.memory_space<vmem>>, vector<13x96xf32>
    tpu.vector_store %arg18[%c205, %c0_26], %58 {strides = array<i32>} : memref<218x96xf32, #tpu.memory_space<vmem>>, vector<13x96xf32>,
    %c13 = arith.constant 13 : index
    %c0_27 = arith.constant 0 : index
    %60 = vector.load %arg18[%c13, %c0_27] : memref<218x96xf32, #tpu.memory_space<vmem>>, vector<192x96xf32>
    tpu.vector_store %arg18[%c13, %c0_27], %55 {strides = array<i32>} : memref<218x96xf32, #tpu.memory_space<vmem>>, vector<192x96xf32>,
    %c0_28 = arith.constant 0 : index
    %c0_29 = arith.constant 0 : index
    %c0_30 = arith.constant 0 : index
    %61 = vector.load %arg6[%c0_28, %c0_29, %c0_30] : memref<3x3x96xf32, #tpu.memory_space<vmem>>, vector<3x3x96xf32>
    %c0_31 = arith.constant 0 : index
    %c0_32 = arith.constant 0 : index
    %62 = vector.load %arg7[%c0_31, %c0_32] : memref<192x1xf32, #tpu.memory_space<vmem>>, vector<192x1xf32>
    %c0_33 = arith.constant 0 : index
    %c0_34 = arith.constant 0 : index
    %63 = vector.load %arg8[%c0_33, %c0_34] : memref<192x1xf32, #tpu.memory_space<vmem>>, vector<192x1xf32>
    %cst_35 = arith.constant 0.000000e+00 : f32
    %64 = vector.broadcast %cst_35 : f32 to vector<192x96xf32>
    %cst_36 = arith.constant 0.000000e+00 : f32
    %65 = vector.broadcast %cst_36 : f32 to vector<192x96xf32>
    %c0_37 = arith.constant 0 : index
    %c0_38 = arith.constant 0 : index
    %66 = vector.load %arg18[%c0_37, %c0_38] : memref<218x96xf32, #tpu.memory_space<vmem>>, vector<192x96xf32>
    %67 = vector.extract_strided_slice %61 {offsets = [0, 0, 0], sizes = [1, 1, 96], strides = [1, 1, 1]} : vector<3x3x96xf32> to vector<1x1x96xf32>
    %68 = vector.shape_cast %67 : vector<1x1x96xf32> to vector<1x96xf32>
    %69 = vector.broadcast %68 : vector<1x96xf32> to vector<192x96xf32>
    %70 = arith.mulf %66, %69 : vector<192x96xf32>
    %71 = arith.addf %65, %70 : vector<192x96xf32>
    %c12 = arith.constant 12 : index
    %c0_39 = arith.constant 0 : index
    %72 = vector.load %arg18[%c12, %c0_39] : memref<218x96xf32, #tpu.memory_space<vmem>>, vector<192x96xf32>
    %73 = vector.extract_strided_slice %61 {offsets = [1, 0, 0], sizes = [1, 1, 96], strides = [1, 1, 1]} : vector<3x3x96xf32> to vector<1x1x96xf32>
    %74 = vector.shape_cast %73 : vector<1x1x96xf32> to vector<1x96xf32>
    %75 = vector.broadcast %74 : vector<1x96xf32> to vector<192x96xf32>
    %76 = arith.mulf %72, %75 : vector<192x96xf32>
    %77 = arith.addf %71, %76 : vector<192x96xf32>
    %c24 = arith.constant 24 : index
    %c0_40 = arith.constant 0 : index
    %78 = vector.load %arg18[%c24, %c0_40] : memref<218x96xf32, #tpu.memory_space<vmem>>, vector<192x96xf32>
    %79 = vector.extract_strided_slice %61 {offsets = [2, 0, 0], sizes = [1, 1, 96], strides = [1, 1, 1]} : vector<3x3x96xf32> to vector<1x1x96xf32>
    %80 = vector.shape_cast %79 : vector<1x1x96xf32> to vector<1x96xf32>
    %81 = vector.broadcast %80 : vector<1x96xf32> to vector<192x96xf32>
    %82 = arith.mulf %78, %81 : vector<192x96xf32>
    %83 = arith.addf %77, %82 : vector<192x96xf32>
    %84 = vector.broadcast %62 : vector<192x1xf32> to vector<192x96xf32>
    %85 = arith.mulf %83, %84 : vector<192x96xf32>
    %86 = arith.addf %64, %85 : vector<192x96xf32>
    %cst_41 = arith.constant 0.000000e+00 : f32
    %87 = vector.broadcast %cst_41 : f32 to vector<192x96xf32>
    %c1 = arith.constant 1 : index
    %c0_42 = arith.constant 0 : index
    %88 = vector.load %arg18[%c1, %c0_42] : memref<218x96xf32, #tpu.memory_space<vmem>>, vector<192x96xf32>
    %89 = vector.extract_strided_slice %61 {offsets = [0, 1, 0], sizes = [1, 1, 96], strides = [1, 1, 1]} : vector<3x3x96xf32> to vector<1x1x96xf32>
    %90 = vector.shape_cast %89 : vector<1x1x96xf32> to vector<1x96xf32>
    %91 = vector.broadcast %90 : vector<1x96xf32> to vector<192x96xf32>
    %92 = arith.mulf %88, %91 : vector<192x96xf32>
    %93 = arith.addf %87, %92 : vector<192x96xf32>
    %c13_43 = arith.constant 13 : index
    %c0_44 = arith.constant 0 : index
    %94 = vector.load %arg18[%c13_43, %c0_44] : memref<218x96xf32, #tpu.memory_space<vmem>>, vector<192x96xf32>
    %95 = vector.extract_strided_slice %61 {offsets = [1, 1, 0], sizes = [1, 1, 96], strides = [1, 1, 1]} : vector<3x3x96xf32> to vector<1x1x96xf32>
    %96 = vector.shape_cast %95 : vector<1x1x96xf32> to vector<1x96xf32>
    %97 = vector.broadcast %96 : vector<1x96xf32> to vector<192x96xf32>
    %98 = arith.mulf %94, %97 : vector<192x96xf32>
    %99 = arith.addf %93, %98 : vector<192x96xf32>
    %c25 = arith.constant 25 : index
    %c0_45 = arith.constant 0 : index
    %100 = vector.load %arg18[%c25, %c0_45] : memref<218x96xf32, #tpu.memory_space<vmem>>, vector<192x96xf32>
    %101 = vector.extract_strided_slice %61 {offsets = [2, 1, 0], sizes = [1, 1, 96], strides = [1, 1, 1]} : vector<3x3x96xf32> to vector<1x1x96xf32>
    %102 = vector.shape_cast %101 : vector<1x1x96xf32> to vector<1x96xf32>
    %103 = vector.broadcast %102 : vector<1x96xf32> to vector<192x96xf32>
    %104 = arith.mulf %100, %103 : vector<192x96xf32>
    %105 = arith.addf %99, %104 : vector<192x96xf32>
    %106 = arith.addf %86, %105 : vector<192x96xf32>
    %cst_46 = arith.constant 0.000000e+00 : f32
    %107 = vector.broadcast %cst_46 : f32 to vector<192x96xf32>
    %c2 = arith.constant 2 : index
    %c0_47 = arith.constant 0 : index
    %108 = vector.load %arg18[%c2, %c0_47] : memref<218x96xf32, #tpu.memory_space<vmem>>, vector<192x96xf32>
    %109 = vector.extract_strided_slice %61 {offsets = [0, 2, 0], sizes = [1, 1, 96], strides = [1, 1, 1]} : vector<3x3x96xf32> to vector<1x1x96xf32>
    %110 = vector.shape_cast %109 : vector<1x1x96xf32> to vector<1x96xf32>
    %111 = vector.broadcast %110 : vector<1x96xf32> to vector<192x96xf32>
    %112 = arith.mulf %108, %111 : vector<192x96xf32>
    %113 = arith.addf %107, %112 : vector<192x96xf32>
    %c14 = arith.constant 14 : index
    %c0_48 = arith.constant 0 : index
    %114 = vector.load %arg18[%c14, %c0_48] : memref<218x96xf32, #tpu.memory_space<vmem>>, vector<192x96xf32>
    %115 = vector.extract_strided_slice %61 {offsets = [1, 2, 0], sizes = [1, 1, 96], strides = [1, 1, 1]} : vector<3x3x96xf32> to vector<1x1x96xf32>
    %116 = vector.shape_cast %115 : vector<1x1x96xf32> to vector<1x96xf32>
    %117 = vector.broadcast %116 : vector<1x96xf32> to vector<192x96xf32>
    %118 = arith.mulf %114, %117 : vector<192x96xf32>
    %119 = arith.addf %113, %118 : vector<192x96xf32>
    %c26 = arith.constant 26 : index
    %c0_49 = arith.constant 0 : index
    %120 = vector.load %arg18[%c26, %c0_49] : memref<218x96xf32, #tpu.memory_space<vmem>>, vector<192x96xf32>
    %121 = vector.extract_strided_slice %61 {offsets = [2, 2, 0], sizes = [1, 1, 96], strides = [1, 1, 1]} : vector<3x3x96xf32> to vector<1x1x96xf32>
    %122 = vector.shape_cast %121 : vector<1x1x96xf32> to vector<1x96xf32>
    %123 = vector.broadcast %122 : vector<1x96xf32> to vector<192x96xf32>
    %124 = arith.mulf %120, %123 : vector<192x96xf32>
    %125 = arith.addf %119, %124 : vector<192x96xf32>
    %126 = vector.broadcast %63 : vector<192x1xf32> to vector<192x96xf32>
    %127 = arith.mulf %125, %126 : vector<192x96xf32>
    %128 = arith.addf %106, %127 : vector<192x96xf32>
    %129 = tpu.transpose %128, [1, 0] : vector<192x96xf32> -> vector<96x192xf32>
    %130 = vector.extract_strided_slice %129 {offsets = [0, 0], sizes = [16, 192], strides = [1, 1]} : vector<96x192xf32> to vector<16x192xf32>
    %131 = vector.extract_strided_slice %129 {offsets = [48, 0], sizes = [16, 192], strides = [1, 1]} : vector<96x192xf32> to vector<16x192xf32>
    %132 = tpu.concatenate %130, %131 in 0 : vector<16x192xf32>, vector<16x192xf32> -> vector<32x192xf32>
    %133 = vector.extract_strided_slice %129 {offsets = [16, 0], sizes = [16, 192], strides = [1, 1]} : vector<96x192xf32> to vector<16x192xf32>
    %134 = vector.extract_strided_slice %129 {offsets = [64, 0], sizes = [16, 192], strides = [1, 1]} : vector<96x192xf32> to vector<16x192xf32>
    %135 = tpu.concatenate %133, %134 in 0 : vector<16x192xf32>, vector<16x192xf32> -> vector<32x192xf32>
    %136 = vector.extract_strided_slice %129 {offsets = [32, 0], sizes = [16, 192], strides = [1, 1]} : vector<96x192xf32> to vector<16x192xf32>
    %137 = vector.extract_strided_slice %129 {offsets = [80, 0], sizes = [16, 192], strides = [1, 1]} : vector<96x192xf32> to vector<16x192xf32>
    %138 = tpu.concatenate %136, %137 in 0 : vector<16x192xf32>, vector<16x192xf32> -> vector<32x192xf32>
    %139 = arith.mulf %132, %132 : vector<32x192xf32>
    %cst_50 = arith.constant dense<0.000000e+00> : vector<32xf32>
    %140 = vector.multi_reduction <add>, %139, %cst_50 [1] : vector<32x192xf32> to vector<32xf32>
    %141 = vector.shape_cast %140 : vector<32xf32> to vector<32x1xf32>
    %cst_51 = arith.constant 1.000000e-24 : f32
    %142 = vector.broadcast %cst_51 : f32 to vector<32x1xf32>
    %143 = arith.maximumf %141, %142 : vector<32x1xf32>
    %144 = math.rsqrt %143 : vector<32x1xf32>
    %145 = vector.broadcast %144 : vector<32x1xf32> to vector<32x192xf32>
    %146 = arith.mulf %132, %145 : vector<32x192xf32>
    %147 = arith.mulf %135, %135 : vector<32x192xf32>
    %cst_52 = arith.constant dense<0.000000e+00> : vector<32xf32>
    %148 = vector.multi_reduction <add>, %147, %cst_52 [1] : vector<32x192xf32> to vector<32xf32>
    %149 = vector.shape_cast %148 : vector<32xf32> to vector<32x1xf32>
    %cst_53 = arith.constant 1.000000e-24 : f32
    %150 = vector.broadcast %cst_53 : f32 to vector<32x1xf32>
    %151 = arith.maximumf %149, %150 : vector<32x1xf32>
    %152 = math.rsqrt %151 : vector<32x1xf32>
    %153 = vector.broadcast %152 : vector<32x1xf32> to vector<32x192xf32>
    %154 = arith.mulf %135, %153 : vector<32x192xf32>
    %cst_54 = arith.constant dense<0.000000e+00> : vector<32x32xf32>
    %155 = tpu.matmul %146, %154, %cst_54 {dimension_numbers = #tpu.dot_dimension_numbers<[1], [1], [0], [0], [0, 0, 1, 0], [], []>} : vector<32x192xf32>, vector<32x192xf32>, vector<32x32xf32> -> vector<32x32xf32>
    %c0_55 = arith.constant 0 : index
    %c0_56 = arith.constant 0 : index
    %156 = vector.load %arg9[%c0_55, %c0_56] : memref<32x1xf32, #tpu.memory_space<vmem>>, vector<32x1xf32>
    %157 = vector.broadcast %156 : vector<32x1xf32> to vector<32x32xf32>
    %158 = arith.mulf %155, %157 : vector<32x32xf32>
    %c0_57 = arith.constant 0 : index
    %c0_58 = arith.constant 0 : index
    %159 = vector.load %arg10[%c0_57, %c0_58] : memref<32x32xf32, #tpu.memory_space<vmem>>, vector<32x32xf32>
    %160 = arith.addf %158, %159 : vector<32x32xf32>
    %cst_59 = arith.constant dense<0xFF800000> : vector<32xf32>
    %161 = vector.multi_reduction <maximumf>, %160, %cst_59 [1] : vector<32x32xf32> to vector<32xf32>
    %162 = vector.shape_cast %161 : vector<32xf32> to vector<32x1xf32>
    %163 = vector.broadcast %162 : vector<32x1xf32> to vector<32x32xf32>
    %164 = arith.subf %160, %163 : vector<32x32xf32>
    %165 = math.exp %164 : vector<32x32xf32>
    %cst_60 = arith.constant dense<0.000000e+00> : vector<32xf32>
    %166 = vector.multi_reduction <add>, %165, %cst_60 [1] : vector<32x32xf32> to vector<32xf32>
    %167 = vector.shape_cast %166 : vector<32xf32> to vector<32x1xf32>
    %168 = tpu.reciprocal %167 {approx = true} : vector<32x1xf32> -> vector<32x1xf32>
    %169 = vector.broadcast %168 : vector<32x1xf32> to vector<32x32xf32>
    %170 = arith.mulf %165, %169 : vector<32x32xf32>
    %cst_61 = arith.constant dense<0.000000e+00> : vector<32x192xf32>
    %171 = tpu.matmul %170, %138, %cst_61 {dimension_numbers = #tpu.dot_dimension_numbers<[1], [0], [0], [1], [0, 0, 1, 1], [], []>} : vector<32x32xf32>, vector<32x192xf32>, vector<32x192xf32> -> vector<32x192xf32>
    %c0_62 = arith.constant 0 : index
    %c0_63 = arith.constant 0 : index
    %172 = vector.load %arg11[%c0_62, %c0_63] : memref<16x16xf32, #tpu.memory_space<vmem>>, vector<16x16xf32>
    %173 = vector.extract_strided_slice %171 {offsets = [0, 0], sizes = [16, 192], strides = [1, 1]} : vector<32x192xf32> to vector<16x192xf32>
    %cst_64 = arith.constant dense<0.000000e+00> : vector<16x192xf32>
    %174 = tpu.matmul %172, %173, %cst_64 {dimension_numbers = #tpu.dot_dimension_numbers<[1], [0], [0], [1], [0, 0, 1, 1], [], []>} : vector<16x16xf32>, vector<16x192xf32>, vector<16x192xf32> -> vector<16x192xf32>
    %175 = arith.addf %174, %1 : vector<16x192xf32>
    %176 = vector.extract_strided_slice %171 {offsets = [16, 0], sizes = [16, 192], strides = [1, 1]} : vector<32x192xf32> to vector<16x192xf32>
    %cst_65 = arith.constant dense<0.000000e+00> : vector<16x192xf32>
    %177 = tpu.matmul %172, %176, %cst_65 {dimension_numbers = #tpu.dot_dimension_numbers<[1], [0], [0], [1], [0, 0, 1, 1], [], []>} : vector<16x16xf32>, vector<16x192xf32>, vector<16x192xf32> -> vector<16x192xf32>
    %178 = arith.addf %177, %3 : vector<16x192xf32>
    %c0_66 = arith.constant 0 : index
    %c0_67 = arith.constant 0 : index
    %179 = vector.load %arg12[%c0_66, %c0_67] : memref<16x1xf32, #tpu.memory_space<vmem>>, vector<16x1xf32>
    %c0_68 = arith.constant 0 : index
    %c0_69 = arith.constant 0 : index
    %180 = vector.load %arg13[%c0_68, %c0_69] : memref<16x1xf32, #tpu.memory_space<vmem>>, vector<16x1xf32>
    %cst_70 = arith.constant dense<0.000000e+00> : vector<192xf32>
    %181 = vector.multi_reduction <add>, %175, %cst_70 [0] : vector<16x192xf32> to vector<192xf32>
    %182 = vector.shape_cast %181 : vector<192xf32> to vector<1x192xf32>
    %cst_71 = arith.constant 1.600000e+01 : f32
    %183 = vector.broadcast %cst_71 : f32 to vector<1x192xf32>
    %184 = arith.divf %182, %183 : vector<1x192xf32>
    %185 = vector.broadcast %184 : vector<1x192xf32> to vector<16x192xf32>
    %186 = arith.subf %175, %185 : vector<16x192xf32>
    %187 = arith.mulf %186, %186 : vector<16x192xf32>
    %cst_72 = arith.constant dense<0.000000e+00> : vector<192xf32>
    %188 = vector.multi_reduction <add>, %187, %cst_72 [0] : vector<16x192xf32> to vector<192xf32>
    %189 = vector.shape_cast %188 : vector<192xf32> to vector<1x192xf32>
    %cst_73 = arith.constant 1.600000e+01 : f32
    %190 = vector.broadcast %cst_73 : f32 to vector<1x192xf32>
    %191 = arith.divf %189, %190 : vector<1x192xf32>
    %192 = vector.broadcast %184 : vector<1x192xf32> to vector<16x192xf32>
    %193 = arith.subf %175, %192 : vector<16x192xf32>
    %cst_74 = arith.constant 9.99999974E-6 : f32
    %194 = vector.broadcast %cst_74 : f32 to vector<1x192xf32>
    %195 = arith.addf %191, %194 : vector<1x192xf32>
    %196 = math.rsqrt %195 : vector<1x192xf32>
    %197 = vector.broadcast %196 : vector<1x192xf32> to vector<16x192xf32>
    %198 = arith.mulf %193, %197 : vector<16x192xf32>
    %199 = vector.broadcast %179 : vector<16x1xf32> to vector<16x192xf32>
    %200 = arith.mulf %198, %199 : vector<16x192xf32>
    %201 = vector.broadcast %180 : vector<16x1xf32> to vector<16x192xf32>
    %202 = arith.addf %200, %201 : vector<16x192xf32>
    %cst_75 = arith.constant dense<0.000000e+00> : vector<192xf32>
    %203 = vector.multi_reduction <add>, %178, %cst_75 [0] : vector<16x192xf32> to vector<192xf32>
    %204 = vector.shape_cast %203 : vector<192xf32> to vector<1x192xf32>
    %cst_76 = arith.constant 1.600000e+01 : f32
    %205 = vector.broadcast %cst_76 : f32 to vector<1x192xf32>
    %206 = arith.divf %204, %205 : vector<1x192xf32>
    %207 = vector.broadcast %206 : vector<1x192xf32> to vector<16x192xf32>
    %208 = arith.subf %178, %207 : vector<16x192xf32>
    %209 = arith.mulf %208, %208 : vector<16x192xf32>
    %cst_77 = arith.constant dense<0.000000e+00> : vector<192xf32>
    %210 = vector.multi_reduction <add>, %209, %cst_77 [0] : vector<16x192xf32> to vector<192xf32>
    %211 = vector.shape_cast %210 : vector<192xf32> to vector<1x192xf32>
    %cst_78 = arith.constant 1.600000e+01 : f32
    %212 = vector.broadcast %cst_78 : f32 to vector<1x192xf32>
    %213 = arith.divf %211, %212 : vector<1x192xf32>
    %214 = vector.broadcast %206 : vector<1x192xf32> to vector<16x192xf32>
    %215 = arith.subf %178, %214 : vector<16x192xf32>
    %cst_79 = arith.constant 9.99999974E-6 : f32
    %216 = vector.broadcast %cst_79 : f32 to vector<1x192xf32>
    %217 = arith.addf %213, %216 : vector<1x192xf32>
    %218 = math.rsqrt %217 : vector<1x192xf32>
    %219 = vector.broadcast %218 : vector<1x192xf32> to vector<16x192xf32>
    %220 = arith.mulf %215, %219 : vector<16x192xf32>
    %221 = vector.broadcast %179 : vector<16x1xf32> to vector<16x192xf32>
    %222 = arith.mulf %220, %221 : vector<16x192xf32>
    %223 = vector.broadcast %180 : vector<16x1xf32> to vector<16x192xf32>
    %224 = arith.addf %222, %223 : vector<16x192xf32>
    %c0_80 = arith.constant 0 : index
    %c0_81 = arith.constant 0 : index
    %225 = vector.load %arg14[%c0_80, %c0_81] : memref<32x16xf32, #tpu.memory_space<vmem>>, vector<32x16xf32>
    %cst_82 = arith.constant dense<0.000000e+00> : vector<32x192xf32>
    %226 = tpu.matmul %225, %202, %cst_82 {dimension_numbers = #tpu.dot_dimension_numbers<[1], [0], [0], [1], [0, 0, 1, 1], [], []>} : vector<32x16xf32>, vector<16x192xf32>, vector<32x192xf32> -> vector<32x192xf32>
    %c0_83 = arith.constant 0 : index
    %c0_84 = arith.constant 0 : index
    %227 = vector.load %arg15[%c0_83, %c0_84] : memref<32x16xf32, #tpu.memory_space<vmem>>, vector<32x16xf32>
    %cst_85 = arith.constant dense<0.000000e+00> : vector<32x192xf32>
    %228 = tpu.matmul %227, %224, %cst_85 {dimension_numbers = #tpu.dot_dimension_numbers<[1], [0], [0], [1], [0, 0, 1, 1], [], []>} : vector<32x16xf32>, vector<16x192xf32>, vector<32x192xf32> -> vector<32x192xf32>
    %cst_86 = arith.constant 5.000000e-01 : f32
    %229 = vector.broadcast %cst_86 : f32 to vector<32x192xf32>
    %230 = arith.mulf %229, %226 : vector<32x192xf32>
    %cst_87 = arith.constant 0.707106769 : f32
    %231 = vector.broadcast %cst_87 : f32 to vector<32x192xf32>
    %232 = arith.mulf %226, %231 : vector<32x192xf32>
    %233 = math.erf %232 : vector<32x192xf32>
    %cst_88 = arith.constant 1.000000e+00 : f32
    %234 = vector.broadcast %cst_88 : f32 to vector<32x192xf32>
    %235 = arith.addf %234, %233 : vector<32x192xf32>
    %236 = arith.mulf %230, %235 : vector<32x192xf32>
    %237 = arith.mulf %236, %228 : vector<32x192xf32>
    %c0_89 = arith.constant 0 : index
    %c0_90 = arith.constant 0 : index
    %238 = vector.load %arg16[%c0_89, %c0_90] : memref<16x32xf32, #tpu.memory_space<vmem>>, vector<16x32xf32>
    %cst_91 = arith.constant dense<0.000000e+00> : vector<16x192xf32>
    %239 = tpu.matmul %238, %237, %cst_91 {dimension_numbers = #tpu.dot_dimension_numbers<[1], [0], [0], [1], [0, 0, 1, 1], [], []>} : vector<16x32xf32>, vector<32x192xf32>, vector<16x192xf32> -> vector<16x192xf32>
    %240 = arith.addf %239, %175 : vector<16x192xf32>
    %c0_92 = arith.constant 0 : index
    %c0_93 = arith.constant 0 : index
    %c0_94 = arith.constant 0 : index
    %241 = vector.load %arg17[%c0_92, %c0_93, %c0_94] : memref<1x16x192xf32, #tpu.memory_space<vmem>>, vector<1x16x192xf32>
    %242 = vector.shape_cast %241 : vector<1x16x192xf32> to vector<16x192xf32>
    %243 = vector.shape_cast %240 : vector<16x192xf32> to vector<1x16x192xf32>
    tpu.vector_store %arg17[%c0_92, %c0_93, %c0_94], %243 {strides = array<i32>} : memref<1x16x192xf32, #tpu.memory_space<vmem>>, vector<1x16x192xf32>,
    return
  }
  func.func @transform_0(%arg0: i32) -> (i32, i32, i32) {
    %c0_i32 = arith.constant 0 : i32
    %c0_i32_0 = arith.constant 0 : i32
    %c0_i32_1 = arith.constant 0 : i32
    return %arg0, %c0_i32, %c0_i32_0 : i32, i32, i32
  }
  func.func @transform_1(%arg0: i32) -> (i32, i32, i32) {
    %c0_i32 = arith.constant 0 : i32
    %c0_i32_0 = arith.constant 0 : i32
    %c0_i32_1 = arith.constant 0 : i32
    return %arg0, %c0_i32, %c0_i32_0 : i32, i32, i32
  }
  func.func @transform_2(%arg0: i32) -> (i32, i32) {
    %c0_i32 = arith.constant 0 : i32
    %c0_i32_0 = arith.constant 0 : i32
    %c0_i32_1 = arith.constant 0 : i32
    return %c0_i32, %c0_i32_0 : i32, i32
  }
  func.func @transform_3(%arg0: i32) -> (i32, i32) {
    %c0_i32 = arith.constant 0 : i32
    %c0_i32_0 = arith.constant 0 : i32
    %c0_i32_1 = arith.constant 0 : i32
    return %c0_i32, %c0_i32_0 : i32, i32
  }
  func.func @transform_4(%arg0: i32) -> (i32, i32) {
    %c0_i32 = arith.constant 0 : i32
    %c0_i32_0 = arith.constant 0 : i32
    %c0_i32_1 = arith.constant 0 : i32
    return %c0_i32, %c0_i32_0 : i32, i32
  }
  func.func @transform_5(%arg0: i32) -> (i32, i32, i32) {
    %c0_i32 = arith.constant 0 : i32
    %c0_i32_0 = arith.constant 0 : i32
    %c0_i32_1 = arith.constant 0 : i32
    %c0_i32_2 = arith.constant 0 : i32
    return %c0_i32, %c0_i32_0, %c0_i32_1 : i32, i32, i32
  }
  func.func @transform_6(%arg0: i32) -> (i32, i32) {
    %c0_i32 = arith.constant 0 : i32
    %c0_i32_0 = arith.constant 0 : i32
    %c0_i32_1 = arith.constant 0 : i32
    return %c0_i32, %c0_i32_0 : i32, i32
  }
  func.func @transform_7(%arg0: i32) -> (i32, i32) {
    %c0_i32 = arith.constant 0 : i32
    %c0_i32_0 = arith.constant 0 : i32
    %c0_i32_1 = arith.constant 0 : i32
    return %c0_i32, %c0_i32_0 : i32, i32
  }
  func.func @transform_8(%arg0: i32) -> (i32, i32) {
    %c0_i32 = arith.constant 0 : i32
    %c0_i32_0 = arith.constant 0 : i32
    %c0_i32_1 = arith.constant 0 : i32
    return %c0_i32, %c0_i32_0 : i32, i32
  }
  func.func @transform_9(%arg0: i32) -> (i32, i32) {
    %c0_i32 = arith.constant 0 : i32
    %c0_i32_0 = arith.constant 0 : i32
    %c0_i32_1 = arith.constant 0 : i32
    return %c0_i32, %c0_i32_0 : i32, i32
  }
  func.func @transform_10(%arg0: i32) -> (i32, i32) {
    %c0_i32 = arith.constant 0 : i32
    %c0_i32_0 = arith.constant 0 : i32
    %c0_i32_1 = arith.constant 0 : i32
    return %c0_i32, %c0_i32_0 : i32, i32
  }
  func.func @transform_11(%arg0: i32) -> (i32, i32) {
    %c0_i32 = arith.constant 0 : i32
    %c0_i32_0 = arith.constant 0 : i32
    %c0_i32_1 = arith.constant 0 : i32
    return %c0_i32, %c0_i32_0 : i32, i32
  }
  func.func @transform_12(%arg0: i32) -> (i32, i32) {
    %c0_i32 = arith.constant 0 : i32
    %c0_i32_0 = arith.constant 0 : i32
    %c0_i32_1 = arith.constant 0 : i32
    return %c0_i32, %c0_i32_0 : i32, i32
  }
  func.func @transform_13(%arg0: i32) -> (i32, i32) {
    %c0_i32 = arith.constant 0 : i32
    %c0_i32_0 = arith.constant 0 : i32
    %c0_i32_1 = arith.constant 0 : i32
    return %c0_i32, %c0_i32_0 : i32, i32
  }
  func.func @transform_14(%arg0: i32) -> (i32, i32) {
    %c0_i32 = arith.constant 0 : i32
    %c0_i32_0 = arith.constant 0 : i32
    %c0_i32_1 = arith.constant 0 : i32
    return %c0_i32, %c0_i32_0 : i32, i32
  }
  func.func @transform_15(%arg0: i32) -> (i32, i32) {
    %c0_i32 = arith.constant 0 : i32
    %c0_i32_0 = arith.constant 0 : i32
    %c0_i32_1 = arith.constant 0 : i32
    return %c0_i32, %c0_i32_0 : i32, i32
  }
  func.func @transform_16(%arg0: i32) -> (i32, i32, i32) {
    %c0_i32 = arith.constant 0 : i32
    %c0_i32_0 = arith.constant 0 : i32
    %c0_i32_1 = arith.constant 0 : i32
    return %arg0, %c0_i32, %c0_i32_0 : i32, i32, i32
  }
}

</mosaic_0001>

<llo_original>
// kernel: tpu_custom_call.1
$region0: #{tpu_custom_call.1}
  #allocation0 [shape = 'u32[]', space=smem, size = 0x4, offset = 0x4, fixed_abs, tag = 'smem constant byte address 0x4 - core index']
  #allocation1 [shape = 'u32[144,128]{1,0:T(1,128)}', space=vmem, size = 0x12000, scoped, tag = 'internal scratch']
  #allocation2 [shape = 'f32[218,96]{1,0:T(8,128)}', space=vmem, size = 0x1c000, scoped, tag = 'scratch operand']
  %s0 = inlined_call_operand.vmem [shape: f32[2,16,192], index: 0, kind: input, shape index: {}]
  %s1 = inlined_call_operand.vmem [shape: f32[2,16,192], index: 1, kind: input, shape index: {}]
  %s2 = inlined_call_operand.vmem [shape: f32[16,1], index: 2, kind: input, shape index: {}]
  %s3 = inlined_call_operand.vmem [shape: f32[16,1], index: 3, kind: input, shape index: {}]
  %s4 = inlined_call_operand.vmem [shape: f32[48,16], index: 4, kind: input, shape index: {}]
  %s5 = inlined_call_operand.vmem [shape: f32[3,3,96], index: 5, kind: input, shape index: {}]
  %s6 = inlined_call_operand.vmem [shape: f32[192,1], index: 6, kind: input, shape index: {}]
  %s7 = inlined_call_operand.vmem [shape: f32[192,1], index: 7, kind: input, shape index: {}]
  %s8 = inlined_call_operand.vmem [shape: f32[32,1], index: 8, kind: input, shape index: {}]
  %s9 = inlined_call_operand.vmem [shape: f32[32,32], index: 9, kind: input, shape index: {}]
  %s10 = inlined_call_operand.vmem [shape: f32[16,16], index: 10, kind: input, shape index: {}]
  %s11 = inlined_call_operand.vmem [shape: f32[16,1], index: 11, kind: input, shape index: {}]
  %s12 = inlined_call_operand.vmem [shape: f32[16,1], index: 12, kind: input, shape index: {}]
  %s13 = inlined_call_operand.vmem [shape: f32[32,16], index: 13, kind: input, shape index: {}]
  %s14 = inlined_call_operand.vmem [shape: f32[32,16], index: 14, kind: input, shape index: {}]
  %s15 = inlined_call_operand.vmem [shape: f32[16,32], index: 15, kind: input, shape index: {}]
  %s16 = inlined_call_operand.hbm [shape: f32[2,16,192], index: 16, kind: output, shape index: {}]
  %s17 = sld [smem:[#allocation0]]
  $region97: #{tpu_custom_call.1} parent=0
    _
  %s19 = ssub.s32 1, %s17
  %s20 = scalar_select 0, %s19, %s17
  $region1: #{tpu_custom_call.1} parent=0
    #allocation3 [shape = 'u8[32768]{0}', space=vmem, size = 0x8000, scoped, tag = 'output window, operand 0']
    #allocation4 [shape = 's32[2]{0}', space=sflag, size = 0x8, scoped, tag = 'scoped memory for tpu_custom_call.1']
    %21 = vsyncpa [#allocation4], 0
    %s22 = scalar_lea.sflag [#allocation4], 1
    %23 = vsyncpa %s22, 0
    loop: start=0, step=1, limit=4
    $region2: #{tpu_custom_call.1} parent=1 // loop_pre_header
      _
    $region3: #{tpu_custom_call.1} parent=1 // loop_header
      %s25 = sphi 0, %s29
      %p26 = scmp.ge.s32.totalorder %s25, 4
      %s35 = sphi 0, %s37
      %s38 = sphi 0, %s35
      %s39 = sphi 0, %s38
      %s55 = sphi 0, %s39
      %s61 = sphi 0, %s63
      %s64 = sphi 0, %s61
      %s65 = sphi 0, %s64
      %s81 = sphi 0, %s65
      %s85 = sphi 0, %s85
      %s87 = sphi 0, %s85
      %s88 = sphi 0, %s87
      %s102 = sphi 0, %s88
      %s106 = sphi 0, %s106
      %s108 = sphi 0, %s106
      %s109 = sphi 0, %s108
      %s123 = sphi 0, %s109
      %s127 = sphi 0, %s127
      %s129 = sphi 0, %s127
      %s130 = sphi 0, %s129
      %s144 = sphi 0, %s130
      %s148 = sphi 0, %s148
      %s150 = sphi 0, %s148
      %s151 = sphi 0, %s150
      %s165 = sphi 0, %s151
      %s169 = sphi 0, %s169
      %s171 = sphi 0, %s169
      %s172 = sphi 0, %s171
      %s186 = sphi 0, %s172
      %s190 = sphi 0, %s190
      %s192 = sphi 0, %s190
      %s193 = sphi 0, %s192
      %s207 = sphi 0, %s193
      %s211 = sphi 0, %s211
      %s213 = sphi 0, %s211
      %s214 = sphi 0, %s213
      %s228 = sphi 0, %s214
      %s232 = sphi 0, %s232
      %s234 = sphi 0, %s232
      %s235 = sphi 0, %s234
      %s249 = sphi 0, %s235
      %s253 = sphi 0, %s253
      %s255 = sphi 0, %s253
      %s256 = sphi 0, %s255
      %s270 = sphi 0, %s256
      %s274 = sphi 0, %s274
      %s276 = sphi 0, %s274
      %s277 = sphi 0, %s276
      %s291 = sphi 0, %s277
      %s295 = sphi 0, %s295
      %s297 = sphi 0, %s295
      %s298 = sphi 0, %s297
      %s312 = sphi 0, %s298
      %s316 = sphi 0, %s316
      %s318 = sphi 0, %s316
      %s319 = sphi 0, %s318
      %s333 = sphi 0, %s319
      %s337 = sphi 0, %s337
      %s339 = sphi 0, %s337
      %s340 = sphi 0, %s339
      %s354 = sphi 0, %s340
      %s358 = sphi 0, %s358
      %s360 = sphi 0, %s358
      %s361 = sphi 0, %s360
      %s375 = sphi 0, %s361
      %s381 = sphi 0, %s383
      %s384 = sphi 0, %s381
      %s385 = sphi 0, %s384
      %s401 = sphi 0, %s385
    $region4: #{tpu_custom_call.1} parent=1 // loop_header_branch
      %28 = sbr.rel (%p26) target = $region8
    $region5: #{tpu_custom_call.1} parent=1 // loop_body
      %s30 = ssub.s32 %s25, 1
      %s31 = ssub.s32 %s25, 2
      %s32 = sadd.s32 %s25, 1
      %s33 = ssub.s32 %s25, %s32
      %p34 = scmp.eq.s32.totalorder %s33, 0
      %s36 = sadd.s32 %s35, 1
      %s37 = scalar_select %p34, %s35, %s36
      %p40 = pneg %p34
      %p41 = scmp.eq.s32.totalorder %s25, 1
      %p42 = por %p40, %p41
      %p43 = scmp.ne.s32.totalorder %s35, %s38
      %p44 = scmp.eq.s32.totalorder %s25, 0
      %p45 = por %p43, %p44
      %p46 = scmp.ne.s32.totalorder %s35, %s38
      %p47 = scmp.eq.s32.totalorder %s30, 1
      %p48 = por %p46, %p47
      %p49 = scmp.ne.s32.totalorder %s38, %s39
      %p50 = scmp.eq.s32.totalorder %s30, 0
      %p51 = por %p49, %p50
      %p52 = scmp.ne.s32.totalorder %s38, %s39
      %p53 = scmp.eq.s32.totalorder %s31, 1
      %p54 = por %p52, %p53
      %p56 = scmp.ne.s32.totalorder %s39, %s55
      %p57 = scmp.eq.s32.totalorder %s31, 0
      %p58 = por %p56, %p57
      %s59 = ssub.s32 %s25, %s32
      %p60 = scmp.eq.s32.totalorder %s59, 0
      %s62 = sadd.s32 %s61, 1
      %s63 = scalar_select %p60, %s61, %s62
      %p66 = pneg %p60
      %p67 = scmp.eq.s32.totalorder %s25, 1
      %p68 = por %p66, %p67
      %p69 = scmp.ne.s32.totalorder %s61, %s64
      %p70 = scmp.eq.s32.totalorder %s25, 0
      %p71 = por %p69, %p70
      %p72 = scmp.ne.s32.totalorder %s61, %s64
      %p73 = scmp.eq.s32.totalorder %s30, 1
      %p74 = por %p72, %p73
      %p75 = scmp.ne.s32.totalorder %s64, %s65
      %p76 = scmp.eq.s32.totalorder %s30, 0
      %p77 = por %p75, %p76
      %p78 = scmp.ne.s32.totalorder %s64, %s65
      %p79 = scmp.eq.s32.totalorder %s31, 1
      %p80 = por %p78, %p79
      %p82 = scmp.ne.s32.totalorder %s65, %s81
      %p83 = scmp.eq.s32.totalorder %s31, 0
      %p84 = por %p82, %p83
      %s86 = sadd.s32 %s85, 1
      %p89 = scmp.eq.s32.totalorder %s25, 1
      %p90 = scmp.ne.s32.totalorder %s85, %s87
      %p91 = scmp.eq.s32.totalorder %s25, 0
      %p92 = por %p90, %p91
      %p93 = scmp.ne.s32.totalorder %s85, %s87
      %p94 = scmp.eq.s32.totalorder %s30, 1
      %p95 = por %p93, %p94
      %p96 = scmp.ne.s32.totalorder %s87, %s88
      %p97 = scmp.eq.s32.totalorder %s30, 0
      %p98 = por %p96, %p97
      %p99 = scmp.ne.s32.totalorder %s87, %s88
      %p100 = scmp.eq.s32.totalorder %s31, 1
      %p101 = por %p99, %p100
      %p103 = scmp.ne.s32.totalorder %s88, %s102
      %p104 = scmp.eq.s32.totalorder %s31, 0
      %p105 = por %p103, %p104
      %s107 = sadd.s32 %s106, 1
      %p110 = scmp.eq.s32.totalorder %s25, 1
      %p111 = scmp.ne.s32.totalorder %s106, %s108
      %p112 = scmp.eq.s32.totalorder %s25, 0
      %p113 = por %p111, %p112
      %p114 = scmp.ne.s32.totalorder %s106, %s108
      %p115 = scmp.eq.s32.totalorder %s30, 1
      %p116 = por %p114, %p115
      %p117 = scmp.ne.s32.totalorder %s108, %s109
      %p118 = scmp.eq.s32.totalorder %s30, 0
      %p119 = por %p117, %p118
      %p120 = scmp.ne.s32.totalorder %s108, %s109
      %p121 = scmp.eq.s32.totalorder %s31, 1
      %p122 = por %p120, %p121
      %p124 = scmp.ne.s32.totalorder %s109, %s123
      %p125 = scmp.eq.s32.totalorder %s31, 0
      %p126 = por %p124, %p125
      %s128 = sadd.s32 %s127, 1
      %p131 = scmp.eq.s32.totalorder %s25, 1
      %p132 = scmp.ne.s32.totalorder %s127, %s129
      %p133 = scmp.eq.s32.totalorder %s25, 0
      %p134 = por %p132, %p133
      %p135 = scmp.ne.s32.totalorder %s127, %s129
      %p136 = scmp.eq.s32.totalorder %s30, 1
      %p137 = por %p135, %p136
      %p138 = scmp.ne.s32.totalorder %s129, %s130
      %p139 = scmp.eq.s32.totalorder %s30, 0
      %p140 = por %p138, %p139
      %p141 = scmp.ne.s32.totalorder %s129, %s130
      %p142 = scmp.eq.s32.totalorder %s31, 1
      %p143 = por %p141, %p142
      %p145 = scmp.ne.s32.totalorder %s130, %s144
      %p146 = scmp.eq.s32.totalorder %s31, 0
      %p147 = por %p145, %p146
      %s149 = sadd.s32 %s148, 1
      %p152 = scmp.eq.s32.totalorder %s25, 1
      %p153 = scmp.ne.s32.totalorder %s148, %s150
      %p154 = scmp.eq.s32.totalorder %s25, 0
      %p155 = por %p153, %p154
      %p156 = scmp.ne.s32.totalorder %s148, %s150
      %p157 = scmp.eq.s32.totalorder %s30, 1
      %p158 = por %p156, %p157
      %p159 = scmp.ne.s32.totalorder %s150, %s151
      %p160 = scmp.eq.s32.totalorder %s30, 0
      %p161 = por %p159, %p160
      %p162 = scmp.ne.s32.totalorder %s150, %s151
      %p163 = scmp.eq.s32.totalorder %s31, 1
      %p164 = por %p162, %p163
      %p166 = scmp.ne.s32.totalorder %s151, %s165
      %p167 = scmp.eq.s32.totalorder %s31, 0
      %p168 = por %p166, %p167
      %s170 = sadd.s32 %s169, 1
      %p173 = scmp.eq.s32.totalorder %s25, 1
      %p174 = scmp.ne.s32.totalorder %s169, %s171
      %p175 = scmp.eq.s32.totalorder %s25, 0
      %p176 = por %p174, %p175
      %p177 = scmp.ne.s32.totalorder %s169, %s171
      %p178 = scmp.eq.s32.totalorder %s30, 1
      %p179 = por %p177, %p178
      %p180 = scmp.ne.s32.totalorder %s171, %s172
      %p181 = scmp.eq.s32.totalorder %s30, 0
      %p182 = por %p180, %p181
      %p183 = scmp.ne.s32.totalorder %s171, %s172
      %p184 = scmp.eq.s32.totalorder %s31, 1
      %p185 = por %p183, %p184
      %p187 = scmp.ne.s32.totalorder %s172, %s186
      %p188 = scmp.eq.s32.totalorder %s31, 0
      %p189 = por %p187, %p188
      %s191 = sadd.s32 %s190, 1
      %p194 = scmp.eq.s32.totalorder %s25, 1
      %p195 = scmp.ne.s32.totalorder %s190, %s192
      %p196 = scmp.eq.s32.totalorder %s25, 0
      %p197 = por %p195, %p196
      %p198 = scmp.ne.s32.totalorder %s190, %s192
      %p199 = scmp.eq.s32.totalorder %s30, 1
      %p200 = por %p198, %p199
      %p201 = scmp.ne.s32.totalorder %s192, %s193
      %p202 = scmp.eq.s32.totalorder %s30, 0
      %p203 = por %p201, %p202
      %p204 = scmp.ne.s32.totalorder %s192, %s193
      %p205 = scmp.eq.s32.totalorder %s31, 1
      %p206 = por %p204, %p205
      %p208 = scmp.ne.s32.totalorder %s193, %s207
      %p209 = scmp.eq.s32.totalorder %s31, 0
      %p210 = por %p208, %p209
      %s212 = sadd.s32 %s211, 1
      %p215 = scmp.eq.s32.totalorder %s25, 1
      %p216 = scmp.ne.s32.totalorder %s211, %s213
      %p217 = scmp.eq.s32.totalorder %s25, 0
      %p218 = por %p216, %p217
      %p219 = scmp.ne.s32.totalorder %s211, %s213
      %p220 = scmp.eq.s32.totalorder %s30, 1
      %p221 = por %p219, %p220
      %p222 = scmp.ne.s32.totalorder %s213, %s214
      %p223 = scmp.eq.s32.totalorder %s30, 0
      %p224 = por %p222, %p223
      %p225 = scmp.ne.s32.totalorder %s213, %s214
      %p226 = scmp.eq.s32.totalorder %s31, 1
      %p227 = por %p225, %p226
      %p229 = scmp.ne.s32.totalorder %s214, %s228
      %p230 = scmp.eq.s32.totalorder %s31, 0
      %p231 = por %p229, %p230
      %s233 = sadd.s32 %s232, 1
      %p236 = scmp.eq.s32.totalorder %s25, 1
      %p237 = scmp.ne.s32.totalorder %s232, %s234
      %p238 = scmp.eq.s32.totalorder %s25, 0
      %p239 = por %p237, %p238
      %p240 = scmp.ne.s32.totalorder %s232, %s234
      %p241 = scmp.eq.s32.totalorder %s30, 1
      %p242 = por %p240, %p241
      %p243 = scmp.ne.s32.totalorder %s234, %s235
      %p244 = scmp.eq.s32.totalorder %s30, 0
      %p245 = por %p243, %p244
      %p246 = scmp.ne.s32.totalorder %s234, %s235
      %p247 = scmp.eq.s32.totalorder %s31, 1
      %p248 = por %p246, %p247
      %p250 = scmp.ne.s32.totalorder %s235, %s249
      %p251 = scmp.eq.s32.totalorder %s31, 0
      %p252 = por %p250, %p251
      %s254 = sadd.s32 %s253, 1
      %p257 = scmp.eq.s32.totalorder %s25, 1
      %p258 = scmp.ne.s32.totalorder %s253, %s255
      %p259 = scmp.eq.s32.totalorder %s25, 0
      %p260 = por %p258, %p259
      %p261 = scmp.ne.s32.totalorder %s253, %s255
      %p262 = scmp.eq.s32.totalorder %s30, 1
      %p263 = por %p261, %p262
      %p264 = scmp.ne.s32.totalorder %s255, %s256
      %p265 = scmp.eq.s32.totalorder %s30, 0
      %p266 = por %p264, %p265
      %p267 = scmp.ne.s32.totalorder %s255, %s256
      %p268 = scmp.eq.s32.totalorder %s31, 1
      %p269 = por %p267, %p268
      %p271 = scmp.ne.s32.totalorder %s256, %s270
      %p272 = scmp.eq.s32.totalorder %s31, 0
      %p273 = por %p271, %p272
      %s275 = sadd.s32 %s274, 1
      %p278 = scmp.eq.s32.totalorder %s25, 1
      %p279 = scmp.ne.s32.totalorder %s274, %s276
      %p280 = scmp.eq.s32.totalorder %s25, 0
      %p281 = por %p279, %p280
      %p282 = scmp.ne.s32.totalorder %s274, %s276
      %p283 = scmp.eq.s32.totalorder %s30, 1
      %p284 = por %p282, %p283
      %p285 = scmp.ne.s32.totalorder %s276, %s277
      %p286 = scmp.eq.s32.totalorder %s30, 0
      %p287 = por %p285, %p286
      %p288 = scmp.ne.s32.totalorder %s276, %s277
      %p289 = scmp.eq.s32.totalorder %s31, 1
      %p290 = por %p288, %p289
      %p292 = scmp.ne.s32.totalorder %s277, %s291
      %p293 = scmp.eq.s32.totalorder %s31, 0
      %p294 = por %p292, %p293
      %s296 = sadd.s32 %s295, 1
      %p299 = scmp.eq.s32.totalorder %s25, 1
      %p300 = scmp.ne.s32.totalorder %s295, %s297
      %p301 = scmp.eq.s32.totalorder %s25, 0
      %p302 = por %p300, %p301
      %p303 = scmp.ne.s32.totalorder %s295, %s297
      %p304 = scmp.eq.s32.totalorder %s30, 1
      %p305 = por %p303, %p304
      %p306 = scmp.ne.s32.totalorder %s297, %s298
      %p307 = scmp.eq.s32.totalorder %s30, 0
      %p308 = por %p306, %p307
      %p309 = scmp.ne.s32.totalorder %s297, %s298
      %p310 = scmp.eq.s32.totalorder %s31, 1
      %p311 = por %p309, %p310
      %p313 = scmp.ne.s32.totalorder %s298, %s312
      %p314 = scmp.eq.s32.totalorder %s31, 0
      %p315 = por %p313, %p314
      %s317 = sadd.s32 %s316, 1
      %p320 = scmp.eq.s32.totalorder %s25, 1
      %p321 = scmp.ne.s32.totalorder %s316, %s318
      %p322 = scmp.eq.s32.totalorder %s25, 0
      %p323 = por %p321, %p322
      %p324 = scmp.ne.s32.totalorder %s316, %s318
      %p325 = scmp.eq.s32.totalorder %s30, 1
      %p326 = por %p324, %p325
      %p327 = scmp.ne.s32.totalorder %s318, %s319
      %p328 = scmp.eq.s32.totalorder %s30, 0
      %p329 = por %p327, %p328
      %p330 = scmp.ne.s32.totalorder %s318, %s319
      %p331 = scmp.eq.s32.totalorder %s31, 1
      %p332 = por %p330, %p331
      %p334 = scmp.ne.s32.totalorder %s319, %s333
      %p335 = scmp.eq.s32.totalorder %s31, 0
      %p336 = por %p334, %p335
      %s338 = sadd.s32 %s337, 1
      %p341 = scmp.eq.s32.totalorder %s25, 1
      %p342 = scmp.ne.s32.totalorder %s337, %s339
      %p343 = scmp.eq.s32.totalorder %s25, 0
      %p344 = por %p342, %p343
      %p345 = scmp.ne.s32.totalorder %s337, %s339
      %p346 = scmp.eq.s32.totalorder %s30, 1
      %p347 = por %p345, %p346
      %p348 = scmp.ne.s32.totalorder %s339, %s340
      %p349 = scmp.eq.s32.totalorder %s30, 0
      %p350 = por %p348, %p349
      %p351 = scmp.ne.s32.totalorder %s339, %s340
      %p352 = scmp.eq.s32.totalorder %s31, 1
      %p353 = por %p351, %p352
      %p355 = scmp.ne.s32.totalorder %s340, %s354
      %p356 = scmp.eq.s32.totalorder %s31, 0
      %p357 = por %p355, %p356
      %s359 = sadd.s32 %s358, 1
      %p362 = scmp.eq.s32.totalorder %s25, 1
      %p363 = scmp.ne.s32.totalorder %s358, %s360
      %p364 = scmp.eq.s32.totalorder %s25, 0
      %p365 = por %p363, %p364
      %p366 = scmp.ne.s32.totalorder %s358, %s360
      %p367 = scmp.eq.s32.totalorder %s30, 1
      %p368 = por %p366, %p367
      %p369 = scmp.ne.s32.totalorder %s360, %s361
      %p370 = scmp.eq.s32.totalorder %s30, 0
      %p371 = por %p369, %p370
      %p372 = scmp.ne.s32.totalorder %s360, %s361
      %p373 = scmp.eq.s32.totalorder %s31, 1
      %p374 = por %p372, %p373
      %p376 = scmp.ne.s32.totalorder %s361, %s375
      %p377 = scmp.eq.s32.totalorder %s31, 0
      %p378 = por %p376, %p377
      %s379 = ssub.s32 %s25, %s32
      %p380 = scmp.eq.s32.totalorder %s379, 0
      %s382 = sadd.s32 %s381, 1
      %s383 = scalar_select %p380, %s381, %s382
      %p386 = pneg %p380
      %p387 = scmp.eq.s32.totalorder %s25, 1
      %p388 = por %p386, %p387
      %p389 = scmp.ne.s32.totalorder %s381, %s384
      %p390 = scmp.eq.s32.totalorder %s25, 0
      %p391 = por %p389, %p390
      %p392 = scmp.ne.s32.totalorder %s381, %s384
      %p393 = scmp.eq.s32.totalorder %s30, 1
      %p394 = por %p392, %p393
      %p395 = scmp.ne.s32.totalorder %s384, %s385
      %p396 = scmp.eq.s32.totalorder %s30, 0
      %p397 = por %p395, %p396
      %p398 = scmp.ne.s32.totalorder %s384, %s385
      %p399 = scmp.eq.s32.totalorder %s31, 1
      %p400 = por %p398, %p399
      %p402 = scmp.ne.s32.totalorder %s385, %s401
      %p403 = scmp.eq.s32.totalorder %s31, 0
      %p404 = por %p402, %p403
      %p405 = scmp.le.s32.totalorder 1, %s25
      %p406 = scmp.lt.s32.totalorder %s25, 3
      %p407 = pnand %p405, %p406
      %p408 = pneg %p407
      // Predicated region
      $region9: #{tpu_custom_call.1} parent=5 // pred_check
        _
      $region10: #{tpu_custom_call.1} parent=5 // pred_check_branch
        %410 = sbr.rel (%p407) target = $region12
      $region11: #{tpu_custom_call.1} parent=5 // pred_region
        %s411 = ssub.s32 %s25, 1
        // Predicated region
        $region13: #{tpu_custom_call.1} parent=11 // pred_check
          %p412 = pneg %p98
        $region14: #{tpu_custom_call.1} parent=11 // pred_check_branch
          %414 = sbr.rel (%p412) target = $region16
        $region15: #{tpu_custom_call.1} parent=11 // pred_region
          _
        $region16: #{tpu_custom_call.1} parent=11 // pred_fallthru
          _
        // Predicated region
        $region17: #{tpu_custom_call.1} parent=11 // pred_check
          %p415 = pneg %p119
        $region18: #{tpu_custom_call.1} parent=11 // pred_check_branch
          %417 = sbr.rel (%p415) target = $region20
        $region19: #{tpu_custom_call.1} parent=11 // pred_region
          _
        $region20: #{tpu_custom_call.1} parent=11 // pred_fallthru
          _
        // Predicated region
        $region21: #{tpu_custom_call.1} parent=11 // pred_check
          %p418 = pneg %p140
        $region22: #{tpu_custom_call.1} parent=11 // pred_check_branch
          %420 = sbr.rel (%p418) target = $region24
        $region23: #{tpu_custom_call.1} parent=11 // pred_region
          _
        $region24: #{tpu_custom_call.1} parent=11 // pred_fallthru
          _
        // Predicated region
        $region25: #{tpu_custom_call.1} parent=11 // pred_check
          %p421 = pneg %p161
        $region26: #{tpu_custom_call.1} parent=11 // pred_check_branch
          %423 = sbr.rel (%p421) target = $region28
        $region27: #{tpu_custom_call.1} parent=11 // pred_region
          _
        $region28: #{tpu_custom_call.1} parent=11 // pred_fallthru
          _
        // Predicated region
        $region29: #{tpu_custom_call.1} parent=11 // pred_check
          %p424 = pneg %p182
        $region30: #{tpu_custom_call.1} parent=11 // pred_check_branch
          %426 = sbr.rel (%p424) target = $region32
        $region31: #{tpu_custom_call.1} parent=11 // pred_region
          _
        $region32: #{tpu_custom_call.1} parent=11 // pred_fallthru
          _
        // Predicated region
        $region33: #{tpu_custom_call.1} parent=11 // pred_check
          %p427 = pneg %p203
        $region34: #{tpu_custom_call.1} parent=11 // pred_check_branch
          %429 = sbr.rel (%p427) target = $region36
        $region35: #{tpu_custom_call.1} parent=11 // pred_region
          _
        $region36: #{tpu_custom_call.1} parent=11 // pred_fallthru
          _
        // Predicated region
        $region37: #{tpu_custom_call.1} parent=11 // pred_check
          %p430 = pneg %p224
        $region38: #{tpu_custom_call.1} parent=11 // pred_check_branch
          %432 = sbr.rel (%p430) target = $region40
        $region39: #{tpu_custom_call.1} parent=11 // pred_region
          _
        $region40: #{tpu_custom_call.1} parent=11 // pred_fallthru
          _
        // Predicated region
        $region41: #{tpu_custom_call.1} parent=11 // pred_check
          %p433 = pneg %p245
        $region42: #{tpu_custom_call.1} parent=11 // pred_check_branch
          %435 = sbr.rel (%p433) target = $region44
        $region43: #{tpu_custom_call.1} parent=11 // pred_region
          _
        $region44: #{tpu_custom_call.1} parent=11 // pred_fallthru
          _
        // Predicated region
        $region45: #{tpu_custom_call.1} parent=11 // pred_check
          %p436 = pneg %p266
        $region46: #{tpu_custom_call.1} parent=11 // pred_check_branch
          %438 = sbr.rel (%p436) target = $region48
        $region47: #{tpu_custom_call.1} parent=11 // pred_region
          _
        $region48: #{tpu_custom_call.1} parent=11 // pred_fallthru
          _
        // Predicated region
        $region49: #{tpu_custom_call.1} parent=11 // pred_check
          %p439 = pneg %p287
        $region50: #{tpu_custom_call.1} parent=11 // pred_check_branch
          %441 = sbr.rel (%p439) target = $region52
        $region51: #{tpu_custom_call.1} parent=11 // pred_region
          _
        $region52: #{tpu_custom_call.1} parent=11 // pred_fallthru
          _
        // Predicated region
        $region53: #{tpu_custom_call.1} parent=11 // pred_check
          %p442 = pneg %p308
        $region54: #{tpu_custom_call.1} parent=11 // pred_check_branch
          %444 = sbr.rel (%p442) target = $region56
        $region55: #{tpu_custom_call.1} parent=11 // pred_region
          _
        $region56: #{tpu_custom_call.1} parent=11 // pred_fallthru
          _
        // Predicated region
        $region57: #{tpu_custom_call.1} parent=11 // pred_check
          %p445 = pneg %p329
        $region58: #{tpu_custom_call.1} parent=11 // pred_check_branch
          %447 = sbr.rel (%p445) target = $region60
        $region59: #{tpu_custom_call.1} parent=11 // pred_region
          _
        $region60: #{tpu_custom_call.1} parent=11 // pred_fallthru
          _
        // Predicated region
        $region61: #{tpu_custom_call.1} parent=11 // pred_check
          %p448 = pneg %p350
        $region62: #{tpu_custom_call.1} parent=11 // pred_check_branch
          %450 = sbr.rel (%p448) target = $region64
        $region63: #{tpu_custom_call.1} parent=11 // pred_region
          _
        $region64: #{tpu_custom_call.1} parent=11 // pred_fallthru
          _
        // Predicated region
        $region65: #{tpu_custom_call.1} parent=11 // pred_check
          %p451 = pneg %p371
        $region66: #{tpu_custom_call.1} parent=11 // pred_check_branch
          %453 = sbr.rel (%p451) target = $region68
        $region67: #{tpu_custom_call.1} parent=11 // pred_region
          _
        $region68: #{tpu_custom_call.1} parent=11 // pred_fallthru
          _
      $region12: #{tpu_custom_call.1} parent=5 // pred_fallthru
        _
      %p454 = scmp.lt.s32.totalorder %s25, 2
      // Predicated region
      $region69: #{tpu_custom_call.1} parent=5 // pred_check
        %p455 = pneg %p454
      $region70: #{tpu_custom_call.1} parent=5 // pred_check_branch
        %457 = sbr.rel (%p455) target = $region72
      $region71: #{tpu_custom_call.1} parent=5 // pred_region
        // Predicated region
        $region73: #{tpu_custom_call.1} parent=71 // pred_check
          %p458 = pneg %p45
        $region74: #{tpu_custom_call.1} parent=71 // pred_check_branch
          %460 = sbr.rel (%p458) target = $region76
        $region75: #{tpu_custom_call.1} parent=71 // pred_region
          %p461 = scmp.lt.s32.totalorder %s25, 1
          %s462 = scalar_select %p461, %s25, 1
          %s463 = smul.addr %s462, 4
          %s464 = smul.addr %s463, 8
          %s465 = scalar_lea.vmem %s0, %s464
        $region76: #{tpu_custom_call.1} parent=71 // pred_fallthru
          _
        // Predicated region
        $region77: #{tpu_custom_call.1} parent=71 // pred_check
          %p466 = pneg %p71
        $region78: #{tpu_custom_call.1} parent=71 // pred_check_branch
          %468 = sbr.rel (%p466) target = $region80
        $region79: #{tpu_custom_call.1} parent=71 // pred_region
          %p469 = scmp.lt.s32.totalorder %s25, 1
          %s470 = scalar_select %p469, %s25, 1
          %s471 = smul.addr %s470, 4
          %s472 = smul.addr %s471, 8
          %s473 = scalar_lea.vmem %s1, %s472
        $region80: #{tpu_custom_call.1} parent=71 // pred_fallthru
          _
      $region72: #{tpu_custom_call.1} parent=5 // pred_fallthru
        _
      %p474 = scmp.le.s32.totalorder 1, %s25
      %p475 = scmp.lt.s32.totalorder %s25, 3
      %p476 = pnand %p474, %p475
      %p477 = pneg %p476
      // Predicated region
      $region81: #{tpu_custom_call.1} parent=5 // pred_check
        _
      $region82: #{tpu_custom_call.1} parent=5 // pred_check_branch
        %479 = sbr.rel (%p476) target = $region84
      $region83: #{tpu_custom_call.1} parent=5 // pred_region
        %s480 = ssub.s32 %s25, 1
        %p481 = scmp.lt.s32.totalorder %s30, 1
        %s482 = scalar_select %p481, %s30, 1
        %s483 = smul.addr %s482, 4
        %s484 = smul.addr %s483, 8
        %s485 = scalar_lea.vmem %s0, %s484
        %p486 = pneg %p51
        %p487 = pneg %p48
        %p488 = scmp.lt.s32.totalorder %s30, 1
        %s489 = scalar_select %p488, %s30, 1
        %s490 = smul.addr %s489, 4
        %s491 = smul.addr %s490, 8
        %s492 = scalar_lea.vmem %s1, %s491
        %p493 = pneg %p77
        %p494 = pneg %p74
        %p495 = pneg %p98
        %p496 = pneg %p95
        %p497 = pneg %p119
        %p498 = pneg %p116
        %p499 = pneg %p140
        %p500 = pneg %p137
        %p501 = pneg %p161
        %p502 = pneg %p158
        %p503 = pneg %p182
        %p504 = pneg %p179
        %p505 = pneg %p203
        %p506 = pneg %p200
        %p507 = pneg %p224
        %p508 = pneg %p221
        %p509 = pneg %p245
        %p510 = pneg %p242
        %p511 = pneg %p266
        %p512 = pneg %p263
        %p513 = pneg %p287
        %p514 = pneg %p284
        %p515 = pneg %p308
        %p516 = pneg %p305
        %p517 = pneg %p329
        %p518 = pneg %p326
        %p519 = pneg %p350
        %p520 = pneg %p347
        %p521 = pneg %p371
        %p522 = pneg %p368
        %p523 = pneg %p397
        %p524 = pneg %p394
        %s525 = sand.u32 %s384, 1
        %s526 = scalar_lea.sflag [#allocation4], %s525
        %s527 = sand.u32 %s384, 1
        %s528 = smul.addr %s527, 32
        %s529 = scalar_lea.vmem [#allocation3], %s528
        %p530 = scmp.lt.s32.totalorder %s30, 1
        %s531 = scalar_select %p530, %s30, 1
        %s532 = smul.addr %s531, 4
        %s533 = smul.addr %s532, 8
        %s534 = scalar_lea.vmem %s0, %s533
        %p535 = scmp.lt.s32.totalorder %s30, 1
        %s536 = scalar_select %p535, %s30, 1
        %s537 = smul.addr %s536, 4
        %s538 = smul.addr %s537, 8
        %s539 = scalar_lea.vmem %s1, %s538
        %v540 = vld [vmem:[%s534] sm:$0xff]
        %v541 = vld [vmem:[%s534 + $0x8] sm:$0xff]
        %v542 = vld [vmem:[%s534 + $0x10] sm:$0xff]
        %v543 = vld [vmem:[%s534 + $0x18] sm:$0xff]
        %v544 = vld [vmem:[%s539] sm:$0xff]
        %v545 = vld [vmem:[%s539 + $0x8] sm:$0xff]
        %v546 = vld [vmem:[%s539 + $0x10] sm:$0xff]
        %v547 = vld [vmem:[%s539 + $0x18] sm:$0xff]
        %v548 = vld [vmem:[%s2] sm:$0xff]
        %v549 = vld [vmem:[%s2 + $0x8] sm:$0xff]
        %v550 = vld [vmem:[%s3] sm:$0xff]
        %v551 = vld [vmem:[%s3 + $0x8] sm:$0xff]
        %v552 = vadd.f32 %v540, %v542
        %v553 = vrot.slane %v552, 4
        %v554 = vadd.f32 %v552, %v553
        %v555 = vrot.slane %v554, 2
        %v556 = vadd.f32 %v554, %v555
        %v557 = vrot.slane %v556, 1
        %v558 = vadd.f32 %v556, %v557
        %vm559 = vcmask 523264
        %v560 = vsel %vm559, %v541, 0.0
        %v561 = vsel %vm559, %v543, 0.0
        %v562 = vadd.f32 %v560, %v561
        %v563 = vrot.slane %v562, 4
        %v564 = vadd.f32 %v562, %v563
        %v565 = vrot.slane %v564, 2
        %v566 = vadd.f32 %v564, %v565
        %v567 = vrot.slane %v566, 1
        %v568 = vadd.f32 %v566, %v567
        %v569 = vrcp.pop 16.0
        %v570 = vmul.f32 %v558, %v569
        %v571 = vmul.f32 %v568, %v569
        %v572 = vsub.f32 %v540, %v570
        %v573 = vsub.f32 %v541, %v571
        %v574 = vsub.f32 %v542, %v570
        %v575 = vsub.f32 %v543, %v571
        %v576 = vmul.f32 %v572, %v572
        %v577 = vmul.f32 %v573, %v573
        %v578 = vmul.f32 %v574, %v574
        %v579 = vmul.f32 %v575, %v575
        %v580 = vadd.f32 %v576, %v578
        %v581 = vrot.slane %v580, 4
        %v582 = vadd.f32 %v580, %v581
        %v583 = vrot.slane %v582, 2
        %v584 = vadd.f32 %v582, %v583
        %v585 = vrot.slane %v584, 1
        %v586 = vadd.f32 %v584, %v585
        %v587 = vsel %vm559, %v577, 0.0
        %v588 = vsel %vm559, %v579, 0.0
        %v589 = vadd.f32 %v587, %v588
        %v590 = vrot.slane %v589, 4
        %v591 = vadd.f32 %v589, %v590
        %v592 = vrot.slane %v591, 2
        %v593 = vadd.f32 %v591, %v592
        %v594 = vrot.slane %v593, 1
        %v595 = vadd.f32 %v593, %v594
        %v596 = vmul.f32 %v586, %v569
        %v597 = vmul.f32 %v595, %v569
        %v598 = vadd.f32 %v596, 1e-05
        %v599 = vadd.f32 %v597, 1e-05
        %v600 = vrsqrt.pop %v598
        %v601 = vrsqrt.pop %v599
        %v602 = vmul.f32 %v572, %v600
        %v603 = vmul.f32 %v573, %v601
        %v604 = vmul.f32 %v574, %v600
        %v605 = vmul.f32 %v575, %v601
        %607 = vset.pattern.permute.xlu0 0
        %608 = vperm.xlu0 %607, %v548
        %v609 = vpop.permute.xlu0 %608
        %612 = vset.pattern.permute.xlu0 0
        %613 = vperm.xlu0 %612, %v549
        %v614 = vpop.permute.xlu0 %613
        %v616 = vmul.f32 %v602, %v609
        %v617 = vmul.f32 %v603, %v609
        %v618 = vmul.f32 %v604, %v614
        %v619 = vmul.f32 %v605, %v614
        %621 = vset.pattern.permute.xlu0 0
        %622 = vperm.xlu0 %621, %v550
        %v623 = vpop.permute.xlu0 %622
        %626 = vset.pattern.permute.xlu0 0
        %627 = vperm.xlu0 %626, %v551
        %v628 = vpop.permute.xlu0 %627
        %v630 = vadd.f32 %v616, %v623
        %v631 = vadd.f32 %v617, %v623
        %v632 = vadd.f32 %v618, %v628
        %v633 = vadd.f32 %v619, %v628
        %v634 = vadd.f32 %v544, %v546
        %v635 = vrot.slane %v634, 4
        %v636 = vadd.f32 %v634, %v635
        %v637 = vrot.slane %v636, 2
        %v638 = vadd.f32 %v636, %v637
        %v639 = vrot.slane %v638, 1
        %v640 = vadd.f32 %v638, %v639
        %v641 = vsel %vm559, %v545, 0.0
        %v642 = vsel %vm559, %v547, 0.0
        %v643 = vadd.f32 %v641, %v642
        %v644 = vrot.slane %v643, 4
        %v645 = vadd.f32 %v643, %v644
        %v646 = vrot.slane %v645, 2
        %v647 = vadd.f32 %v645, %v646
        %v648 = vrot.slane %v647, 1
        %v649 = vadd.f32 %v647, %v648
        %v650 = vmul.f32 %v640, %v569
        %v651 = vmul.f32 %v649, %v569
        %v652 = vsub.f32 %v544, %v650
        %v653 = vsub.f32 %v545, %v651
        %v654 = vsub.f32 %v546, %v650
        %v655 = vsub.f32 %v547, %v651
        %v656 = vmul.f32 %v652, %v652
        %v657 = vmul.f32 %v653, %v653
        %v658 = vmul.f32 %v654, %v654
        %v659 = vmul.f32 %v655, %v655
        %v660 = vadd.f32 %v656, %v658
        %v661 = vrot.slane %v660, 4
        %v662 = vadd.f32 %v660, %v661
        %v663 = vrot.slane %v662, 2
        %v664 = vadd.f32 %v662, %v663
        %v665 = vrot.slane %v664, 1
        %v666 = vadd.f32 %v664, %v665
        %v667 = vsel %vm559, %v657, 0.0
        %v668 = vsel %vm559, %v659, 0.0
        %v669 = vadd.f32 %v667, %v668
        %v670 = vrot.slane %v669, 4
        %v671 = vadd.f32 %v669, %v670
        %v672 = vrot.slane %v671, 2
        %v673 = vadd.f32 %v671, %v672
        %v674 = vrot.slane %v673, 1
        %v675 = vadd.f32 %v673, %v674
        %v676 = vmul.f32 %v666, %v569
        %v677 = vmul.f32 %v675, %v569
        %v678 = vadd.f32 %v676, 1e-05
        %v679 = vadd.f32 %v677, 1e-05
        %v680 = vrsqrt.pop %v678
        %v681 = vrsqrt.pop %v679
        %v682 = vmul.f32 %v652, %v680
        %v683 = vmul.f32 %v653, %v681
        %v684 = vmul.f32 %v654, %v680
        %v685 = vmul.f32 %v655, %v681
        %v686 = vmul.f32 %v682, %v609
        %v687 = vmul.f32 %v683, %v609
        %v688 = vmul.f32 %v684, %v614
        %v689 = vmul.f32 %v685, %v614
        %v690 = vadd.f32 %v686, %v623
        %v691 = vadd.f32 %v687, %v623
        %v692 = vadd.f32 %v688, %v628
        %v693 = vadd.f32 %v689, %v628
        %v694 = vld [vmem:[%s4] sm:$0xff]
        %v695 = vld [vmem:[%s4 + $0x8] sm:$0xff]
        %v696 = vld [vmem:[%s4 + $0x10] sm:$0xff]
        %v697 = vld [vmem:[%s4 + $0x18] sm:$0xff]
        %v698 = vld [vmem:[%s4 + $0x20] sm:$0xff]
        %v699 = vld [vmem:[%s4 + $0x28] sm:$0xff]
        %vm700 = vcmask 130048
        %v702 = vsel %vm700, %v694, 0
        %v705 = vsel %vm700, %v695, 0
        %v708 = vsel %vm700, %v696, 0
        %v711 = vsel %vm700, %v697, 0
        %v714 = vsel %vm700, %v698, 0
        %v717 = vsel %vm700, %v699, 0
        %719 = vmatprep.subr.mxu0 %v631
        %720 = vmatpush1.msra.mxu0 %v630
        %721 = vmatprep.subr.mxu0 %v633
        %722 = vmatpush1.msra.mxu0 %v632
        %723 = vmatprep.subr.mxu0 0.0
        %724 = vmatpush1.msra.mxu0 0.0
        %725 = vmatprep.subr.mxu0 0.0
        %726 = vmatpush1.msra.mxu0 0.0
        %727 = vmatprep.subr.mxu0 0.0
        %728 = vmatpush1.msra.mxu0 0.0
        %729 = vmatprep.subr.mxu0 0.0
        %730 = vmatpush1.msra.mxu0 0.0
        %731 = vmatprep.subr.mxu0 0.0
        %732 = vmatpush1.msra.mxu0 0.0
        %733 = vmatprep.subr.mxu0 0.0
        %734 = vmatpush1.msra.mxu0 0.0
        %735 = vmatprep.subr.mxu0 0.0
        %736 = vmatpush1.msra.mxu0 0.0
        %737 = vmatprep.subr.mxu0 0.0
        %738 = vmatpush1.msra.mxu0 0.0
        %739 = vmatprep.subr.mxu0 0.0
        %740 = vmatpush1.msra.mxu0 0.0
        %741 = vmatprep.subr.mxu0 0.0
        %742 = vmatpush1.msra.mxu0 0.0
        %743 = vmatprep.subr.mxu0 0.0
        %744 = vmatpush1.msra.mxu0 0.0
        %745 = vmatprep.subr.mxu0 0.0
        %746 = vmatpush1.msra.mxu0 0.0
        %747 = vmatprep.subr.mxu0 0.0
        %748 = vmatpush1.msra.mxu0 0.0
        %749 = vmatprep.subr.mxu0 0.0
        %750 = vmatpush1.msra.mxu0 0.0
        %751 = vmatprep.subr.mxu0 0.0
        %752 = vmatpush1.msra.mxu0 0.0
        %753 = vmatprep.subr.mxu0 0.0
        %754 = vmatpush1.msra.mxu0 0.0
        %755 = vmatprep.subr.mxu0 0.0
        %756 = vmatpush1.msra.mxu0 0.0
        %757 = vmatprep.subr.mxu0 0.0
        %758 = vmatpush1.msra.mxu0 0.0
        %759 = vmatprep.subr.mxu0 0.0
        %760 = vmatpush1.msra.mxu0 0.0
        %761 = vmatprep.subr.mxu0 0.0
        %762 = vmatpush1.msra.mxu0 0.0
        %763 = vmatprep.subr.mxu0 0.0
        %764 = vmatpush1.msra.mxu0 0.0
        %765 = vmatprep.subr.mxu0 0.0
        %766 = vmatpush1.msra.mxu0 0.0
        %767 = vmatprep.subr.mxu0 0.0
        %768 = vmatpush1.msra.mxu0 0.0
        %769 = vmatprep.subr.mxu0 0.0
        %770 = vmatpush1.msra.mxu0 0.0
        %771 = vmatprep.subr.mxu0 0.0
        %772 = vmatpush1.msra.mxu0 0.0
        %773 = vmatprep.subr.mxu0 0.0
        %774 = vmatpush1.msra.mxu0 0.0
        %775 = vmatprep.subr.mxu0 0.0
        %776 = vmatpush1.msra.mxu0 0.0
        %777 = vmatprep.subr.mxu0 0.0
        %778 = vmatpush1.msra.mxu0 0.0
        %779 = vmatprep.subr.mxu0 0.0
        %780 = vmatpush1.msra.mxu0 0.0
        %781 = vmatprep.subr.mxu0 0.0
        %782 = vmatpush1.msra.mxu0 0.0
        %783 = vmatprep.mubr.f32.mxu0 0.0
        %784 = vmatmul.mubr.f32.gmra.mrb[0].mxu0 %v702
        %v785 = vpop.f32.mrb[0].mxu0
        %v786 = vadd.f32 0.0, %v785
        %v787 = vpop.f32.mrb[0].mxu0
        %v788 = vadd.f32 0.0, %v787
        %789 = vmatprep.mubr.f32.mxu0 0.0
        %790 = vmatmul.mubr.f32.gmra.mrb[0].mxu0 %v705
        %v791 = vpop.f32.mrb[0].mxu0
        %v792 = vadd.f32 0.0, %v791
        %v793 = vpop.f32.mrb[0].mxu0
        %v794 = vadd.f32 0.0, %v793
        %795 = vmatprep.mubr.f32.mxu0 0.0
        %796 = vmatmul.mubr.f32.gmra.mrb[0].mxu0 %v708
        %v797 = vpop.f32.mrb[0].mxu0
        %v798 = vadd.f32 0.0, %v797
        %v799 = vpop.f32.mrb[0].mxu0
        %v800 = vadd.f32 0.0, %v799
        %801 = vmatprep.mubr.f32.mxu0 0.0
        %802 = vmatmul.mubr.f32.gmra.mrb[0].mxu0 %v711
        %v803 = vpop.f32.mrb[0].mxu0
        %v804 = vadd.f32 0.0, %v803
        %v805 = vpop.f32.mrb[0].mxu0
        %v806 = vadd.f32 0.0, %v805
        %807 = vmatprep.mubr.f32.mxu0 0.0
        %808 = vmatmul.mubr.f32.gmra.mrb[0].mxu0 %v714
        %v809 = vpop.f32.mrb[0].mxu0
        %v810 = vadd.f32 0.0, %v809
        %v811 = vpop.f32.mrb[0].mxu0
        %v812 = vadd.f32 0.0, %v811
        %813 = vmatprep.mubr.f32.mxu0 0.0
        %814 = vmatmul.mubr.f32.gmra.mrb[0].mxu0 %v717
        %v815 = vpop.f32.mrb[0].mxu0
        %v816 = vadd.f32 0.0, %v815
        %v817 = vpop.f32.mrb[0].mxu0
        %v818 = vadd.f32 0.0, %v817
        %819 = vdwg.mxu0
        %820 = vmatprep.subr.mxu0 %v691
        %821 = vmatpush1.msra.mxu0 %v690
        %822 = vmatprep.subr.mxu0 %v693
        %823 = vmatpush1.msra.mxu0 %v692
        %824 = vmatprep.subr.mxu0 0.0
        %825 = vmatpush1.msra.mxu0 0.0
        %826 = vmatprep.subr.mxu0 0.0
        %827 = vmatpush1.msra.mxu0 0.0
        %828 = vmatprep.subr.mxu0 0.0
        %829 = vmatpush1.msra.mxu0 0.0
        %830 = vmatprep.subr.mxu0 0.0
        %831 = vmatpush1.msra.mxu0 0.0
        %832 = vmatprep.subr.mxu0 0.0
        %833 = vmatpush1.msra.mxu0 0.0
        %834 = vmatprep.subr.mxu0 0.0
        %835 = vmatpush1.msra.mxu0 0.0
        %836 = vmatprep.subr.mxu0 0.0
        %837 = vmatpush1.msra.mxu0 0.0
        %838 = vmatprep.subr.mxu0 0.0
        %839 = vmatpush1.msra.mxu0 0.0
        %840 = vmatprep.subr.mxu0 0.0
        %841 = vmatpush1.msra.mxu0 0.0
        %842 = vmatprep.subr.mxu0 0.0
        %843 = vmatpush1.msra.mxu0 0.0
        %844 = vmatprep.subr.mxu0 0.0
        %845 = vmatpush1.msra.mxu0 0.0
        %846 = vmatprep.subr.mxu0 0.0
        %847 = vmatpush1.msra.mxu0 0.0
        %848 = vmatprep.subr.mxu0 0.0
        %849 = vmatpush1.msra.mxu0 0.0
        %850 = vmatprep.subr.mxu0 0.0
        %851 = vmatpush1.msra.mxu0 0.0
        %852 = vmatprep.subr.mxu0 0.0
        %853 = vmatpush1.msra.mxu0 0.0
        %854 = vmatprep.subr.mxu0 0.0
        %855 = vmatpush1.msra.mxu0 0.0
        %856 = vmatprep.subr.mxu0 0.0
        %857 = vmatpush1.msra.mxu0 0.0
        %858 = vmatprep.subr.mxu0 0.0
        %859 = vmatpush1.msra.mxu0 0.0
        %860 = vmatprep.subr.mxu0 0.0
        %861 = vmatpush1.msra.mxu0 0.0
        %862 = vmatprep.subr.mxu0 0.0
        %863 = vmatpush1.msra.mxu0 0.0
        %864 = vmatprep.subr.mxu0 0.0
        %865 = vmatpush1.msra.mxu0 0.0
        %866 = vmatprep.subr.mxu0 0.0
        %867 = vmatpush1.msra.mxu0 0.0
        %868 = vmatprep.subr.mxu0 0.0
        %869 = vmatpush1.msra.mxu0 0.0
        %870 = vmatprep.subr.mxu0 0.0
        %871 = vmatpush1.msra.mxu0 0.0
        %872 = vmatprep.subr.mxu0 0.0
        %873 = vmatpush1.msra.mxu0 0.0
        %874 = vmatprep.subr.mxu0 0.0
        %875 = vmatpush1.msra.mxu0 0.0
        %876 = vmatprep.subr.mxu0 0.0
        %877 = vmatpush1.msra.mxu0 0.0
        %878 = vmatprep.subr.mxu0 0.0
        %879 = vmatpush1.msra.mxu0 0.0
        %880 = vmatprep.subr.mxu0 0.0
        %881 = vmatpush1.msra.mxu0 0.0
        %882 = vmatprep.subr.mxu0 0.0
        %883 = vmatpush1.msra.mxu0 0.0
        %884 = vmatprep.mubr.f32.mxu0 0.0
        %885 = vmatmul.mubr.f32.gmra.mrb[0].mxu0 %v702
        %v886 = vpop.f32.mrb[0].mxu0
        %v887 = vadd.f32 0.0, %v886
        %v888 = vpop.f32.mrb[0].mxu0
        %v889 = vadd.f32 0.0, %v888
        %890 = vmatprep.mubr.f32.mxu0 0.0
        %891 = vmatmul.mubr.f32.gmra.mrb[0].mxu0 %v705
        %v892 = vpop.f32.mrb[0].mxu0
        %v893 = vadd.f32 0.0, %v892
        %v894 = vpop.f32.mrb[0].mxu0
        %v895 = vadd.f32 0.0, %v894
        %896 = vmatprep.mubr.f32.mxu0 0.0
        %897 = vmatmul.mubr.f32.gmra.mrb[0].mxu0 %v708
        %v898 = vpop.f32.mrb[0].mxu0
        %v899 = vadd.f32 0.0, %v898
        %v900 = vpop.f32.mrb[0].mxu0
        %v901 = vadd.f32 0.0, %v900
        %902 = vmatprep.mubr.f32.mxu0 0.0
        %903 = vmatmul.mubr.f32.gmra.mrb[0].mxu0 %v711
        %v904 = vpop.f32.mrb[0].mxu0
        %v905 = vadd.f32 0.0, %v904
        %v906 = vpop.f32.mrb[0].mxu0
        %v907 = vadd.f32 0.0, %v906
        %908 = vmatprep.mubr.f32.mxu0 0.0
        %909 = vmatmul.mubr.f32.gmra.mrb[0].mxu0 %v714
        %v910 = vpop.f32.mrb[0].mxu0
        %v911 = vadd.f32 0.0, %v910
        %v912 = vpop.f32.mrb[0].mxu0
        %v913 = vadd.f32 0.0, %v912
        %914 = vmatprep.mubr.f32.mxu0 0.0
        %915 = vmatmul.mubr.f32.gmra.mrb[0].mxu0 %v717
        %v916 = vpop.f32.mrb[0].mxu0
        %v917 = vadd.f32 0.0, %v916
        %v918 = vpop.f32.mrb[0].mxu0
        %v919 = vadd.f32 0.0, %v918
        %920 = vdwg.mxu0
        %921 = vxpose.xlu0.b32.start [1/16] %v786, 128
        %922 = vxpose.xlu0.b32.cont [2/16] %v792, 128
        %923 = vxpose.xlu0.b32.cont [3/16] %v798, 128
        %924 = vxpose.xlu0.b32.cont [4/16] %v804, 128
        %925 = vxpose.xlu0.b32.cont [5/16] %v810, 128
        %926 = vxpose.xlu0.b32.cont [6/16] %v816, 128
        %927 = vxpose.xlu0.b32.cont [7/16] 0.0, 128
        %928 = vxpose.xlu0.b32.cont [8/16] 0.0, 128
        %929 = vxpose.xlu0.b32.cont [9/16] 0.0, 128
        %930 = vxpose.xlu0.b32.cont [10/16] 0.0, 128
        %931 = vxpose.xlu0.b32.cont [11/16] 0.0, 128
        %932 = vxpose.xlu0.b32.cont [12/16] 0.0, 128
        %933 = vxpose.xlu0.b32.cont [13/16] 0.0, 128
        %934 = vxpose.xlu0.b32.cont [14/16] 0.0, 128
        %935 = vxpose.xlu0.b32.cont [15/16] 0.0, 128
        %936 = vxpose.xlu0.b32.end [16/16] 0.0, 128
        %v937 = vpop.trf.xlu0
        %v938 = vpop.trf.xlu0
        %v939 = vpop.trf.xlu0
        %v940 = vpop.trf.xlu0
        %v941 = vpop.trf.xlu0
        %v942 = vpop.trf.xlu0
        %v943 = vpop.trf.xlu0
        %v944 = vpop.trf.xlu0
        %v945 = vpop.trf.xlu0
        %v946 = vpop.trf.xlu0
        %v947 = vpop.trf.xlu0
        %v948 = vpop.trf.xlu0
        %v949 = vpop.trf.xlu0
        %v950 = vpop.trf.xlu0
        %v951 = vpop.trf.xlu0
        %v952 = vpop.trf.xlu0
        %953 = vxpose.xlu0.b32.start [1/16] %v788, 128
        %954 = vxpose.xlu0.b32.cont [2/16] %v794, 128
        %955 = vxpose.xlu0.b32.cont [3/16] %v800, 128
        %956 = vxpose.xlu0.b32.cont [4/16] %v806, 128
        %957 = vxpose.xlu0.b32.cont [5/16] %v812, 128
        %958 = vxpose.xlu0.b32.cont [6/16] %v818, 128
        %959 = vxpose.xlu0.b32.cont [7/16] 0.0, 128
        %960 = vxpose.xlu0.b32.cont [8/16] 0.0, 128
        %961 = vxpose.xlu0.b32.cont [9/16] 0.0, 128
        %962 = vxpose.xlu0.b32.cont [10/16] 0.0, 128
        %963 = vxpose.xlu0.b32.cont [11/16] 0.0, 128
        %964 = vxpose.xlu0.b32.cont [12/16] 0.0, 128
        %965 = vxpose.xlu0.b32.cont [13/16] 0.0, 128
        %966 = vxpose.xlu0.b32.cont [14/16] 0.0, 128
        %967 = vxpose.xlu0.b32.cont [15/16] 0.0, 128
        %968 = vxpose.xlu0.b32.end [16/16] 0.0, 128
        %v969 = vpop.trf.xlu0
        %v970 = vpop.trf.xlu0
        %v971 = vpop.trf.xlu0
        %v972 = vpop.trf.xlu0
        %v973 = vpop.trf.xlu0
        %v974 = vpop.trf.xlu0
        %v975 = vpop.trf.xlu0
        %v976 = vpop.trf.xlu0
        %v977 = vpop.trf.xlu0
        %v978 = vpop.trf.xlu0
        %v979 = vpop.trf.xlu0
        %v980 = vpop.trf.xlu0
        %v981 = vpop.trf.xlu0
        %v982 = vpop.trf.xlu0
        %v983 = vpop.trf.xlu0
        %v984 = vpop.trf.xlu0
        %985 = vxpose.xlu0.b32.start [1/16] %v887, 128
        %986 = vxpose.xlu0.b32.cont [2/16] %v893, 128
        %987 = vxpose.xlu0.b32.cont [3/16] %v899, 128
        %988 = vxpose.xlu0.b32.cont [4/16] %v905, 128
        %989 = vxpose.xlu0.b32.cont [5/16] %v911, 128
        %990 = vxpose.xlu0.b32.cont [6/16] %v917, 128
        %991 = vxpose.xlu0.b32.cont [7/16] 0.0, 128
        %992 = vxpose.xlu0.b32.cont [8/16] 0.0, 128
        %993 = vxpose.xlu0.b32.cont [9/16] 0.0, 128
        %994 = vxpose.xlu0.b32.cont [10/16] 0.0, 128
        %995 = vxpose.xlu0.b32.cont [11/16] 0.0, 128
        %996 = vxpose.xlu0.b32.cont [12/16] 0.0, 128
        %997 = vxpose.xlu0.b32.cont [13/16] 0.0, 128
        %998 = vxpose.xlu0.b32.cont [14/16] 0.0, 128
        %999 = vxpose.xlu0.b32.cont [15/16] 0.0, 128
        %1000 = vxpose.xlu0.b32.end [16/16] 0.0, 128
        %v1001 = vpop.trf.xlu0
        %v1002 = vpop.trf.xlu0
        %v1003 = vpop.trf.xlu0
        %v1004 = vpop.trf.xlu0
        %v1005 = vpop.trf.xlu0
        %v1006 = vpop.trf.xlu0
        %v1007 = vpop.trf.xlu0
        %v1008 = vpop.trf.xlu0
        %v1009 = vpop.trf.xlu0
        %v1010 = vpop.trf.xlu0
        %v1011 = vpop.trf.xlu0
        %v1012 = vpop.trf.xlu0
        %v1013 = vpop.trf.xlu0
        %v1014 = vpop.trf.xlu0
        %v1015 = vpop.trf.xlu0
        %v1016 = vpop.trf.xlu0
        %1017 = vxpose.xlu0.b32.start [1/16] %v889, 128
        %1018 = vxpose.xlu0.b32.cont [2/16] %v895, 128
        %1019 = vxpose.xlu0.b32.cont [3/16] %v901, 128
        %1020 = vxpose.xlu0.b32.cont [4/16] %v907, 128
        %1021 = vxpose.xlu0.b32.cont [5/16] %v913, 128
        %1022 = vxpose.xlu0.b32.cont [6/16] %v919, 128
        %1023 = vxpose.xlu0.b32.cont [7/16] 0.0, 128
        %1024 = vxpose.xlu0.b32.cont [8/16] 0.0, 128
        %1025 = vxpose.xlu0.b32.cont [9/16] 0.0, 128
        %1026 = vxpose.xlu0.b32.cont [10/16] 0.0, 128
        %1027 = vxpose.xlu0.b32.cont [11/16] 0.0, 128
        %1028 = vxpose.xlu0.b32.cont [12/16] 0.0, 128
        %1029 = vxpose.xlu0.b32.cont [13/16] 0.0, 128
        %1030 = vxpose.xlu0.b32.cont [14/16] 0.0, 128
        %1031 = vxpose.xlu0.b32.cont [15/16] 0.0, 128
        %1032 = vxpose.xlu0.b32.end [16/16] 0.0, 128
        %v1033 = vpop.trf.xlu0
        %v1034 = vpop.trf.xlu0
        %v1035 = vpop.trf.xlu0
        %v1036 = vpop.trf.xlu0
        %v1037 = vpop.trf.xlu0
        %v1038 = vpop.trf.xlu0
        %v1039 = vpop.trf.xlu0
        %v1040 = vpop.trf.xlu0
        %v1041 = vpop.trf.xlu0
        %v1042 = vpop.trf.xlu0
        %v1043 = vpop.trf.xlu0
        %v1044 = vpop.trf.xlu0
        %v1045 = vpop.trf.xlu0
        %v1046 = vpop.trf.xlu0
        %v1047 = vpop.trf.xlu0
        %v1048 = vpop.trf.xlu0
        %1073 = vrot.lane.b32.xlu0 %v1001, 48
        %v1074 = vpop.permute.xlu0 %1073
        %1075 = vrot.lane.b32.xlu0 %v1002, 48
        %v1076 = vpop.permute.xlu0 %1075
        %1077 = vrot.lane.b32.xlu0 %v1003, 48
        %v1078 = vpop.permute.xlu0 %1077
        %1079 = vrot.lane.b32.xlu0 %v1004, 48
        %v1080 = vpop.permute.xlu0 %1079
        %1081 = vrot.lane.b32.xlu0 %v1005, 48
        %v1082 = vpop.permute.xlu0 %1081
        %1083 = vrot.lane.b32.xlu0 %v1006, 48
        %v1084 = vpop.permute.xlu0 %1083
        %1085 = vrot.lane.b32.xlu0 %v1007, 48
        %v1086 = vpop.permute.xlu0 %1085
        %1087 = vrot.lane.b32.xlu0 %v1008, 48
        %v1088 = vpop.permute.xlu0 %1087
        %1089 = vrot.lane.b32.xlu0 %v1009, 48
        %v1090 = vpop.permute.xlu0 %1089
        %1091 = vrot.lane.b32.xlu0 %v1010, 48
        %v1092 = vpop.permute.xlu0 %1091
        %1093 = vrot.lane.b32.xlu0 %v1011, 48
        %v1094 = vpop.permute.xlu0 %1093
        %1095 = vrot.lane.b32.xlu0 %v1012, 48
        %v1096 = vpop.permute.xlu0 %1095
        %1097 = vrot.lane.b32.xlu0 %v1013, 48
        %v1098 = vpop.permute.xlu0 %1097
        %1099 = vrot.lane.b32.xlu0 %v1014, 48
        %v1100 = vpop.permute.xlu0 %1099
        %1101 = vrot.lane.b32.xlu0 %v1015, 48
        %v1102 = vpop.permute.xlu0 %1101
        %1103 = vrot.lane.b32.xlu0 %v1016, 48
        %v1104 = vpop.permute.xlu0 %1103
        %1105 = vrot.lane.b32.xlu0 %v1033, 48
        %v1106 = vpop.permute.xlu0 %1105
        %1107 = vrot.lane.b32.xlu0 %v1034, 48
        %v1108 = vpop.permute.xlu0 %1107
        %1109 = vrot.lane.b32.xlu0 %v1035, 48
        %v1110 = vpop.permute.xlu0 %1109
        %1111 = vrot.lane.b32.xlu0 %v1036, 48
        %v1112 = vpop.permute.xlu0 %1111
        %1113 = vrot.lane.b32.xlu0 %v1037, 48
        %v1114 = vpop.permute.xlu0 %1113
        %1115 = vrot.lane.b32.xlu0 %v1038, 48
        %v1116 = vpop.permute.xlu0 %1115
        %1117 = vrot.lane.b32.xlu0 %v1039, 48
        %v1118 = vpop.permute.xlu0 %1117
        %1119 = vrot.lane.b32.xlu0 %v1040, 48
        %v1120 = vpop.permute.xlu0 %1119
        %vm1145 = vcmask 392192
        %v1146 = vsel %vm1145, %v937, %v1074
        %v1147 = vsel %vm1145, %v938, %v1076
        %v1148 = vsel %vm1145, %v939, %v1078
        %v1149 = vsel %vm1145, %v940, %v1080
        %v1150 = vsel %vm1145, %v941, %v1082
        %v1151 = vsel %vm1145, %v942, %v1084
        %v1152 = vsel %vm1145, %v943, %v1086
        %v1153 = vsel %vm1145, %v944, %v1088
        %v1154 = vsel %vm1145, %v945, %v1090
        %v1155 = vsel %vm1145, %v946, %v1092
        %v1156 = vsel %vm1145, %v947, %v1094
        %v1157 = vsel %vm1145, %v948, %v1096
        %v1158 = vsel %vm1145, %v949, %v1098
        %v1159 = vsel %vm1145, %v950, %v1100
        %v1160 = vsel %vm1145, %v951, %v1102
        %v1161 = vsel %vm1145, %v952, %v1104
        %v1162 = vsel %vm1145, %v969, %v1106
        %v1163 = vsel %vm1145, %v970, %v1108
        %v1164 = vsel %vm1145, %v971, %v1110
        %v1165 = vsel %vm1145, %v972, %v1112
        %v1166 = vsel %vm1145, %v973, %v1114
        %v1167 = vsel %vm1145, %v974, %v1116
        %v1168 = vsel %vm1145, %v975, %v1118
        %v1169 = vsel %vm1145, %v976, %v1120
        %vm1170 = vcmask 785408
        %1171 = vst.msk [vmem:[#allocation2] sm:$0xff] %vm1170, 0.0
        %vm1172 = vcmask 782336
        %1173 = vst.msk [vmem:[#allocation2 + $0x8] sm:$0x1f] %vm1172, 0.0
        %1174 = vst.msk [vmem:[#allocation2 + $0xcd] sm:$0xff] %vm1170, 0.0
        %1175 = vst.msk [vmem:[#allocation2 + $0xd5] sm:$0x1f] %vm1172, 0.0
        %1176 = vst.msk [vmem:[#allocation2 + $0xd] sm:$0xff] %vm1170, %v1146
        %1177 = vst.msk [vmem:[#allocation2 + $0x15] sm:$0xff] %vm1170, %v1147
        %1178 = vst.msk [vmem:[#allocation2 + $0x1d] sm:$0xff] %vm1170, %v1148
        %1179 = vst.msk [vmem:[#allocation2 + $0x25] sm:$0xff] %vm1170, %v1149
        %1180 = vst.msk [vmem:[#allocation2 + $0x2d] sm:$0xff] %vm1170, %v1150
        %1181 = vst.msk [vmem:[#allocation2 + $0x35] sm:$0xff] %vm1170, %v1151
        %1182 = vst.msk [vmem:[#allocation2 + $0x3d] sm:$0xff] %vm1170, %v1152
        %1183 = vst.msk [vmem:[#allocation2 + $0x45] sm:$0xff] %vm1170, %v1153
        %1184 = vst.msk [vmem:[#allocation2 + $0x4d] sm:$0xff] %vm1170, %v1154
        %1185 = vst.msk [vmem:[#allocation2 + $0x55] sm:$0xff] %vm1170, %v1155
        %1186 = vst.msk [vmem:[#allocation2 + $0x5d] sm:$0xff] %vm1170, %v1156
        %1187 = vst.msk [vmem:[#allocation2 + $0x65] sm:$0xff] %vm1170, %v1157
        %1188 = vst.msk [vmem:[#allocation2 + $0x6d] sm:$0xff] %vm1170, %v1158
        %1189 = vst.msk [vmem:[#allocation2 + $0x75] sm:$0xff] %vm1170, %v1159
        %1190 = vst.msk [vmem:[#allocation2 + $0x7d] sm:$0xff] %vm1170, %v1160
        %1191 = vst.msk [vmem:[#allocation2 + $0x85] sm:$0xff] %vm1170, %v1161
        %1192 = vst.msk [vmem:[#allocation2 + $0x8d] sm:$0xff] %vm1170, %v1162
        %1193 = vst.msk [vmem:[#allocation2 + $0x95] sm:$0xff] %vm1170, %v1163
        %1194 = vst.msk [vmem:[#allocation2 + $0x9d] sm:$0xff] %vm1170, %v1164
        %1195 = vst.msk [vmem:[#allocation2 + $0xa5] sm:$0xff] %vm1170, %v1165
        %1196 = vst.msk [vmem:[#allocation2 + $0xad] sm:$0xff] %vm1170, %v1166
        %1197 = vst.msk [vmem:[#allocation2 + $0xb5] sm:$0xff] %vm1170, %v1167
        %1198 = vst.msk [vmem:[#allocation2 + $0xbd] sm:$0xff] %vm1170, %v1168
        %1199 = vst.msk [vmem:[#allocation2 + $0xc5] sm:$0xff] %vm1170, %v1169
        %v1200 = vld [vmem:[%s5] sm:$0x7]
        %v1201 = vld [vmem:[%s5 + $0x4] sm:$0x7]
        %v1202 = vld [vmem:[%s5 + $0x8] sm:$0x7]
        %v1203 = vld [vmem:[%s6] sm:$0xff]
        %v1204 = vld [vmem:[%s6 + $0x8] sm:$0xff]
        %v1205 = vld [vmem:[%s6 + $0x10] sm:$0xff]
        %v1206 = vld [vmem:[%s6 + $0x18] sm:$0xff]
        %v1207 = vld [vmem:[%s6 + $0x20] sm:$0xff]
        %v1208 = vld [vmem:[%s6 + $0x28] sm:$0xff]
        %v1209 = vld [vmem:[%s6 + $0x30] sm:$0xff]
        %v1210 = vld [vmem:[%s6 + $0x38] sm:$0xff]
        %v1211 = vld [vmem:[%s6 + $0x40] sm:$0xff]
        %v1212 = vld [vmem:[%s6 + $0x48] sm:$0xff]
        %v1213 = vld [vmem:[%s6 + $0x50] sm:$0xff]
        %v1214 = vld [vmem:[%s6 + $0x58] sm:$0xff]
        %v1215 = vld [vmem:[%s6 + $0x60] sm:$0xff]
        %v1216 = vld [vmem:[%s6 + $0x68] sm:$0xff]
        %v1217 = vld [vmem:[%s6 + $0x70] sm:$0xff]
        %v1218 = vld [vmem:[%s6 + $0x78] sm:$0xff]
        %v1219 = vld [vmem:[%s6 + $0x80] sm:$0xff]
        %v1220 = vld [vmem:[%s6 + $0x88] sm:$0xff]
        %v1221 = vld [vmem:[%s6 + $0x90] sm:$0xff]
        %v1222 = vld [vmem:[%s6 + $0x98] sm:$0xff]
        %v1223 = vld [vmem:[%s6 + $0xa0] sm:$0xff]
        %v1224 = vld [vmem:[%s6 + $0xa8] sm:$0xff]
        %v1225 = vld [vmem:[%s6 + $0xb0] sm:$0xff]
        %v1226 = vld [vmem:[%s6 + $0xb8] sm:$0xff]
        %v1227 = vld [vmem:[%s7] sm:$0xff]
        %v1228 = vld [vmem:[%s7 + $0x8] sm:$0xff]
        %v1229 = vld [vmem:[%s7 + $0x10] sm:$0xff]
        %v1230 = vld [vmem:[%s7 + $0x18] sm:$0xff]
        %v1231 = vld [vmem:[%s7 + $0x20] sm:$0xff]
        %v1232 = vld [vmem:[%s7 + $0x28] sm:$0xff]
        %v1233 = vld [vmem:[%s7 + $0x30] sm:$0xff]
        %v1234 = vld [vmem:[%s7 + $0x38] sm:$0xff]
        %v1235 = vld [vmem:[%s7 + $0x40] sm:$0xff]
        %v1236 = vld [vmem:[%s7 + $0x48] sm:$0xff]
        %v1237 = vld [vmem:[%s7 + $0x50] sm:$0xff]
        %v1238 = vld [vmem:[%s7 + $0x58] sm:$0xff]
        %v1239 = vld [vmem:[%s7 + $0x60] sm:$0xff]
        %v1240 = vld [vmem:[%s7 + $0x68] sm:$0xff]
        %v1241 = vld [vmem:[%s7 + $0x70] sm:$0xff]
        %v1242 = vld [vmem:[%s7 + $0x78] sm:$0xff]
        %v1243 = vld [vmem:[%s7 + $0x80] sm:$0xff]
        %v1244 = vld [vmem:[%s7 + $0x88] sm:$0xff]
        %v1245 = vld [vmem:[%s7 + $0x90] sm:$0xff]
        %v1246 = vld [vmem:[%s7 + $0x98] sm:$0xff]
        %v1247 = vld [vmem:[%s7 + $0xa0] sm:$0xff]
        %v1248 = vld [vmem:[%s7 + $0xa8] sm:$0xff]
        %v1249 = vld [vmem:[%s7 + $0xb0] sm:$0xff]
        %v1250 = vld [vmem:[%s7 + $0xb8] sm:$0xff]
        %v1251 = vld [vmem:[#allocation2] sm:$0xff]
        %v1252 = vld [vmem:[#allocation2 + $0x8] sm:$0xff]
        %v1253 = vld [vmem:[#allocation2 + $0x10] sm:$0xff]
        %v1254 = vld [vmem:[#allocation2 + $0x18] sm:$0xff]
        %v1255 = vld [vmem:[#allocation2 + $0x20] sm:$0xff]
        %v1256 = vld [vmem:[#allocation2 + $0x28] sm:$0xff]
        %v1257 = vld [vmem:[#allocation2 + $0x30] sm:$0xff]
        %v1258 = vld [vmem:[#allocation2 + $0x38] sm:$0xff]
        %v1259 = vld [vmem:[#allocation2 + $0x40] sm:$0xff]
        %v1260 = vld [vmem:[#allocation2 + $0x48] sm:$0xff]
        %v1261 = vld [vmem:[#allocation2 + $0x50] sm:$0xff]
        %v1262 = vld [vmem:[#allocation2 + $0x58] sm:$0xff]
        %v1263 = vld [vmem:[#allocation2 + $0x60] sm:$0xff]
        %v1264 = vld [vmem:[#allocation2 + $0x68] sm:$0xff]
        %v1265 = vld [vmem:[#allocation2 + $0x70] sm:$0xff]
        %v1266 = vld [vmem:[#allocation2 + $0x78] sm:$0xff]
        %v1267 = vld [vmem:[#allocation2 + $0x80] sm:$0xff]
        %v1268 = vld [vmem:[#allocation2 + $0x88] sm:$0xff]
        %v1269 = vld [vmem:[#allocation2 + $0x90] sm:$0xff]
        %v1270 = vld [vmem:[#allocation2 + $0x98] sm:$0xff]
        %v1271 = vld [vmem:[#allocation2 + $0xa0] sm:$0xff]
        %v1272 = vld [vmem:[#allocation2 + $0xa8] sm:$0xff]
        %v1273 = vld [vmem:[#allocation2 + $0xb0] sm:$0xff]
        %v1274 = vld [vmem:[#allocation2 + $0xb8] sm:$0xff]
        %v1275 = vlaneseq
        %v1276 = vshrl.u32 %v1275, 7
        %v1277 = vsub.s32 0, %v1276
        %v1278 = vrot.slane %v1200, %v1277
        %v1279 = vmul.f32 %v1251, %v1278
        %v1280 = vmul.f32 %v1252, %v1278
        %v1281 = vmul.f32 %v1253, %v1278
        %v1282 = vmul.f32 %v1254, %v1278
        %v1283 = vmul.f32 %v1255, %v1278
        %v1284 = vmul.f32 %v1256, %v1278
        %v1285 = vmul.f32 %v1257, %v1278
        %v1286 = vmul.f32 %v1258, %v1278
        %v1287 = vmul.f32 %v1259, %v1278
        %v1288 = vmul.f32 %v1260, %v1278
        %v1289 = vmul.f32 %v1261, %v1278
        %v1290 = vmul.f32 %v1262, %v1278
        %v1291 = vmul.f32 %v1263, %v1278
        %v1292 = vmul.f32 %v1264, %v1278
        %v1293 = vmul.f32 %v1265, %v1278
        %v1294 = vmul.f32 %v1266, %v1278
        %v1295 = vmul.f32 %v1267, %v1278
        %v1296 = vmul.f32 %v1268, %v1278
        %v1297 = vmul.f32 %v1269, %v1278
        %v1298 = vmul.f32 %v1270, %v1278
        %v1299 = vmul.f32 %v1271, %v1278
        %v1300 = vmul.f32 %v1272, %v1278
        %v1301 = vmul.f32 %v1273, %v1278
        %v1302 = vmul.f32 %v1274, %v1278
        %v1303 = vadd.f32 %v1279, 0.0
        %v1304 = vadd.f32 %v1280, 0.0
        %v1305 = vadd.f32 %v1281, 0.0
        %v1306 = vadd.f32 %v1282, 0.0
        %v1307 = vadd.f32 %v1283, 0.0
        %v1308 = vadd.f32 %v1284, 0.0
        %v1309 = vadd.f32 %v1285, 0.0
        %v1310 = vadd.f32 %v1286, 0.0
        %v1311 = vadd.f32 %v1287, 0.0
        %v1312 = vadd.f32 %v1288, 0.0
        %v1313 = vadd.f32 %v1289, 0.0
        %v1314 = vadd.f32 %v1290, 0.0
        %v1315 = vadd.f32 %v1291, 0.0
        %v1316 = vadd.f32 %v1292, 0.0
        %v1317 = vadd.f32 %v1293, 0.0
        %v1318 = vadd.f32 %v1294, 0.0
        %v1319 = vadd.f32 %v1295, 0.0
        %v1320 = vadd.f32 %v1296, 0.0
        %v1321 = vadd.f32 %v1297, 0.0
        %v1322 = vadd.f32 %v1298, 0.0
        %v1323 = vadd.f32 %v1299, 0.0
        %v1324 = vadd.f32 %v1300, 0.0
        %v1325 = vadd.f32 %v1301, 0.0
        %v1326 = vadd.f32 %v1302, 0.0
        %v1327 = vld [vmem:[#allocation2 + $0xc] sm:$0xff]
        %v1328 = vld [vmem:[#allocation2 + $0x14] sm:$0xff]
        %v1329 = vld [vmem:[#allocation2 + $0x1c] sm:$0xff]
        %v1330 = vld [vmem:[#allocation2 + $0x24] sm:$0xff]
        %v1331 = vld [vmem:[#allocation2 + $0x2c] sm:$0xff]
        %v1332 = vld [vmem:[#allocation2 + $0x34] sm:$0xff]
        %v1333 = vld [vmem:[#allocation2 + $0x3c] sm:$0xff]
        %v1334 = vld [vmem:[#allocation2 + $0x44] sm:$0xff]
        %v1335 = vld [vmem:[#allocation2 + $0x4c] sm:$0xff]
        %v1336 = vld [vmem:[#allocation2 + $0x54] sm:$0xff]
        %v1337 = vld [vmem:[#allocation2 + $0x5c] sm:$0xff]
        %v1338 = vld [vmem:[#allocation2 + $0x64] sm:$0xff]
        %v1339 = vld [vmem:[#allocation2 + $0x6c] sm:$0xff]
        %v1340 = vld [vmem:[#allocation2 + $0x74] sm:$0xff]
        %v1341 = vld [vmem:[#allocation2 + $0x7c] sm:$0xff]
        %v1342 = vld [vmem:[#allocation2 + $0x84] sm:$0xff]
        %v1343 = vld [vmem:[#allocation2 + $0x8c] sm:$0xff]
        %v1344 = vld [vmem:[#allocation2 + $0x94] sm:$0xff]
        %v1345 = vld [vmem:[#allocation2 + $0x9c] sm:$0xff]
        %v1346 = vld [vmem:[#allocation2 + $0xa4] sm:$0xff]
        %v1347 = vld [vmem:[#allocation2 + $0xac] sm:$0xff]
        %v1348 = vld [vmem:[#allocation2 + $0xb4] sm:$0xff]
        %v1349 = vld [vmem:[#allocation2 + $0xbc] sm:$0xff]
        %v1350 = vld [vmem:[#allocation2 + $0xc4] sm:$0xff]
        %v1351 = vlaneseq
        %v1352 = vshrl.u32 %v1351, 7
        %v1353 = vsub.s32 0, %v1352
        %v1354 = vrot.slane %v1201, %v1353
        %v1355 = vmul.f32 %v1327, %v1354
        %v1356 = vmul.f32 %v1328, %v1354
        %v1357 = vmul.f32 %v1329, %v1354
        %v1358 = vmul.f32 %v1330, %v1354
        %v1359 = vmul.f32 %v1331, %v1354
        %v1360 = vmul.f32 %v1332, %v1354
        %v1361 = vmul.f32 %v1333, %v1354
        %v1362 = vmul.f32 %v1334, %v1354
        %v1363 = vmul.f32 %v1335, %v1354
        %v1364 = vmul.f32 %v1336, %v1354
        %v1365 = vmul.f32 %v1337, %v1354
        %v1366 = vmul.f32 %v1338, %v1354
        %v1367 = vmul.f32 %v1339, %v1354
        %v1368 = vmul.f32 %v1340, %v1354
        %v1369 = vmul.f32 %v1341, %v1354
        %v1370 = vmul.f32 %v1342, %v1354
        %v1371 = vmul.f32 %v1343, %v1354
        %v1372 = vmul.f32 %v1344, %v1354
        %v1373 = vmul.f32 %v1345, %v1354
        %v1374 = vmul.f32 %v1346, %v1354
        %v1375 = vmul.f32 %v1347, %v1354
        %v1376 = vmul.f32 %v1348, %v1354
        %v1377 = vmul.f32 %v1349, %v1354
        %v1378 = vmul.f32 %v1350, %v1354
        %v1379 = vadd.f32 %v1303, %v1355
        %v1380 = vadd.f32 %v1304, %v1356
        %v1381 = vadd.f32 %v1305, %v1357
        %v1382 = vadd.f32 %v1306, %v1358
        %v1383 = vadd.f32 %v1307, %v1359
        %v1384 = vadd.f32 %v1308, %v1360
        %v1385 = vadd.f32 %v1309, %v1361
        %v1386 = vadd.f32 %v1310, %v1362
        %v1387 = vadd.f32 %v1311, %v1363
        %v1388 = vadd.f32 %v1312, %v1364
        %v1389 = vadd.f32 %v1313, %v1365
        %v1390 = vadd.f32 %v1314, %v1366
        %v1391 = vadd.f32 %v1315, %v1367
        %v1392 = vadd.f32 %v1316, %v1368
        %v1393 = vadd.f32 %v1317, %v1369
        %v1394 = vadd.f32 %v1318, %v1370
        %v1395 = vadd.f32 %v1319, %v1371
        %v1396 = vadd.f32 %v1320, %v1372
        %v1397 = vadd.f32 %v1321, %v1373
        %v1398 = vadd.f32 %v1322, %v1374
        %v1399 = vadd.f32 %v1323, %v1375
        %v1400 = vadd.f32 %v1324, %v1376
        %v1401 = vadd.f32 %v1325, %v1377
        %v1402 = vadd.f32 %v1326, %v1378
        %v1403 = vld [vmem:[#allocation2 + $0xc0] sm:$0xff]
        %v1404 = vld [vmem:[#allocation2 + $0xc8] sm:$0xff]
        %v1405 = vld [vmem:[#allocation2 + $0xd0] sm:$0xff]
        %v1406 = vlaneseq
        %v1407 = vshrl.u32 %v1406, 7
        %v1408 = vsub.s32 0, %v1407
        %v1409 = vrot.slane %v1202, %v1408
        %v1410 = vmul.f32 %v1254, %v1409
        %v1411 = vmul.f32 %v1255, %v1409
        %v1412 = vmul.f32 %v1256, %v1409
        %v1413 = vmul.f32 %v1257, %v1409
        %v1414 = vmul.f32 %v1258, %v1409
        %v1415 = vmul.f32 %v1259, %v1409
        %v1416 = vmul.f32 %v1260, %v1409
        %v1417 = vmul.f32 %v1261, %v1409
        %v1418 = vmul.f32 %v1262, %v1409
        %v1419 = vmul.f32 %v1263, %v1409
        %v1420 = vmul.f32 %v1264, %v1409
        %v1421 = vmul.f32 %v1265, %v1409
        %v1422 = vmul.f32 %v1266, %v1409
        %v1423 = vmul.f32 %v1267, %v1409
        %v1424 = vmul.f32 %v1268, %v1409
        %v1425 = vmul.f32 %v1269, %v1409
        %v1426 = vmul.f32 %v1270, %v1409
        %v1427 = vmul.f32 %v1271, %v1409
        %v1428 = vmul.f32 %v1272, %v1409
        %v1429 = vmul.f32 %v1273, %v1409
        %v1430 = vmul.f32 %v1274, %v1409
        %v1431 = vmul.f32 %v1403, %v1409
        %v1432 = vmul.f32 %v1404, %v1409
        %v1433 = vmul.f32 %v1405, %v1409
        %v1434 = vadd.f32 %v1379, %v1410
        %v1435 = vadd.f32 %v1380, %v1411
        %v1436 = vadd.f32 %v1381, %v1412
        %v1437 = vadd.f32 %v1382, %v1413
        %v1438 = vadd.f32 %v1383, %v1414
        %v1439 = vadd.f32 %v1384, %v1415
        %v1440 = vadd.f32 %v1385, %v1416
        %v1441 = vadd.f32 %v1386, %v1417
        %v1442 = vadd.f32 %v1387, %v1418
        %v1443 = vadd.f32 %v1388, %v1419
        %v1444 = vadd.f32 %v1389, %v1420
        %v1445 = vadd.f32 %v1390, %v1421
        %v1446 = vadd.f32 %v1391, %v1422
        %v1447 = vadd.f32 %v1392, %v1423
        %v1448 = vadd.f32 %v1393, %v1424
        %v1449 = vadd.f32 %v1394, %v1425
        %v1450 = vadd.f32 %v1395, %v1426
        %v1451 = vadd.f32 %v1396, %v1427
        %v1452 = vadd.f32 %v1397, %v1428
        %v1453 = vadd.f32 %v1398, %v1429
        %v1454 = vadd.f32 %v1399, %v1430
        %v1455 = vadd.f32 %v1400, %v1431
        %v1456 = vadd.f32 %v1401, %v1432
        %v1457 = vadd.f32 %v1402, %v1433
        %1459 = vset.pattern.permute.xlu0 0
        %1460 = vperm.xlu0 %1459, %v1203
        %v1461 = vpop.permute.xlu0 %1460
        %1464 = vset.pattern.permute.xlu0 0
        %1465 = vperm.xlu0 %1464, %v1204
        %v1466 = vpop.permute.xlu0 %1465
        %1469 = vset.pattern.permute.xlu0 0
        %1470 = vperm.xlu0 %1469, %v1205
        %v1471 = vpop.permute.xlu0 %1470
        %1474 = vset.pattern.permute.xlu0 0
        %1475 = vperm.xlu0 %1474, %v1206
        %v1476 = vpop.permute.xlu0 %1475
        %1479 = vset.pattern.permute.xlu0 0
        %1480 = vperm.xlu0 %1479, %v1207
        %v1481 = vpop.permute.xlu0 %1480
        %1484 = vset.pattern.permute.xlu0 0
        %1485 = vperm.xlu0 %1484, %v1208
        %v1486 = vpop.permute.xlu0 %1485
        %1489 = vset.pattern.permute.xlu0 0
        %1490 = vperm.xlu0 %1489, %v1209
        %v1491 = vpop.permute.xlu0 %1490
        %1494 = vset.pattern.permute.xlu0 0
        %1495 = vperm.xlu0 %1494, %v1210
        %v1496 = vpop.permute.xlu0 %1495
        %1499 = vset.pattern.permute.xlu0 0
        %1500 = vperm.xlu0 %1499, %v1211
        %v1501 = vpop.permute.xlu0 %1500
        %1504 = vset.pattern.permute.xlu0 0
        %1505 = vperm.xlu0 %1504, %v1212
        %v1506 = vpop.permute.xlu0 %1505
        %1509 = vset.pattern.permute.xlu0 0
        %1510 = vperm.xlu0 %1509, %v1213
        %v1511 = vpop.permute.xlu0 %1510
        %1514 = vset.pattern.permute.xlu0 0
        %1515 = vperm.xlu0 %1514, %v1214
        %v1516 = vpop.permute.xlu0 %1515
        %1519 = vset.pattern.permute.xlu0 0
        %1520 = vperm.xlu0 %1519, %v1215
        %v1521 = vpop.permute.xlu0 %1520
        %1524 = vset.pattern.permute.xlu0 0
        %1525 = vperm.xlu0 %1524, %v1216
        %v1526 = vpop.permute.xlu0 %1525
        %1529 = vset.pattern.permute.xlu0 0
        %1530 = vperm.xlu0 %1529, %v1217
        %v1531 = vpop.permute.xlu0 %1530
        %1534 = vset.pattern.permute.xlu0 0
        %1535 = vperm.xlu0 %1534, %v1218
        %v1536 = vpop.permute.xlu0 %1535
        %1539 = vset.pattern.permute.xlu0 0
        %1540 = vperm.xlu0 %1539, %v1219
        %v1541 = vpop.permute.xlu0 %1540
        %1544 = vset.pattern.permute.xlu0 0
        %1545 = vperm.xlu0 %1544, %v1220
        %v1546 = vpop.permute.xlu0 %1545
        %1549 = vset.pattern.permute.xlu0 0
        %1550 = vperm.xlu0 %1549, %v1221
        %v1551 = vpop.permute.xlu0 %1550
        %1554 = vset.pattern.permute.xlu0 0
        %1555 = vperm.xlu0 %1554, %v1222
        %v1556 = vpop.permute.xlu0 %1555
        %1559 = vset.pattern.permute.xlu0 0
        %1560 = vperm.xlu0 %1559, %v1223
        %v1561 = vpop.permute.xlu0 %1560
        %1564 = vset.pattern.permute.xlu0 0
        %1565 = vperm.xlu0 %1564, %v1224
        %v1566 = vpop.permute.xlu0 %1565
        %1569 = vset.pattern.permute.xlu0 0
        %1570 = vperm.xlu0 %1569, %v1225
        %v1571 = vpop.permute.xlu0 %1570
        %1574 = vset.pattern.permute.xlu0 0
        %1575 = vperm.xlu0 %1574, %v1226
        %v1576 = vpop.permute.xlu0 %1575
        %v1578 = vmul.f32 %v1434, %v1461
        %v1579 = vmul.f32 %v1435, %v1466
        %v1580 = vmul.f32 %v1436, %v1471
        %v1581 = vmul.f32 %v1437, %v1476
        %v1582 = vmul.f32 %v1438, %v1481
        %v1583 = vmul.f32 %v1439, %v1486
        %v1584 = vmul.f32 %v1440, %v1491
        %v1585 = vmul.f32 %v1441, %v1496
        %v1586 = vmul.f32 %v1442, %v1501
        %v1587 = vmul.f32 %v1443, %v1506
        %v1588 = vmul.f32 %v1444, %v1511
        %v1589 = vmul.f32 %v1445, %v1516
        %v1590 = vmul.f32 %v1446, %v1521
        %v1591 = vmul.f32 %v1447, %v1526
        %v1592 = vmul.f32 %v1448, %v1531
        %v1593 = vmul.f32 %v1449, %v1536
        %v1594 = vmul.f32 %v1450, %v1541
        %v1595 = vmul.f32 %v1451, %v1546
        %v1596 = vmul.f32 %v1452, %v1551
        %v1597 = vmul.f32 %v1453, %v1556
        %v1598 = vmul.f32 %v1454, %v1561
        %v1599 = vmul.f32 %v1455, %v1566
        %v1600 = vmul.f32 %v1456, %v1571
        %v1601 = vmul.f32 %v1457, %v1576
        %v1602 = vadd.f32 %v1578, 0.0
        %v1603 = vadd.f32 %v1579, 0.0
        %v1604 = vadd.f32 %v1580, 0.0
        %v1605 = vadd.f32 %v1581, 0.0
        %v1606 = vadd.f32 %v1582, 0.0
        %v1607 = vadd.f32 %v1583, 0.0
        %v1608 = vadd.f32 %v1584, 0.0
        %v1609 = vadd.f32 %v1585, 0.0
        %v1610 = vadd.f32 %v1586, 0.0
        %v1611 = vadd.f32 %v1587, 0.0
        %v1612 = vadd.f32 %v1588, 0.0
        %v1613 = vadd.f32 %v1589, 0.0
        %v1614 = vadd.f32 %v1590, 0.0
        %v1615 = vadd.f32 %v1591, 0.0
        %v1616 = vadd.f32 %v1592, 0.0
        %v1617 = vadd.f32 %v1593, 0.0
        %v1618 = vadd.f32 %v1594, 0.0
        %v1619 = vadd.f32 %v1595, 0.0
        %v1620 = vadd.f32 %v1596, 0.0
        %v1621 = vadd.f32 %v1597, 0.0
        %v1622 = vadd.f32 %v1598, 0.0
        %v1623 = vadd.f32 %v1599, 0.0
        %v1624 = vadd.f32 %v1600, 0.0
        %v1625 = vadd.f32 %v1601, 0.0
        %v1626 = vld [vmem:[#allocation2 + $0x1] sm:$0xff]
        %v1627 = vld [vmem:[#allocation2 + $0x9] sm:$0xff]
        %v1628 = vld [vmem:[#allocation2 + $0x11] sm:$0xff]
        %v1629 = vld [vmem:[#allocation2 + $0x19] sm:$0xff]
        %v1630 = vld [vmem:[#allocation2 + $0x21] sm:$0xff]
        %v1631 = vld [vmem:[#allocation2 + $0x29] sm:$0xff]
        %v1632 = vld [vmem:[#allocation2 + $0x31] sm:$0xff]
        %v1633 = vld [vmem:[#allocation2 + $0x39] sm:$0xff]
        %v1634 = vld [vmem:[#allocation2 + $0x41] sm:$0xff]
        %v1635 = vld [vmem:[#allocation2 + $0x49] sm:$0xff]
        %v1636 = vld [vmem:[#allocation2 + $0x51] sm:$0xff]
        %v1637 = vld [vmem:[#allocation2 + $0x59] sm:$0xff]
        %v1638 = vld [vmem:[#allocation2 + $0x61] sm:$0xff]
        %v1639 = vld [vmem:[#allocation2 + $0x69] sm:$0xff]
        %v1640 = vld [vmem:[#allocation2 + $0x71] sm:$0xff]
        %v1641 = vld [vmem:[#allocation2 + $0x79] sm:$0xff]
        %v1642 = vld [vmem:[#allocation2 + $0x81] sm:$0xff]
        %v1643 = vld [vmem:[#allocation2 + $0x89] sm:$0xff]
        %v1644 = vld [vmem:[#allocation2 + $0x91] sm:$0xff]
        %v1645 = vld [vmem:[#allocation2 + $0x99] sm:$0xff]
        %v1646 = vld [vmem:[#allocation2 + $0xa1] sm:$0xff]
        %v1647 = vld [vmem:[#allocation2 + $0xa9] sm:$0xff]
        %v1648 = vld [vmem:[#allocation2 + $0xb1] sm:$0xff]
        %v1649 = vld [vmem:[#allocation2 + $0xb9] sm:$0xff]
        %v1650 = vlaneseq
        %v1651 = vshrl.u32 %v1650, 7
        %v1652 = vsub.s32 1, %v1651
        %v1653 = vrot.slane %v1200, %v1652
        %v1654 = vmul.f32 %v1626, %v1653
        %v1655 = vmul.f32 %v1627, %v1653
        %v1656 = vmul.f32 %v1628, %v1653
        %v1657 = vmul.f32 %v1629, %v1653
        %v1658 = vmul.f32 %v1630, %v1653
        %v1659 = vmul.f32 %v1631, %v1653
        %v1660 = vmul.f32 %v1632, %v1653
        %v1661 = vmul.f32 %v1633, %v1653
        %v1662 = vmul.f32 %v1634, %v1653
        %v1663 = vmul.f32 %v1635, %v1653
        %v1664 = vmul.f32 %v1636, %v1653
        %v1665 = vmul.f32 %v1637, %v1653
        %v1666 = vmul.f32 %v1638, %v1653
        %v1667 = vmul.f32 %v1639, %v1653
        %v1668 = vmul.f32 %v1640, %v1653
        %v1669 = vmul.f32 %v1641, %v1653
        %v1670 = vmul.f32 %v1642, %v1653
        %v1671 = vmul.f32 %v1643, %v1653
        %v1672 = vmul.f32 %v1644, %v1653
        %v1673 = vmul.f32 %v1645, %v1653
        %v1674 = vmul.f32 %v1646, %v1653
        %v1675 = vmul.f32 %v1647, %v1653
        %v1676 = vmul.f32 %v1648, %v1653
        %v1677 = vmul.f32 %v1649, %v1653
        %v1678 = vadd.f32 %v1654, 0.0
        %v1679 = vadd.f32 %v1655, 0.0
        %v1680 = vadd.f32 %v1656, 0.0
        %v1681 = vadd.f32 %v1657, 0.0
        %v1682 = vadd.f32 %v1658, 0.0
        %v1683 = vadd.f32 %v1659, 0.0
        %v1684 = vadd.f32 %v1660, 0.0
        %v1685 = vadd.f32 %v1661, 0.0
        %v1686 = vadd.f32 %v1662, 0.0
        %v1687 = vadd.f32 %v1663, 0.0
        %v1688 = vadd.f32 %v1664, 0.0
        %v1689 = vadd.f32 %v1665, 0.0
        %v1690 = vadd.f32 %v1666, 0.0
        %v1691 = vadd.f32 %v1667, 0.0
        %v1692 = vadd.f32 %v1668, 0.0
        %v1693 = vadd.f32 %v1669, 0.0
        %v1694 = vadd.f32 %v1670, 0.0
        %v1695 = vadd.f32 %v1671, 0.0
        %v1696 = vadd.f32 %v1672, 0.0
        %v1697 = vadd.f32 %v1673, 0.0
        %v1698 = vadd.f32 %v1674, 0.0
        %v1699 = vadd.f32 %v1675, 0.0
        %v1700 = vadd.f32 %v1676, 0.0
        %v1701 = vadd.f32 %v1677, 0.0
        %v1702 = vld [vmem:[#allocation2 + $0xd] sm:$0xff]
        %v1703 = vld [vmem:[#allocation2 + $0x15] sm:$0xff]
        %v1704 = vld [vmem:[#allocation2 + $0x1d] sm:$0xff]
        %v1705 = vld [vmem:[#allocation2 + $0x25] sm:$0xff]
        %v1706 = vld [vmem:[#allocation2 + $0x2d] sm:$0xff]
        %v1707 = vld [vmem:[#allocation2 + $0x35] sm:$0xff]
        %v1708 = vld [vmem:[#allocation2 + $0x3d] sm:$0xff]
        %v1709 = vld [vmem:[#allocation2 + $0x45] sm:$0xff]
        %v1710 = vld [vmem:[#allocation2 + $0x4d] sm:$0xff]
        %v1711 = vld [vmem:[#allocation2 + $0x55] sm:$0xff]
        %v1712 = vld [vmem:[#allocation2 + $0x5d] sm:$0xff]
        %v1713 = vld [vmem:[#allocation2 + $0x65] sm:$0xff]
        %v1714 = vld [vmem:[#allocation2 + $0x6d] sm:$0xff]
        %v1715 = vld [vmem:[#allocation2 + $0x75] sm:$0xff]
        %v1716 = vld [vmem:[#allocation2 + $0x7d] sm:$0xff]
        %v1717 = vld [vmem:[#allocation2 + $0x85] sm:$0xff]
        %v1718 = vld [vmem:[#allocation2 + $0x8d] sm:$0xff]
        %v1719 = vld [vmem:[#allocation2 + $0x95] sm:$0xff]
        %v1720 = vld [vmem:[#allocation2 + $0x9d] sm:$0xff]
        %v1721 = vld [vmem:[#allocation2 + $0xa5] sm:$0xff]
        %v1722 = vld [vmem:[#allocation2 + $0xad] sm:$0xff]
        %v1723 = vld [vmem:[#allocation2 + $0xb5] sm:$0xff]
        %v1724 = vld [vmem:[#allocation2 + $0xbd] sm:$0xff]
        %v1725 = vld [vmem:[#allocation2 + $0xc5] sm:$0xff]
        %v1726 = vlaneseq
        %v1727 = vshrl.u32 %v1726, 7
        %v1728 = vsub.s32 1, %v1727
        %v1729 = vrot.slane %v1201, %v1728
        %v1730 = vmul.f32 %v1702, %v1729
        %v1731 = vmul.f32 %v1703, %v1729
        %v1732 = vmul.f32 %v1704, %v1729
        %v1733 = vmul.f32 %v1705, %v1729
        %v1734 = vmul.f32 %v1706, %v1729
        %v1735 = vmul.f32 %v1707, %v1729
        %v1736 = vmul.f32 %v1708, %v1729
        %v1737 = vmul.f32 %v1709, %v1729
        %v1738 = vmul.f32 %v1710, %v1729
        %v1739 = vmul.f32 %v1711, %v1729
        %v1740 = vmul.f32 %v1712, %v1729
        %v1741 = vmul.f32 %v1713, %v1729
        %v1742 = vmul.f32 %v1714, %v1729
        %v1743 = vmul.f32 %v1715, %v1729
        %v1744 = vmul.f32 %v1716, %v1729
        %v1745 = vmul.f32 %v1717, %v1729
        %v1746 = vmul.f32 %v1718, %v1729
        %v1747 = vmul.f32 %v1719, %v1729
        %v1748 = vmul.f32 %v1720, %v1729
        %v1749 = vmul.f32 %v1721, %v1729
        %v1750 = vmul.f32 %v1722, %v1729
        %v1751 = vmul.f32 %v1723, %v1729
        %v1752 = vmul.f32 %v1724, %v1729
        %v1753 = vmul.f32 %v1725, %v1729
        %v1754 = vadd.f32 %v1678, %v1730
        %v1755 = vadd.f32 %v1679, %v1731
        %v1756 = vadd.f32 %v1680, %v1732
        %v1757 = vadd.f32 %v1681, %v1733
        %v1758 = vadd.f32 %v1682, %v1734
        %v1759 = vadd.f32 %v1683, %v1735
        %v1760 = vadd.f32 %v1684, %v1736
        %v1761 = vadd.f32 %v1685, %v1737
        %v1762 = vadd.f32 %v1686, %v1738
        %v1763 = vadd.f32 %v1687, %v1739
        %v1764 = vadd.f32 %v1688, %v1740
        %v1765 = vadd.f32 %v1689, %v1741
        %v1766 = vadd.f32 %v1690, %v1742
        %v1767 = vadd.f32 %v1691, %v1743
        %v1768 = vadd.f32 %v1692, %v1744
        %v1769 = vadd.f32 %v1693, %v1745
        %v1770 = vadd.f32 %v1694, %v1746
        %v1771 = vadd.f32 %v1695, %v1747
        %v1772 = vadd.f32 %v1696, %v1748
        %v1773 = vadd.f32 %v1697, %v1749
        %v1774 = vadd.f32 %v1698, %v1750
        %v1775 = vadd.f32 %v1699, %v1751
        %v1776 = vadd.f32 %v1700, %v1752
        %v1777 = vadd.f32 %v1701, %v1753
        %v1778 = vld [vmem:[#allocation2 + $0xc1] sm:$0xff]
        %v1779 = vld [vmem:[#allocation2 + $0xc9] sm:$0xff]
        %v1780 = vld [vmem:[#allocation2 + $0xd1] sm:$0xff]
        %v1781 = vlaneseq
        %v1782 = vshrl.u32 %v1781, 7
        %v1783 = vsub.s32 1, %v1782
        %v1784 = vrot.slane %v1202, %v1783
        %v1785 = vmul.f32 %v1629, %v1784
        %v1786 = vmul.f32 %v1630, %v1784
        %v1787 = vmul.f32 %v1631, %v1784
        %v1788 = vmul.f32 %v1632, %v1784
        %v1789 = vmul.f32 %v1633, %v1784
        %v1790 = vmul.f32 %v1634, %v1784
        %v1791 = vmul.f32 %v1635, %v1784
        %v1792 = vmul.f32 %v1636, %v1784
        %v1793 = vmul.f32 %v1637, %v1784
        %v1794 = vmul.f32 %v1638, %v1784
        %v1795 = vmul.f32 %v1639, %v1784
        %v1796 = vmul.f32 %v1640, %v1784
        %v1797 = vmul.f32 %v1641, %v1784
        %v1798 = vmul.f32 %v1642, %v1784
        %v1799 = vmul.f32 %v1643, %v1784
        %v1800 = vmul.f32 %v1644, %v1784
        %v1801 = vmul.f32 %v1645, %v1784
        %v1802 = vmul.f32 %v1646, %v1784
        %v1803 = vmul.f32 %v1647, %v1784
        %v1804 = vmul.f32 %v1648, %v1784
        %v1805 = vmul.f32 %v1649, %v1784
        %v1806 = vmul.f32 %v1778, %v1784
        %v1807 = vmul.f32 %v1779, %v1784
        %v1808 = vmul.f32 %v1780, %v1784
        %v1809 = vadd.f32 %v1754, %v1785
        %v1810 = vadd.f32 %v1755, %v1786
        %v1811 = vadd.f32 %v1756, %v1787
        %v1812 = vadd.f32 %v1757, %v1788
        %v1813 = vadd.f32 %v1758, %v1789
        %v1814 = vadd.f32 %v1759, %v1790
        %v1815 = vadd.f32 %v1760, %v1791
        %v1816 = vadd.f32 %v1761, %v1792
        %v1817 = vadd.f32 %v1762, %v1793
        %v1818 = vadd.f32 %v1763, %v1794
        %v1819 = vadd.f32 %v1764, %v1795
        %v1820 = vadd.f32 %v1765, %v1796
        %v1821 = vadd.f32 %v1766, %v1797
        %v1822 = vadd.f32 %v1767, %v1798
        %v1823 = vadd.f32 %v1768, %v1799
        %v1824 = vadd.f32 %v1769, %v1800
        %v1825 = vadd.f32 %v1770, %v1801
        %v1826 = vadd.f32 %v1771, %v1802
        %v1827 = vadd.f32 %v1772, %v1803
        %v1828 = vadd.f32 %v1773, %v1804
        %v1829 = vadd.f32 %v1774, %v1805
        %v1830 = vadd.f32 %v1775, %v1806
        %v1831 = vadd.f32 %v1776, %v1807
        %v1832 = vadd.f32 %v1777, %v1808
        %v1833 = vadd.f32 %v1602, %v1809
        %v1834 = vadd.f32 %v1603, %v1810
        %v1835 = vadd.f32 %v1604, %v1811
        %v1836 = vadd.f32 %v1605, %v1812
        %v1837 = vadd.f32 %v1606, %v1813
        %v1838 = vadd.f32 %v1607, %v1814
        %v1839 = vadd.f32 %v1608, %v1815
        %v1840 = vadd.f32 %v1609, %v1816
        %v1841 = vadd.f32 %v1610, %v1817
        %v1842 = vadd.f32 %v1611, %v1818
        %v1843 = vadd.f32 %v1612, %v1819
        %v1844 = vadd.f32 %v1613, %v1820
        %v1845 = vadd.f32 %v1614, %v1821
        %v1846 = vadd.f32 %v1615, %v1822
        %v1847 = vadd.f32 %v1616, %v1823
        %v1848 = vadd.f32 %v1617, %v1824
        %v1849 = vadd.f32 %v1618, %v1825
        %v1850 = vadd.f32 %v1619, %v1826
        %v1851 = vadd.f32 %v1620, %v1827
        %v1852 = vadd.f32 %v1621, %v1828
        %v1853 = vadd.f32 %v1622, %v1829
        %v1854 = vadd.f32 %v1623, %v1830
        %v1855 = vadd.f32 %v1624, %v1831
        %v1856 = vadd.f32 %v1625, %v1832
        %v1857 = vld [vmem:[#allocation2 + $0x2] sm:$0xff]
        %v1858 = vld [vmem:[#allocation2 + $0xa] sm:$0xff]
        %v1859 = vld [vmem:[#allocation2 + $0x12] sm:$0xff]
        %v1860 = vld [vmem:[#allocation2 + $0x1a] sm:$0xff]
        %v1861 = vld [vmem:[#allocation2 + $0x22] sm:$0xff]
        %v1862 = vld [vmem:[#allocation2 + $0x2a] sm:$0xff]
        %v1863 = vld [vmem:[#allocation2 + $0x32] sm:$0xff]
        %v1864 = vld [vmem:[#allocation2 + $0x3a] sm:$0xff]
        %v1865 = vld [vmem:[#allocation2 + $0x42] sm:$0xff]
        %v1866 = vld [vmem:[#allocation2 + $0x4a] sm:$0xff]
        %v1867 = vld [vmem:[#allocation2 + $0x52] sm:$0xff]
        %v1868 = vld [vmem:[#allocation2 + $0x5a] sm:$0xff]
        %v1869 = vld [vmem:[#allocation2 + $0x62] sm:$0xff]
        %v1870 = vld [vmem:[#allocation2 + $0x6a] sm:$0xff]
        %v1871 = vld [vmem:[#allocation2 + $0x72] sm:$0xff]
        %v1872 = vld [vmem:[#allocation2 + $0x7a] sm:$0xff]
        %v1873 = vld [vmem:[#allocation2 + $0x82] sm:$0xff]
        %v1874 = vld [vmem:[#allocation2 + $0x8a] sm:$0xff]
        %v1875 = vld [vmem:[#allocation2 + $0x92] sm:$0xff]
        %v1876 = vld [vmem:[#allocation2 + $0x9a] sm:$0xff]
        %v1877 = vld [vmem:[#allocation2 + $0xa2] sm:$0xff]
        %v1878 = vld [vmem:[#allocation2 + $0xaa] sm:$0xff]
        %v1879 = vld [vmem:[#allocation2 + $0xb2] sm:$0xff]
        %v1880 = vld [vmem:[#allocation2 + $0xba] sm:$0xff]
        %v1881 = vlaneseq
        %v1882 = vshrl.u32 %v1881, 7
        %v1883 = vsub.s32 2, %v1882
        %v1884 = vrot.slane %v1200, %v1883
        %v1885 = vmul.f32 %v1857, %v1884
        %v1886 = vmul.f32 %v1858, %v1884
        %v1887 = vmul.f32 %v1859, %v1884
        %v1888 = vmul.f32 %v1860, %v1884
        %v1889 = vmul.f32 %v1861, %v1884
        %v1890 = vmul.f32 %v1862, %v1884
        %v1891 = vmul.f32 %v1863, %v1884
        %v1892 = vmul.f32 %v1864, %v1884
        %v1893 = vmul.f32 %v1865, %v1884
        %v1894 = vmul.f32 %v1866, %v1884
        %v1895 = vmul.f32 %v1867, %v1884
        %v1896 = vmul.f32 %v1868, %v1884
        %v1897 = vmul.f32 %v1869, %v1884
        %v1898 = vmul.f32 %v1870, %v1884
        %v1899 = vmul.f32 %v1871, %v1884
        %v1900 = vmul.f32 %v1872, %v1884
        %v1901 = vmul.f32 %v1873, %v1884
        %v1902 = vmul.f32 %v1874, %v1884
        %v1903 = vmul.f32 %v1875, %v1884
        %v1904 = vmul.f32 %v1876, %v1884
        %v1905 = vmul.f32 %v1877, %v1884
        %v1906 = vmul.f32 %v1878, %v1884
        %v1907 = vmul.f32 %v1879, %v1884
        %v1908 = vmul.f32 %v1880, %v1884
        %v1909 = vadd.f32 %v1885, 0.0
        %v1910 = vadd.f32 %v1886, 0.0
        %v1911 = vadd.f32 %v1887, 0.0
        %v1912 = vadd.f32 %v1888, 0.0
        %v1913 = vadd.f32 %v1889, 0.0
        %v1914 = vadd.f32 %v1890, 0.0
        %v1915 = vadd.f32 %v1891, 0.0
        %v1916 = vadd.f32 %v1892, 0.0
        %v1917 = vadd.f32 %v1893, 0.0
        %v1918 = vadd.f32 %v1894, 0.0
        %v1919 = vadd.f32 %v1895, 0.0
        %v1920 = vadd.f32 %v1896, 0.0
        %v1921 = vadd.f32 %v1897, 0.0
        %v1922 = vadd.f32 %v1898, 0.0
        %v1923 = vadd.f32 %v1899, 0.0
        %v1924 = vadd.f32 %v1900, 0.0
        %v1925 = vadd.f32 %v1901, 0.0
        %v1926 = vadd.f32 %v1902, 0.0
        %v1927 = vadd.f32 %v1903, 0.0
        %v1928 = vadd.f32 %v1904, 0.0
        %v1929 = vadd.f32 %v1905, 0.0
        %v1930 = vadd.f32 %v1906, 0.0
        %v1931 = vadd.f32 %v1907, 0.0
        %v1932 = vadd.f32 %v1908, 0.0
        %v1933 = vld [vmem:[#allocation2 + $0xe] sm:$0xff]
        %v1934 = vld [vmem:[#allocation2 + $0x16] sm:$0xff]
        %v1935 = vld [vmem:[#allocation2 + $0x1e] sm:$0xff]
        %v1936 = vld [vmem:[#allocation2 + $0x26] sm:$0xff]
        %v1937 = vld [vmem:[#allocation2 + $0x2e] sm:$0xff]
        %v1938 = vld [vmem:[#allocation2 + $0x36] sm:$0xff]
        %v1939 = vld [vmem:[#allocation2 + $0x3e] sm:$0xff]
        %v1940 = vld [vmem:[#allocation2 + $0x46] sm:$0xff]
        %v1941 = vld [vmem:[#allocation2 + $0x4e] sm:$0xff]
        %v1942 = vld [vmem:[#allocation2 + $0x56] sm:$0xff]
        %v1943 = vld [vmem:[#allocation2 + $0x5e] sm:$0xff]
        %v1944 = vld [vmem:[#allocation2 + $0x66] sm:$0xff]
        %v1945 = vld [vmem:[#allocation2 + $0x6e] sm:$0xff]
        %v1946 = vld [vmem:[#allocation2 + $0x76] sm:$0xff]
        %v1947 = vld [vmem:[#allocation2 + $0x7e] sm:$0xff]
        %v1948 = vld [vmem:[#allocation2 + $0x86] sm:$0xff]
        %v1949 = vld [vmem:[#allocation2 + $0x8e] sm:$0xff]
        %v1950 = vld [vmem:[#allocation2 + $0x96] sm:$0xff]
        %v1951 = vld [vmem:[#allocation2 + $0x9e] sm:$0xff]
        %v1952 = vld [vmem:[#allocation2 + $0xa6] sm:$0xff]
        %v1953 = vld [vmem:[#allocation2 + $0xae] sm:$0xff]
        %v1954 = vld [vmem:[#allocation2 + $0xb6] sm:$0xff]
        %v1955 = vld [vmem:[#allocation2 + $0xbe] sm:$0xff]
        %v1956 = vld [vmem:[#allocation2 + $0xc6] sm:$0xff]
        %v1957 = vlaneseq
        %v1958 = vshrl.u32 %v1957, 7
        %v1959 = vsub.s32 2, %v1958
        %v1960 = vrot.slane %v1201, %v1959
        %v1961 = vmul.f32 %v1933, %v1960
        %v1962 = vmul.f32 %v1934, %v1960
        %v1963 = vmul.f32 %v1935, %v1960
        %v1964 = vmul.f32 %v1936, %v1960
        %v1965 = vmul.f32 %v1937, %v1960
        %v1966 = vmul.f32 %v1938, %v1960
        %v1967 = vmul.f32 %v1939, %v1960
        %v1968 = vmul.f32 %v1940, %v1960
        %v1969 = vmul.f32 %v1941, %v1960
        %v1970 = vmul.f32 %v1942, %v1960
        %v1971 = vmul.f32 %v1943, %v1960
        %v1972 = vmul.f32 %v1944, %v1960
        %v1973 = vmul.f32 %v1945, %v1960
        %v1974 = vmul.f32 %v1946, %v1960
        %v1975 = vmul.f32 %v1947, %v1960
        %v1976 = vmul.f32 %v1948, %v1960
        %v1977 = vmul.f32 %v1949, %v1960
        %v1978 = vmul.f32 %v1950, %v1960
        %v1979 = vmul.f32 %v1951, %v1960
        %v1980 = vmul.f32 %v1952, %v1960
        %v1981 = vmul.f32 %v1953, %v1960
        %v1982 = vmul.f32 %v1954, %v1960
        %v1983 = vmul.f32 %v1955, %v1960
        %v1984 = vmul.f32 %v1956, %v1960
        %v1985 = vadd.f32 %v1909, %v1961
        %v1986 = vadd.f32 %v1910, %v1962
        %v1987 = vadd.f32 %v1911, %v1963
        %v1988 = vadd.f32 %v1912, %v1964
        %v1989 = vadd.f32 %v1913, %v1965
        %v1990 = vadd.f32 %v1914, %v1966
        %v1991 = vadd.f32 %v1915, %v1967
        %v1992 = vadd.f32 %v1916, %v1968
        %v1993 = vadd.f32 %v1917, %v1969
        %v1994 = vadd.f32 %v1918, %v1970
        %v1995 = vadd.f32 %v1919, %v1971
        %v1996 = vadd.f32 %v1920, %v1972
        %v1997 = vadd.f32 %v1921, %v1973
        %v1998 = vadd.f32 %v1922, %v1974
        %v1999 = vadd.f32 %v1923, %v1975
        %v2000 = vadd.f32 %v1924, %v1976
        %v2001 = vadd.f32 %v1925, %v1977
        %v2002 = vadd.f32 %v1926, %v1978
        %v2003 = vadd.f32 %v1927, %v1979
        %v2004 = vadd.f32 %v1928, %v1980
        %v2005 = vadd.f32 %v1929, %v1981
        %v2006 = vadd.f32 %v1930, %v1982
        %v2007 = vadd.f32 %v1931, %v1983
        %v2008 = vadd.f32 %v1932, %v1984
        %v2009 = vld [vmem:[#allocation2 + $0xc2] sm:$0xff]
        %v2010 = vld [vmem:[#allocation2 + $0xca] sm:$0xff]
        %v2011 = vld [vmem:[#allocation2 + $0xd2] sm:$0xff]
        %v2012 = vlaneseq
        %v2013 = vshrl.u32 %v2012, 7
        %v2014 = vsub.s32 2, %v2013
        %v2015 = vrot.slane %v1202, %v2014
        %v2016 = vmul.f32 %v1860, %v2015
        %v2017 = vmul.f32 %v1861, %v2015
        %v2018 = vmul.f32 %v1862, %v2015
        %v2019 = vmul.f32 %v1863, %v2015
        %v2020 = vmul.f32 %v1864, %v2015
        %v2021 = vmul.f32 %v1865, %v2015
        %v2022 = vmul.f32 %v1866, %v2015
        %v2023 = vmul.f32 %v1867, %v2015
        %v2024 = vmul.f32 %v1868, %v2015
        %v2025 = vmul.f32 %v1869, %v2015
        %v2026 = vmul.f32 %v1870, %v2015
        %v2027 = vmul.f32 %v1871, %v2015
        %v2028 = vmul.f32 %v1872, %v2015
        %v2029 = vmul.f32 %v1873, %v2015
        %v2030 = vmul.f32 %v1874, %v2015
        %v2031 = vmul.f32 %v1875, %v2015
        %v2032 = vmul.f32 %v1876, %v2015
        %v2033 = vmul.f32 %v1877, %v2015
        %v2034 = vmul.f32 %v1878, %v2015
        %v2035 = vmul.f32 %v1879, %v2015
        %v2036 = vmul.f32 %v1880, %v2015
        %v2037 = vmul.f32 %v2009, %v2015
        %v2038 = vmul.f32 %v2010, %v2015
        %v2039 = vmul.f32 %v2011, %v2015
        %v2040 = vadd.f32 %v1985, %v2016
        %v2041 = vadd.f32 %v1986, %v2017
        %v2042 = vadd.f32 %v1987, %v2018
        %v2043 = vadd.f32 %v1988, %v2019
        %v2044 = vadd.f32 %v1989, %v2020
        %v2045 = vadd.f32 %v1990, %v2021
        %v2046 = vadd.f32 %v1991, %v2022
        %v2047 = vadd.f32 %v1992, %v2023
        %v2048 = vadd.f32 %v1993, %v2024
        %v2049 = vadd.f32 %v1994, %v2025
        %v2050 = vadd.f32 %v1995, %v2026
        %v2051 = vadd.f32 %v1996, %v2027
        %v2052 = vadd.f32 %v1997, %v2028
        %v2053 = vadd.f32 %v1998, %v2029
        %v2054 = vadd.f32 %v1999, %v2030
        %v2055 = vadd.f32 %v2000, %v2031
        %v2056 = vadd.f32 %v2001, %v2032
        %v2057 = vadd.f32 %v2002, %v2033
        %v2058 = vadd.f32 %v2003, %v2034
        %v2059 = vadd.f32 %v2004, %v2035
        %v2060 = vadd.f32 %v2005, %v2036
        %v2061 = vadd.f32 %v2006, %v2037
        %v2062 = vadd.f32 %v2007, %v2038
        %v2063 = vadd.f32 %v2008, %v2039
        %2065 = vset.pattern.permute.xlu0 0
        %2066 = vperm.xlu0 %2065, %v1227
        %v2067 = vpop.permute.xlu0 %2066
        %2070 = vset.pattern.permute.xlu0 0
        %2071 = vperm.xlu0 %2070, %v1228
        %v2072 = vpop.permute.xlu0 %2071
        %2075 = vset.pattern.permute.xlu0 0
        %2076 = vperm.xlu0 %2075, %v1229
        %v2077 = vpop.permute.xlu0 %2076
        %2080 = vset.pattern.permute.xlu0 0
        %2081 = vperm.xlu0 %2080, %v1230
        %v2082 = vpop.permute.xlu0 %2081
        %2085 = vset.pattern.permute.xlu0 0
        %2086 = vperm.xlu0 %2085, %v1231
        %v2087 = vpop.permute.xlu0 %2086
        %2090 = vset.pattern.permute.xlu0 0
        %2091 = vperm.xlu0 %2090, %v1232
        %v2092 = vpop.permute.xlu0 %2091
        %2095 = vset.pattern.permute.xlu0 0
        %2096 = vperm.xlu0 %2095, %v1233
        %v2097 = vpop.permute.xlu0 %2096
        %2100 = vset.pattern.permute.xlu0 0
        %2101 = vperm.xlu0 %2100, %v1234
        %v2102 = vpop.permute.xlu0 %2101
        %2105 = vset.pattern.permute.xlu0 0
        %2106 = vperm.xlu0 %2105, %v1235
        %v2107 = vpop.permute.xlu0 %2106
        %2110 = vset.pattern.permute.xlu0 0
        %2111 = vperm.xlu0 %2110, %v1236
        %v2112 = vpop.permute.xlu0 %2111
        %2115 = vset.pattern.permute.xlu0 0
        %2116 = vperm.xlu0 %2115, %v1237
        %v2117 = vpop.permute.xlu0 %2116
        %2120 = vset.pattern.permute.xlu0 0
        %2121 = vperm.xlu0 %2120, %v1238
        %v2122 = vpop.permute.xlu0 %2121
        %2125 = vset.pattern.permute.xlu0 0
        %2126 = vperm.xlu0 %2125, %v1239
        %v2127 = vpop.permute.xlu0 %2126
        %2130 = vset.pattern.permute.xlu0 0
        %2131 = vperm.xlu0 %2130, %v1240
        %v2132 = vpop.permute.xlu0 %2131
        %2135 = vset.pattern.permute.xlu0 0
        %2136 = vperm.xlu0 %2135, %v1241
        %v2137 = vpop.permute.xlu0 %2136
        %2140 = vset.pattern.permute.xlu0 0
        %2141 = vperm.xlu0 %2140, %v1242
        %v2142 = vpop.permute.xlu0 %2141
        %2145 = vset.pattern.permute.xlu0 0
        %2146 = vperm.xlu0 %2145, %v1243
        %v2147 = vpop.permute.xlu0 %2146
        %2150 = vset.pattern.permute.xlu0 0
        %2151 = vperm.xlu0 %2150, %v1244
        %v2152 = vpop.permute.xlu0 %2151
        %2155 = vset.pattern.permute.xlu0 0
        %2156 = vperm.xlu0 %2155, %v1245
        %v2157 = vpop.permute.xlu0 %2156
        %2160 = vset.pattern.permute.xlu0 0
        %2161 = vperm.xlu0 %2160, %v1246
        %v2162 = vpop.permute.xlu0 %2161
        %2165 = vset.pattern.permute.xlu0 0
        %2166 = vperm.xlu0 %2165, %v1247
        %v2167 = vpop.permute.xlu0 %2166
        %2170 = vset.pattern.permute.xlu0 0
        %2171 = vperm.xlu0 %2170, %v1248
        %v2172 = vpop.permute.xlu0 %2171
        %2175 = vset.pattern.permute.xlu0 0
        %2176 = vperm.xlu0 %2175, %v1249
        %v2177 = vpop.permute.xlu0 %2176
        %2180 = vset.pattern.permute.xlu0 0
        %2181 = vperm.xlu0 %2180, %v1250
        %v2182 = vpop.permute.xlu0 %2181
        %v2184 = vmul.f32 %v2040, %v2067
        %v2185 = vmul.f32 %v2041, %v2072
        %v2186 = vmul.f32 %v2042, %v2077
        %v2187 = vmul.f32 %v2043, %v2082
        %v2188 = vmul.f32 %v2044, %v2087
        %v2189 = vmul.f32 %v2045, %v2092
        %v2190 = vmul.f32 %v2046, %v2097
        %v2191 = vmul.f32 %v2047, %v2102
        %v2192 = vmul.f32 %v2048, %v2107
        %v2193 = vmul.f32 %v2049, %v2112
        %v2194 = vmul.f32 %v2050, %v2117
        %v2195 = vmul.f32 %v2051, %v2122
        %v2196 = vmul.f32 %v2052, %v2127
        %v2197 = vmul.f32 %v2053, %v2132
        %v2198 = vmul.f32 %v2054, %v2137
        %v2199 = vmul.f32 %v2055, %v2142
        %v2200 = vmul.f32 %v2056, %v2147
        %v2201 = vmul.f32 %v2057, %v2152
        %v2202 = vmul.f32 %v2058, %v2157
        %v2203 = vmul.f32 %v2059, %v2162
        %v2204 = vmul.f32 %v2060, %v2167
        %v2205 = vmul.f32 %v2061, %v2172
        %v2206 = vmul.f32 %v2062, %v2177
        %v2207 = vmul.f32 %v2063, %v2182
        %v2208 = vadd.f32 %v1833, %v2184
        %v2209 = vadd.f32 %v1834, %v2185
        %v2210 = vadd.f32 %v1835, %v2186
        %v2211 = vadd.f32 %v1836, %v2187
        %v2212 = vadd.f32 %v1837, %v2188
        %v2213 = vadd.f32 %v1838, %v2189
        %v2214 = vadd.f32 %v1839, %v2190
        %v2215 = vadd.f32 %v1840, %v2191
        %v2216 = vadd.f32 %v1841, %v2192
        %v2217 = vadd.f32 %v1842, %v2193
        %v2218 = vadd.f32 %v1843, %v2194
        %v2219 = vadd.f32 %v1844, %v2195
        %v2220 = vadd.f32 %v1845, %v2196
        %v2221 = vadd.f32 %v1846, %v2197
        %v2222 = vadd.f32 %v1847, %v2198
        %v2223 = vadd.f32 %v1848, %v2199
        %v2224 = vadd.f32 %v1849, %v2200
        %v2225 = vadd.f32 %v1850, %v2201
        %v2226 = vadd.f32 %v1851, %v2202
        %v2227 = vadd.f32 %v1852, %v2203
        %v2228 = vadd.f32 %v1853, %v2204
        %v2229 = vadd.f32 %v1854, %v2205
        %v2230 = vadd.f32 %v1855, %v2206
        %v2231 = vadd.f32 %v1856, %v2207
        %2232 = vxpose.xlu0.b32.start [1/16] %v2208, 128
        %2233 = vxpose.xlu0.b32.cont [2/16] %v2209, 128
        %2234 = vxpose.xlu0.b32.cont [3/16] %v2210, 128
        %2235 = vxpose.xlu0.b32.cont [4/16] %v2211, 128
        %2236 = vxpose.xlu0.b32.cont [5/16] %v2212, 128
        %2237 = vxpose.xlu0.b32.cont [6/16] %v2213, 128
        %2238 = vxpose.xlu0.b32.cont [7/16] %v2214, 128
        %2239 = vxpose.xlu0.b32.cont [8/16] %v2215, 128
        %2240 = vxpose.xlu0.b32.cont [9/16] %v2216, 128
        %2241 = vxpose.xlu0.b32.cont [10/16] %v2217, 128
        %2242 = vxpose.xlu0.b32.cont [11/16] %v2218, 128
        %2243 = vxpose.xlu0.b32.cont [12/16] %v2219, 128
        %2244 = vxpose.xlu0.b32.cont [13/16] %v2220, 128
        %2245 = vxpose.xlu0.b32.cont [14/16] %v2221, 128
        %2246 = vxpose.xlu0.b32.cont [15/16] %v2222, 128
        %2247 = vxpose.xlu0.b32.end [16/16] %v2223, 128
        %v2248 = vpop.trf.xlu0
        %v2249 = vpop.trf.xlu0
        %v2250 = vpop.trf.xlu0
        %v2251 = vpop.trf.xlu0
        %v2252 = vpop.trf.xlu0
        %v2253 = vpop.trf.xlu0
        %v2254 = vpop.trf.xlu0
        %v2255 = vpop.trf.xlu0
        %v2256 = vpop.trf.xlu0
        %v2257 = vpop.trf.xlu0
        %v2258 = vpop.trf.xlu0
        %v2259 = vpop.trf.xlu0
        %v2260 = vpop.trf.xlu0
        %v2261 = vpop.trf.xlu0
        %v2262 = vpop.trf.xlu0
        %v2263 = vpop.trf.xlu0
        %2264 = vxpose.xlu0.b32.start [1/16] %v2224, 128
        %2265 = vxpose.xlu0.b32.cont [2/16] %v2225, 128
        %2266 = vxpose.xlu0.b32.cont [3/16] %v2226, 128
        %2267 = vxpose.xlu0.b32.cont [4/16] %v2227, 128
        %2268 = vxpose.xlu0.b32.cont [5/16] %v2228, 128
        %2269 = vxpose.xlu0.b32.cont [6/16] %v2229, 128
        %2270 = vxpose.xlu0.b32.cont [7/16] %v2230, 128
        %2271 = vxpose.xlu0.b32.cont [8/16] %v2231, 128
        %2272 = vxpose.xlu0.b32.cont [9/16] 0.0, 128
        %2273 = vxpose.xlu0.b32.cont [10/16] 0.0, 128
        %2274 = vxpose.xlu0.b32.cont [11/16] 0.0, 128
        %2275 = vxpose.xlu0.b32.cont [12/16] 0.0, 128
        %2276 = vxpose.xlu0.b32.cont [13/16] 0.0, 128
        %2277 = vxpose.xlu0.b32.cont [14/16] 0.0, 128
        %2278 = vxpose.xlu0.b32.cont [15/16] 0.0, 128
        %2279 = vxpose.xlu0.b32.end [16/16] 0.0, 128
        %v2280 = vpop.trf.xlu0
        %v2281 = vpop.trf.xlu0
        %v2282 = vpop.trf.xlu0
        %v2283 = vpop.trf.xlu0
        %v2284 = vpop.trf.xlu0
        %v2285 = vpop.trf.xlu0
        %v2286 = vpop.trf.xlu0
        %v2287 = vpop.trf.xlu0
        %v2288 = vpop.trf.xlu0
        %v2289 = vpop.trf.xlu0
        %v2290 = vpop.trf.xlu0
        %v2291 = vpop.trf.xlu0
        %v2292 = vpop.trf.xlu0
        %v2293 = vpop.trf.xlu0
        %v2294 = vpop.trf.xlu0
        %v2295 = vpop.trf.xlu0
        %v2296 = vmul.f32 %v2248, %v2248
        %v2297 = vmul.f32 %v2280, %v2280
        %v2298 = vmul.f32 %v2249, %v2249
        %v2299 = vmul.f32 %v2281, %v2281
        %v2300 = vmul.f32 %v2254, %v2254
        %v2301 = vmul.f32 %v2286, %v2286
        %v2302 = vmul.f32 %v2255, %v2255
        %v2303 = vmul.f32 %v2287, %v2287
        %v2304 = vsel %vm559, %v2297, 0.0
        %v2305 = vadd.f32 %v2296, %v2304
        %2306 = vadd.xlane.f32.xlu0 %v2305
        %v2307 = vpop.xlane.xlu0 %2306
        %v2308 = vsel %vm559, %v2299, 0.0
        %v2309 = vadd.f32 %v2298, %v2308
        %2310 = vadd.xlane.f32.xlu0 %v2309
        %v2311 = vpop.xlane.xlu0 %2310
        %v2312 = vsel %vm559, %v2301, 0.0
        %v2313 = vadd.f32 %v2300, %v2312
        %2314 = vadd.xlane.f32.xlu0 %v2313
        %v2315 = vpop.xlane.xlu0 %2314
        %v2316 = vsel %vm559, %v2303, 0.0
        %v2317 = vadd.f32 %v2302, %v2316
        %2318 = vadd.xlane.f32.xlu0 %v2317
        %v2319 = vpop.xlane.xlu0 %2318
        %v2320 = vmax.f32 %v2307, 1e-24
        %v2321 = vmax.f32 %v2311, 1e-24
        %v2322 = vmax.f32 %v2315, 1e-24
        %v2323 = vmax.f32 %v2319, 1e-24
        %v2324 = vrsqrt.pop %v2320
        %v2325 = vrsqrt.pop %v2321
        %v2326 = vrsqrt.pop %v2322
        %v2327 = vrsqrt.pop %v2323
        %v2328 = vmul.f32 %v2248, %v2324
        %v2329 = vmul.f32 %v2280, %v2324
        %v2330 = vmul.f32 %v2249, %v2325
        %v2331 = vmul.f32 %v2281, %v2325
        %v2332 = vmul.f32 %v2254, %v2326
        %v2333 = vmul.f32 %v2286, %v2326
        %v2334 = vmul.f32 %v2255, %v2327
        %v2335 = vmul.f32 %v2287, %v2327
        %v2336 = vmul.f32 %v2250, %v2250
        %v2337 = vmul.f32 %v2282, %v2282
        %v2338 = vmul.f32 %v2251, %v2251
        %v2339 = vmul.f32 %v2283, %v2283
        %v2340 = vmul.f32 %v2256, %v2256
        %v2341 = vmul.f32 %v2288, %v2288
        %v2342 = vmul.f32 %v2257, %v2257
        %v2343 = vmul.f32 %v2289, %v2289
        %v2344 = vsel %vm559, %v2337, 0.0
        %v2345 = vadd.f32 %v2336, %v2344
        %2346 = vadd.xlane.f32.xlu0 %v2345
        %v2347 = vpop.xlane.xlu0 %2346
        %v2348 = vsel %vm559, %v2339, 0.0
        %v2349 = vadd.f32 %v2338, %v2348
        %2350 = vadd.xlane.f32.xlu0 %v2349
        %v2351 = vpop.xlane.xlu0 %2350
        %v2352 = vsel %vm559, %v2341, 0.0
        %v2353 = vadd.f32 %v2340, %v2352
        %2354 = vadd.xlane.f32.xlu0 %v2353
        %v2355 = vpop.xlane.xlu0 %2354
        %v2356 = vsel %vm559, %v2343, 0.0
        %v2357 = vadd.f32 %v2342, %v2356
        %2358 = vadd.xlane.f32.xlu0 %v2357
        %v2359 = vpop.xlane.xlu0 %2358
        %v2360 = vmax.f32 %v2347, 1e-24
        %v2361 = vmax.f32 %v2351, 1e-24
        %v2362 = vmax.f32 %v2355, 1e-24
        %v2363 = vmax.f32 %v2359, 1e-24
        %v2364 = vrsqrt.pop %v2360
        %v2365 = vrsqrt.pop %v2361
        %v2366 = vrsqrt.pop %v2362
        %v2367 = vrsqrt.pop %v2363
        %v2368 = vmul.f32 %v2250, %v2364
        %v2369 = vmul.f32 %v2282, %v2364
        %v2370 = vmul.f32 %v2251, %v2365
        %v2371 = vmul.f32 %v2283, %v2365
        %v2372 = vmul.f32 %v2256, %v2366
        %v2373 = vmul.f32 %v2288, %v2366
        %v2374 = vmul.f32 %v2257, %v2367
        %v2375 = vmul.f32 %v2289, %v2367
        %v2377 = vsel %vm559, %v2329, 0
        %v2380 = vsel %vm559, %v2331, 0
        %v2383 = vsel %vm559, %v2333, 0
        %v2386 = vsel %vm559, %v2335, 0
        %v2389 = vsel %vm559, %v2369, 0
        %v2392 = vsel %vm559, %v2371, 0
        %v2395 = vsel %vm559, %v2373, 0
        %v2398 = vsel %vm559, %v2375, 0
        %2400 = vmatprep.subr.mxu0 %v2389
        %2401 = vmatpush1.xpose.msra.mxu0 %v2368
        %2402 = vmatprep.subr.mxu0 %v2392
        %2403 = vmatpush1.xpose.msra.mxu0 %v2370
        %2404 = vmatprep.subr.mxu0 %v2395
        %2405 = vmatpush1.xpose.msra.mxu0 %v2372
        %2406 = vmatprep.subr.mxu0 %v2398
        %2407 = vmatpush1.xpose.msra.mxu0 %v2374
        %2408 = vmatprep.subr.mxu0 0.0
        %2409 = vmatpush1.xpose.msra.mxu0 0.0
        %2410 = vmatprep.subr.mxu0 0.0
        %2411 = vmatpush1.xpose.msra.mxu0 0.0
        %2412 = vmatprep.subr.mxu0 0.0
        %2413 = vmatpush1.xpose.msra.mxu0 0.0
        %2414 = vmatprep.subr.mxu0 0.0
        %2415 = vmatpush1.xpose.msra.mxu0 0.0
        %2416 = vmatprep.subr.mxu0 0.0
        %2417 = vmatpush1.xpose.msra.mxu0 0.0
        %2418 = vmatprep.subr.mxu0 0.0
        %2419 = vmatpush1.xpose.msra.mxu0 0.0
        %2420 = vmatprep.subr.mxu0 0.0
        %2421 = vmatpush1.xpose.msra.mxu0 0.0
        %2422 = vmatprep.subr.mxu0 0.0
        %2423 = vmatpush1.xpose.msra.mxu0 0.0
        %2424 = vmatprep.subr.mxu0 0.0
        %2425 = vmatpush1.xpose.msra.mxu0 0.0
        %2426 = vmatprep.subr.mxu0 0.0
        %2427 = vmatpush1.xpose.msra.mxu0 0.0
        %2428 = vmatprep.subr.mxu0 0.0
        %2429 = vmatpush1.xpose.msra.mxu0 0.0
        %2430 = vmatprep.subr.mxu0 0.0
        %2431 = vmatpush1.xpose.msra.mxu0 0.0
        %2432 = vmatprep.subr.mxu0 0.0
        %2433 = vmatpush1.xpose.msra.mxu0 0.0
        %2434 = vmatprep.subr.mxu0 0.0
        %2435 = vmatpush1.xpose.msra.mxu0 0.0
        %2436 = vmatprep.subr.mxu0 0.0
        %2437 = vmatpush1.xpose.msra.mxu0 0.0
        %2438 = vmatprep.subr.mxu0 0.0
        %2439 = vmatpush1.xpose.msra.mxu0 0.0
        %2440 = vmatprep.subr.mxu0 0.0
        %2441 = vmatpush1.xpose.msra.mxu0 0.0
        %2442 = vmatprep.subr.mxu0 0.0
        %2443 = vmatpush1.xpose.msra.mxu0 0.0
        %2444 = vmatprep.subr.mxu0 0.0
        %2445 = vmatpush1.xpose.msra.mxu0 0.0
        %2446 = vmatprep.subr.mxu0 0.0
        %2447 = vmatpush1.xpose.msra.mxu0 0.0
        %2448 = vmatprep.subr.mxu0 0.0
        %2449 = vmatpush1.xpose.msra.mxu0 0.0
        %2450 = vmatprep.subr.mxu0 0.0
        %2451 = vmatpush1.xpose.msra.mxu0 0.0
        %2452 = vmatprep.subr.mxu0 0.0
        %2453 = vmatpush1.xpose.msra.mxu0 0.0
        %2454 = vmatprep.subr.mxu0 0.0
        %2455 = vmatpush1.xpose.msra.mxu0 0.0
        %2456 = vmatprep.subr.mxu0 0.0
        %2457 = vmatpush1.xpose.msra.mxu0 0.0
        %2458 = vmatprep.subr.mxu0 0.0
        %2459 = vmatpush1.xpose.msra.mxu0 0.0
        %2460 = vmatprep.subr.mxu0 0.0
        %2461 = vmatpush1.xpose.msra.mxu0 0.0
        %2462 = vmatprep.subr.mxu0 0.0
        %2463 = vmatpush1.xpose.msra.mxu0 0.0
        %2464 = vmatprep.mubr.f32.mxu0 %v2377
        %2465 = vmatmul.mubr.f32.gmra.mrb[0].mxu0 %v2328
        %v2466 = vpop.f32.mrb[0].mxu0
        %v2467 = vadd.f32 0.0, %v2466
        %v2468 = vpop.f32.mrb[0].mxu0
        %2469 = vmatprep.mubr.f32.mxu0 %v2380
        %2470 = vmatmul.mubr.f32.gmra.mrb[0].mxu0 %v2330
        %v2471 = vpop.f32.mrb[0].mxu0
        %v2472 = vadd.f32 0.0, %v2471
        %v2473 = vpop.f32.mrb[0].mxu0
        %2474 = vmatprep.mubr.f32.mxu0 %v2383
        %2475 = vmatmul.mubr.f32.gmra.mrb[0].mxu0 %v2332
        %v2476 = vpop.f32.mrb[0].mxu0
        %v2477 = vadd.f32 0.0, %v2476
        %v2478 = vpop.f32.mrb[0].mxu0
        %2479 = vmatprep.mubr.f32.mxu0 %v2386
        %2480 = vmatmul.mubr.f32.gmra.mrb[0].mxu0 %v2334
        %v2481 = vpop.f32.mrb[0].mxu0
        %v2482 = vadd.f32 0.0, %v2481
        %v2483 = vpop.f32.mrb[0].mxu0
        %2484 = vdwg.mxu0
        %v2485 = vld [vmem:[%s8] sm:$0xff]
        %v2486 = vld [vmem:[%s8 + $0x8] sm:$0xff]
        %v2487 = vld [vmem:[%s8 + $0x10] sm:$0xff]
        %v2488 = vld [vmem:[%s8 + $0x18] sm:$0xff]
        %2490 = vset.pattern.permute.xlu0 0
        %2491 = vperm.xlu0 %2490, %v2485
        %v2492 = vpop.permute.xlu0 %2491
        %2495 = vset.pattern.permute.xlu0 0
        %2496 = vperm.xlu0 %2495, %v2486
        %v2497 = vpop.permute.xlu0 %2496
        %2500 = vset.pattern.permute.xlu0 0
        %2501 = vperm.xlu0 %2500, %v2487
        %v2502 = vpop.permute.xlu0 %2501
        %2505 = vset.pattern.permute.xlu0 0
        %2506 = vperm.xlu0 %2505, %v2488
        %v2507 = vpop.permute.xlu0 %2506
        %v2509 = vmul.f32 %v2467, %v2492
        %v2510 = vmul.f32 %v2472, %v2497
        %v2511 = vmul.f32 %v2477, %v2502
        %v2512 = vmul.f32 %v2482, %v2507
        %v2513 = vld [vmem:[%s9] sm:$0xff]
        %v2514 = vld [vmem:[%s9 + $0x8] sm:$0xff]
        %v2515 = vld [vmem:[%s9 + $0x10] sm:$0xff]
        %v2516 = vld [vmem:[%s9 + $0x18] sm:$0xff]
        %v2517 = vadd.f32 %v2509, %v2513
        %v2518 = vadd.f32 %v2510, %v2514
        %v2519 = vadd.f32 %v2511, %v2515
        %v2520 = vadd.f32 %v2512, %v2516
        %vm2521 = vcmask 261120
        %v2522 = vsel %vm2521, %v2517, -inf
        %2523 = vmax.xlane.f32.xlu0 %v2522
        %v2524 = vpop.xlane.xlu0 %2523
        %v2525 = vsel %vm2521, %v2518, -inf
        %2526 = vmax.xlane.f32.xlu0 %v2525
        %v2527 = vpop.xlane.xlu0 %2526
        %v2528 = vsel %vm2521, %v2519, -inf
        %2529 = vmax.xlane.f32.xlu0 %v2528
        %v2530 = vpop.xlane.xlu0 %2529
        %v2531 = vsel %vm2521, %v2520, -inf
        %2532 = vmax.xlane.f32.xlu0 %v2531
        %v2533 = vpop.xlane.xlu0 %2532
        %v2534 = vsub.f32 %v2517, %v2524
        %v2535 = vsub.f32 %v2518, %v2527
        %v2536 = vsub.f32 %v2519, %v2530
        %v2537 = vsub.f32 %v2520, %v2533
        %v2538 = vmul.f32 %v2534, 1.442695
        %v2539 = vpow.pop %v2538
        %v2540 = vmul.f32 %v2535, 1.442695
        %v2541 = vpow.pop %v2540
        %v2542 = vmul.f32 %v2536, 1.442695
        %v2543 = vpow.pop %v2542
        %v2544 = vmul.f32 %v2537, 1.442695
        %v2545 = vpow.pop %v2544
        %v2546 = vsel %vm2521, %v2539, 0.0
        %2547 = vadd.xlane.f32.xlu0 %v2546
        %v2548 = vpop.xlane.xlu0 %2547
        %v2549 = vsel %vm2521, %v2541, 0.0
        %2550 = vadd.xlane.f32.xlu0 %v2549
        %v2551 = vpop.xlane.xlu0 %2550
        %v2552 = vsel %vm2521, %v2543, 0.0
        %2553 = vadd.xlane.f32.xlu0 %v2552
        %v2554 = vpop.xlane.xlu0 %2553
        %v2555 = vsel %vm2521, %v2545, 0.0
        %2556 = vadd.xlane.f32.xlu0 %v2555
        %v2557 = vpop.xlane.xlu0 %2556
        %v2558 = vrcp.pop %v2548
        %v2559 = vrcp.pop %v2551
        %v2560 = vrcp.pop %v2554
        %v2561 = vrcp.pop %v2557
        %v2562 = vmul.f32 %v2539, %v2558
        %v2563 = vmul.f32 %v2541, %v2559
        %v2564 = vmul.f32 %v2543, %v2560
        %v2565 = vmul.f32 %v2545, %v2561
        %v2567 = vsel %vm2521, %v2562, 0
        %v2570 = vsel %vm2521, %v2563, 0
        %v2573 = vsel %vm2521, %v2564, 0
        %v2576 = vsel %vm2521, %v2565, 0
        %2578 = vmatprep.subr.mxu0 %v2284
        %2579 = vmatpush1.msra.mxu0 %v2252
        %2580 = vmatprep.subr.mxu0 %v2285
        %2581 = vmatpush1.msra.mxu0 %v2253
        %2582 = vmatprep.subr.mxu0 %v2290
        %2583 = vmatpush1.msra.mxu0 %v2258
        %2584 = vmatprep.subr.mxu0 %v2291
        %2585 = vmatpush1.msra.mxu0 %v2259
        %2586 = vmatprep.subr.mxu0 0.0
        %2587 = vmatpush1.msra.mxu0 0.0
        %2588 = vmatprep.subr.mxu0 0.0
        %2589 = vmatpush1.msra.mxu0 0.0
        %2590 = vmatprep.subr.mxu0 0.0
        %2591 = vmatpush1.msra.mxu0 0.0
        %2592 = vmatprep.subr.mxu0 0.0
        %2593 = vmatpush1.msra.mxu0 0.0
        %2594 = vmatprep.subr.mxu0 0.0
        %2595 = vmatpush1.msra.mxu0 0.0
        %2596 = vmatprep.subr.mxu0 0.0
        %2597 = vmatpush1.msra.mxu0 0.0
        %2598 = vmatprep.subr.mxu0 0.0
        %2599 = vmatpush1.msra.mxu0 0.0
        %2600 = vmatprep.subr.mxu0 0.0
        %2601 = vmatpush1.msra.mxu0 0.0
        %2602 = vmatprep.subr.mxu0 0.0
        %2603 = vmatpush1.msra.mxu0 0.0
        %2604 = vmatprep.subr.mxu0 0.0
        %2605 = vmatpush1.msra.mxu0 0.0
        %2606 = vmatprep.subr.mxu0 0.0
        %2607 = vmatpush1.msra.mxu0 0.0
        %2608 = vmatprep.subr.mxu0 0.0
        %2609 = vmatpush1.msra.mxu0 0.0
        %2610 = vmatprep.subr.mxu0 0.0
        %2611 = vmatpush1.msra.mxu0 0.0
        %2612 = vmatprep.subr.mxu0 0.0
        %2613 = vmatpush1.msra.mxu0 0.0
        %2614 = vmatprep.subr.mxu0 0.0
        %2615 = vmatpush1.msra.mxu0 0.0
        %2616 = vmatprep.subr.mxu0 0.0
        %2617 = vmatpush1.msra.mxu0 0.0
        %2618 = vmatprep.subr.mxu0 0.0
        %2619 = vmatpush1.msra.mxu0 0.0
        %2620 = vmatprep.subr.mxu0 0.0
        %2621 = vmatpush1.msra.mxu0 0.0
        %2622 = vmatprep.subr.mxu0 0.0
        %2623 = vmatpush1.msra.mxu0 0.0
        %2624 = vmatprep.subr.mxu0 0.0
        %2625 = vmatpush1.msra.mxu0 0.0
        %2626 = vmatprep.subr.mxu0 0.0
        %2627 = vmatpush1.msra.mxu0 0.0
        %2628 = vmatprep.subr.mxu0 0.0
        %2629 = vmatpush1.msra.mxu0 0.0
        %2630 = vmatprep.subr.mxu0 0.0
        %2631 = vmatpush1.msra.mxu0 0.0
        %2632 = vmatprep.subr.mxu0 0.0
        %2633 = vmatpush1.msra.mxu0 0.0
        %2634 = vmatprep.subr.mxu0 0.0
        %2635 = vmatpush1.msra.mxu0 0.0
        %2636 = vmatprep.subr.mxu0 0.0
        %2637 = vmatpush1.msra.mxu0 0.0
        %2638 = vmatprep.subr.mxu0 0.0
        %2639 = vmatpush1.msra.mxu0 0.0
        %2640 = vmatprep.subr.mxu0 0.0
        %2641 = vmatpush1.msra.mxu0 0.0
        %2642 = vmatprep.mubr.f32.mxu0 0.0
        %2643 = vmatmul.mubr.f32.gmra.mrb[0].mxu0 %v2567
        %v2644 = vpop.f32.mrb[0].mxu0
        %v2645 = vadd.f32 0.0, %v2644
        %v2646 = vpop.f32.mrb[0].mxu0
        %v2647 = vadd.f32 0.0, %v2646
        %2648 = vmatprep.mubr.f32.mxu0 0.0
        %2649 = vmatmul.mubr.f32.gmra.mrb[0].mxu0 %v2570
        %v2650 = vpop.f32.mrb[0].mxu0
        %v2651 = vadd.f32 0.0, %v2650
        %v2652 = vpop.f32.mrb[0].mxu0
        %v2653 = vadd.f32 0.0, %v2652
        %2654 = vmatprep.mubr.f32.mxu0 0.0
        %2655 = vmatmul.mubr.f32.gmra.mrb[0].mxu0 %v2573
        %v2656 = vpop.f32.mrb[0].mxu0
        %v2657 = vadd.f32 0.0, %v2656
        %v2658 = vpop.f32.mrb[0].mxu0
        %v2659 = vadd.f32 0.0, %v2658
        %2660 = vmatprep.mubr.f32.mxu0 0.0
        %2661 = vmatmul.mubr.f32.gmra.mrb[0].mxu0 %v2576
        %v2662 = vpop.f32.mrb[0].mxu0
        %v2663 = vadd.f32 0.0, %v2662
        %v2664 = vpop.f32.mrb[0].mxu0
        %v2665 = vadd.f32 0.0, %v2664
        %2666 = vdwg.mxu0
        %v2667 = vld [vmem:[%s10] sm:$0xff]
        %v2668 = vld [vmem:[%s10 + $0x8] sm:$0xff]
        %v2670 = vsel %vm700, %v2667, 0
        %v2673 = vsel %vm700, %v2668, 0
        %2675 = vmatprep.subr.mxu0 %v2647
        %2676 = vmatpush1.msra.mxu0 %v2645
        %2677 = vmatprep.subr.mxu0 %v2653
        %2678 = vmatpush1.msra.mxu0 %v2651
        %2679 = vmatprep.subr.mxu0 0.0
        %2680 = vmatpush1.msra.mxu0 0.0
        %2681 = vmatprep.subr.mxu0 0.0
        %2682 = vmatpush1.msra.mxu0 0.0
        %2683 = vmatprep.subr.mxu0 0.0
        %2684 = vmatpush1.msra.mxu0 0.0
        %2685 = vmatprep.subr.mxu0 0.0
        %2686 = vmatpush1.msra.mxu0 0.0
        %2687 = vmatprep.subr.mxu0 0.0
        %2688 = vmatpush1.msra.mxu0 0.0
        %2689 = vmatprep.subr.mxu0 0.0
        %2690 = vmatpush1.msra.mxu0 0.0
        %2691 = vmatprep.subr.mxu0 0.0
        %2692 = vmatpush1.msra.mxu0 0.0
        %2693 = vmatprep.subr.mxu0 0.0
        %2694 = vmatpush1.msra.mxu0 0.0
        %2695 = vmatprep.subr.mxu0 0.0
        %2696 = vmatpush1.msra.mxu0 0.0
        %2697 = vmatprep.subr.mxu0 0.0
        %2698 = vmatpush1.msra.mxu0 0.0
        %2699 = vmatprep.subr.mxu0 0.0
        %2700 = vmatpush1.msra.mxu0 0.0
        %2701 = vmatprep.subr.mxu0 0.0
        %2702 = vmatpush1.msra.mxu0 0.0
        %2703 = vmatprep.subr.mxu0 0.0
        %2704 = vmatpush1.msra.mxu0 0.0
        %2705 = vmatprep.subr.mxu0 0.0
        %2706 = vmatpush1.msra.mxu0 0.0
        %2707 = vmatprep.subr.mxu0 0.0
        %2708 = vmatpush1.msra.mxu0 0.0
        %2709 = vmatprep.subr.mxu0 0.0
        %2710 = vmatpush1.msra.mxu0 0.0
        %2711 = vmatprep.subr.mxu0 0.0
        %2712 = vmatpush1.msra.mxu0 0.0
        %2713 = vmatprep.subr.mxu0 0.0
        %2714 = vmatpush1.msra.mxu0 0.0
        %2715 = vmatprep.subr.mxu0 0.0
        %2716 = vmatpush1.msra.mxu0 0.0
        %2717 = vmatprep.subr.mxu0 0.0
        %2718 = vmatpush1.msra.mxu0 0.0
        %2719 = vmatprep.subr.mxu0 0.0
        %2720 = vmatpush1.msra.mxu0 0.0
        %2721 = vmatprep.subr.mxu0 0.0
        %2722 = vmatpush1.msra.mxu0 0.0
        %2723 = vmatprep.subr.mxu0 0.0
        %2724 = vmatpush1.msra.mxu0 0.0
        %2725 = vmatprep.subr.mxu0 0.0
        %2726 = vmatpush1.msra.mxu0 0.0
        %2727 = vmatprep.subr.mxu0 0.0
        %2728 = vmatpush1.msra.mxu0 0.0
        %2729 = vmatprep.subr.mxu0 0.0
        %2730 = vmatpush1.msra.mxu0 0.0
        %2731 = vmatprep.subr.mxu0 0.0
        %2732 = vmatpush1.msra.mxu0 0.0
        %2733 = vmatprep.subr.mxu0 0.0
        %2734 = vmatpush1.msra.mxu0 0.0
        %2735 = vmatprep.subr.mxu0 0.0
        %2736 = vmatpush1.msra.mxu0 0.0
        %2737 = vmatprep.subr.mxu0 0.0
        %2738 = vmatpush1.msra.mxu0 0.0
        %2739 = vmatprep.mubr.f32.mxu0 0.0
        %2740 = vmatmul.mubr.f32.gmra.mrb[0].mxu0 %v2670
        %v2741 = vpop.f32.mrb[0].mxu0
        %v2742 = vadd.f32 %v540, %v2741
        %v2743 = vpop.f32.mrb[0].mxu0
        %v2744 = vadd.f32 %v541, %v2743
        %2745 = vmatprep.mubr.f32.mxu0 0.0
        %2746 = vmatmul.mubr.f32.gmra.mrb[0].mxu0 %v2673
        %v2747 = vpop.f32.mrb[0].mxu0
        %v2748 = vadd.f32 %v542, %v2747
        %v2749 = vpop.f32.mrb[0].mxu0
        %v2750 = vadd.f32 %v543, %v2749
        %2751 = vdwg.mxu0
        %2752 = vmatprep.subr.mxu0 %v2659
        %2753 = vmatpush1.msra.mxu0 %v2657
        %2754 = vmatprep.subr.mxu0 %v2665
        %2755 = vmatpush1.msra.mxu0 %v2663
        %2756 = vmatprep.subr.mxu0 0.0
        %2757 = vmatpush1.msra.mxu0 0.0
        %2758 = vmatprep.subr.mxu0 0.0
        %2759 = vmatpush1.msra.mxu0 0.0
        %2760 = vmatprep.subr.mxu0 0.0
        %2761 = vmatpush1.msra.mxu0 0.0
        %2762 = vmatprep.subr.mxu0 0.0
        %2763 = vmatpush1.msra.mxu0 0.0
        %2764 = vmatprep.subr.mxu0 0.0
        %2765 = vmatpush1.msra.mxu0 0.0
        %2766 = vmatprep.subr.mxu0 0.0
        %2767 = vmatpush1.msra.mxu0 0.0
        %2768 = vmatprep.subr.mxu0 0.0
        %2769 = vmatpush1.msra.mxu0 0.0
        %2770 = vmatprep.subr.mxu0 0.0
        %2771 = vmatpush1.msra.mxu0 0.0
        %2772 = vmatprep.subr.mxu0 0.0
        %2773 = vmatpush1.msra.mxu0 0.0
        %2774 = vmatprep.subr.mxu0 0.0
        %2775 = vmatpush1.msra.mxu0 0.0
        %2776 = vmatprep.subr.mxu0 0.0
        %2777 = vmatpush1.msra.mxu0 0.0
        %2778 = vmatprep.subr.mxu0 0.0
        %2779 = vmatpush1.msra.mxu0 0.0
        %2780 = vmatprep.subr.mxu0 0.0
        %2781 = vmatpush1.msra.mxu0 0.0
        %2782 = vmatprep.subr.mxu0 0.0
        %2783 = vmatpush1.msra.mxu0 0.0
        %2784 = vmatprep.subr.mxu0 0.0
        %2785 = vmatpush1.msra.mxu0 0.0
        %2786 = vmatprep.subr.mxu0 0.0
        %2787 = vmatpush1.msra.mxu0 0.0
        %2788 = vmatprep.subr.mxu0 0.0
        %2789 = vmatpush1.msra.mxu0 0.0
        %2790 = vmatprep.subr.mxu0 0.0
        %2791 = vmatpush1.msra.mxu0 0.0
        %2792 = vmatprep.subr.mxu0 0.0
        %2793 = vmatpush1.msra.mxu0 0.0
        %2794 = vmatprep.subr.mxu0 0.0
        %2795 = vmatpush1.msra.mxu0 0.0
        %2796 = vmatprep.subr.mxu0 0.0
        %2797 = vmatpush1.msra.mxu0 0.0
        %2798 = vmatprep.subr.mxu0 0.0
        %2799 = vmatpush1.msra.mxu0 0.0
        %2800 = vmatprep.subr.mxu0 0.0
        %2801 = vmatpush1.msra.mxu0 0.0
        %2802 = vmatprep.subr.mxu0 0.0
        %2803 = vmatpush1.msra.mxu0 0.0
        %2804 = vmatprep.subr.mxu0 0.0
        %2805 = vmatpush1.msra.mxu0 0.0
        %2806 = vmatprep.subr.mxu0 0.0
        %2807 = vmatpush1.msra.mxu0 0.0
        %2808 = vmatprep.subr.mxu0 0.0
        %2809 = vmatpush1.msra.mxu0 0.0
        %2810 = vmatprep.subr.mxu0 0.0
        %2811 = vmatpush1.msra.mxu0 0.0
        %2812 = vmatprep.subr.mxu0 0.0
        %2813 = vmatpush1.msra.mxu0 0.0
        %2814 = vmatprep.subr.mxu0 0.0
        %2815 = vmatpush1.msra.mxu0 0.0
        %2816 = vmatprep.mubr.f32.mxu0 0.0
        %2817 = vmatmul.mubr.f32.gmra.mrb[0].mxu0 %v2670
        %v2818 = vpop.f32.mrb[0].mxu0
        %v2819 = vadd.f32 %v544, %v2818
        %v2820 = vpop.f32.mrb[0].mxu0
        %v2821 = vadd.f32 %v545, %v2820
        %2822 = vmatprep.mubr.f32.mxu0 0.0
        %2823 = vmatmul.mubr.f32.gmra.mrb[0].mxu0 %v2673
        %v2824 = vpop.f32.mrb[0].mxu0
        %v2825 = vadd.f32 %v546, %v2824
        %v2826 = vpop.f32.mrb[0].mxu0
        %v2827 = vadd.f32 %v547, %v2826
        %2828 = vdwg.mxu0
        %v2829 = vld [vmem:[%s11] sm:$0xff]
        %v2830 = vld [vmem:[%s11 + $0x8] sm:$0xff]
        %v2831 = vld [vmem:[%s12] sm:$0xff]
        %v2832 = vld [vmem:[%s12 + $0x8] sm:$0xff]
        %v2833 = vadd.f32 %v2742, %v2748
        %v2834 = vrot.slane %v2833, 4
        %v2835 = vadd.f32 %v2833, %v2834
        %v2836 = vrot.slane %v2835, 2
        %v2837 = vadd.f32 %v2835, %v2836
        %v2838 = vrot.slane %v2837, 1
        %v2839 = vadd.f32 %v2837, %v2838
        %v2840 = vsel %vm559, %v2744, 0.0
        %v2841 = vsel %vm559, %v2750, 0.0
        %v2842 = vadd.f32 %v2840, %v2841
        %v2843 = vrot.slane %v2842, 4
        %v2844 = vadd.f32 %v2842, %v2843
        %v2845 = vrot.slane %v2844, 2
        %v2846 = vadd.f32 %v2844, %v2845
        %v2847 = vrot.slane %v2846, 1
        %v2848 = vadd.f32 %v2846, %v2847
        %v2849 = vmul.f32 %v2839, %v569
        %v2850 = vmul.f32 %v2848, %v569
        %v2851 = vsub.f32 %v2742, %v2849
        %v2852 = vsub.f32 %v2744, %v2850
        %v2853 = vsub.f32 %v2748, %v2849
        %v2854 = vsub.f32 %v2750, %v2850
        %v2855 = vmul.f32 %v2851, %v2851
        %v2856 = vmul.f32 %v2852, %v2852
        %v2857 = vmul.f32 %v2853, %v2853
        %v2858 = vmul.f32 %v2854, %v2854
        %v2859 = vadd.f32 %v2855, %v2857
        %v2860 = vrot.slane %v2859, 4
        %v2861 = vadd.f32 %v2859, %v2860
        %v2862 = vrot.slane %v2861, 2
        %v2863 = vadd.f32 %v2861, %v2862
        %v2864 = vrot.slane %v2863, 1
        %v2865 = vadd.f32 %v2863, %v2864
        %v2866 = vsel %vm559, %v2856, 0.0
        %v2867 = vsel %vm559, %v2858, 0.0
        %v2868 = vadd.f32 %v2866, %v2867
        %v2869 = vrot.slane %v2868, 4
        %v2870 = vadd.f32 %v2868, %v2869
        %v2871 = vrot.slane %v2870, 2
        %v2872 = vadd.f32 %v2870, %v2871
        %v2873 = vrot.slane %v2872, 1
        %v2874 = vadd.f32 %v2872, %v2873
        %v2875 = vmul.f32 %v2865, %v569
        %v2876 = vmul.f32 %v2874, %v569
        %v2877 = vadd.f32 %v2875, 1e-05
        %v2878 = vadd.f32 %v2876, 1e-05
        %v2879 = vrsqrt.pop %v2877
        %v2880 = vrsqrt.pop %v2878
        %v2881 = vmul.f32 %v2851, %v2879
        %v2882 = vmul.f32 %v2852, %v2880
        %v2883 = vmul.f32 %v2853, %v2879
        %v2884 = vmul.f32 %v2854, %v2880
        %2886 = vset.pattern.permute.xlu0 0
        %2887 = vperm.xlu0 %2886, %v2829
        %v2888 = vpop.permute.xlu0 %2887
        %2891 = vset.pattern.permute.xlu0 0
        %2892 = vperm.xlu0 %2891, %v2830
        %v2893 = vpop.permute.xlu0 %2892
        %v2895 = vmul.f32 %v2881, %v2888
        %v2896 = vmul.f32 %v2882, %v2888
        %v2897 = vmul.f32 %v2883, %v2893
        %v2898 = vmul.f32 %v2884, %v2893
        %2900 = vset.pattern.permute.xlu0 0
        %2901 = vperm.xlu0 %2900, %v2831
        %v2902 = vpop.permute.xlu0 %2901
        %2905 = vset.pattern.permute.xlu0 0
        %2906 = vperm.xlu0 %2905, %v2832
        %v2907 = vpop.permute.xlu0 %2906
        %v2909 = vadd.f32 %v2895, %v2902
        %v2910 = vadd.f32 %v2896, %v2902
        %v2911 = vadd.f32 %v2897, %v2907
        %v2912 = vadd.f32 %v2898, %v2907
        %v2913 = vadd.f32 %v2819, %v2825
        %v2914 = vrot.slane %v2913, 4
        %v2915 = vadd.f32 %v2913, %v2914
        %v2916 = vrot.slane %v2915, 2
        %v2917 = vadd.f32 %v2915, %v2916
        %v2918 = vrot.slane %v2917, 1
        %v2919 = vadd.f32 %v2917, %v2918
        %v2920 = vsel %vm559, %v2821, 0.0
        %v2921 = vsel %vm559, %v2827, 0.0
        %v2922 = vadd.f32 %v2920, %v2921
        %v2923 = vrot.slane %v2922, 4
        %v2924 = vadd.f32 %v2922, %v2923
        %v2925 = vrot.slane %v2924, 2
        %v2926 = vadd.f32 %v2924, %v2925
        %v2927 = vrot.slane %v2926, 1
        %v2928 = vadd.f32 %v2926, %v2927
        %v2929 = vmul.f32 %v2919, %v569
        %v2930 = vmul.f32 %v2928, %v569
        %v2931 = vsub.f32 %v2819, %v2929
        %v2932 = vsub.f32 %v2821, %v2930
        %v2933 = vsub.f32 %v2825, %v2929
        %v2934 = vsub.f32 %v2827, %v2930
        %v2935 = vmul.f32 %v2931, %v2931
        %v2936 = vmul.f32 %v2932, %v2932
        %v2937 = vmul.f32 %v2933, %v2933
        %v2938 = vmul.f32 %v2934, %v2934
        %v2939 = vadd.f32 %v2935, %v2937
        %v2940 = vrot.slane %v2939, 4
        %v2941 = vadd.f32 %v2939, %v2940
        %v2942 = vrot.slane %v2941, 2
        %v2943 = vadd.f32 %v2941, %v2942
        %v2944 = vrot.slane %v2943, 1
        %v2945 = vadd.f32 %v2943, %v2944
        %v2946 = vsel %vm559, %v2936, 0.0
        %v2947 = vsel %vm559, %v2938, 0.0
        %v2948 = vadd.f32 %v2946, %v2947
        %v2949 = vrot.slane %v2948, 4
        %v2950 = vadd.f32 %v2948, %v2949
        %v2951 = vrot.slane %v2950, 2
        %v2952 = vadd.f32 %v2950, %v2951
        %v2953 = vrot.slane %v2952, 1
        %v2954 = vadd.f32 %v2952, %v2953
        %v2955 = vmul.f32 %v2945, %v569
        %v2956 = vmul.f32 %v2954, %v569
        %v2957 = vadd.f32 %v2955, 1e-05
        %v2958 = vadd.f32 %v2956, 1e-05
        %v2959 = vrsqrt.pop %v2957
        %v2960 = vrsqrt.pop %v2958
        %v2961 = vmul.f32 %v2931, %v2959
        %v2962 = vmul.f32 %v2932, %v2960
        %v2963 = vmul.f32 %v2933, %v2959
        %v2964 = vmul.f32 %v2934, %v2960
        %v2965 = vmul.f32 %v2961, %v2888
        %v2966 = vmul.f32 %v2962, %v2888
        %v2967 = vmul.f32 %v2963, %v2893
        %v2968 = vmul.f32 %v2964, %v2893
        %v2969 = vadd.f32 %v2965, %v2902
        %v2970 = vadd.f32 %v2966, %v2902
        %v2971 = vadd.f32 %v2967, %v2907
        %v2972 = vadd.f32 %v2968, %v2907
        %v2973 = vld [vmem:[%s13] sm:$0xff]
        %v2974 = vld [vmem:[%s13 + $0x8] sm:$0xff]
        %v2975 = vld [vmem:[%s13 + $0x10] sm:$0xff]
        %v2976 = vld [vmem:[%s13 + $0x18] sm:$0xff]
        %v2978 = vsel %vm700, %v2973, 0
        %v2981 = vsel %vm700, %v2974, 0
        %v2984 = vsel %vm700, %v2975, 0
        %v2987 = vsel %vm700, %v2976, 0
        %2989 = vmatprep.subr.mxu0 %v2910
        %2990 = vmatpush1.msra.mxu0 %v2909
        %2991 = vmatprep.subr.mxu0 %v2912
        %2992 = vmatpush1.msra.mxu0 %v2911
        %2993 = vmatprep.subr.mxu0 0.0
        %2994 = vmatpush1.msra.mxu0 0.0
        %2995 = vmatprep.subr.mxu0 0.0
        %2996 = vmatpush1.msra.mxu0 0.0
        %2997 = vmatprep.subr.mxu0 0.0
        %2998 = vmatpush1.msra.mxu0 0.0
        %2999 = vmatprep.subr.mxu0 0.0
        %3000 = vmatpush1.msra.mxu0 0.0
        %3001 = vmatprep.subr.mxu0 0.0
        %3002 = vmatpush1.msra.mxu0 0.0
        %3003 = vmatprep.subr.mxu0 0.0
        %3004 = vmatpush1.msra.mxu0 0.0
        %3005 = vmatprep.subr.mxu0 0.0
        %3006 = vmatpush1.msra.mxu0 0.0
        %3007 = vmatprep.subr.mxu0 0.0
        %3008 = vmatpush1.msra.mxu0 0.0
        %3009 = vmatprep.subr.mxu0 0.0
        %3010 = vmatpush1.msra.mxu0 0.0
        %3011 = vmatprep.subr.mxu0 0.0
        %3012 = vmatpush1.msra.mxu0 0.0
        %3013 = vmatprep.subr.mxu0 0.0
        %3014 = vmatpush1.msra.mxu0 0.0
        %3015 = vmatprep.subr.mxu0 0.0
        %3016 = vmatpush1.msra.mxu0 0.0
        %3017 = vmatprep.subr.mxu0 0.0
        %3018 = vmatpush1.msra.mxu0 0.0
        %3019 = vmatprep.subr.mxu0 0.0
        %3020 = vmatpush1.msra.mxu0 0.0
        %3021 = vmatprep.subr.mxu0 0.0
        %3022 = vmatpush1.msra.mxu0 0.0
        %3023 = vmatprep.subr.mxu0 0.0
        %3024 = vmatpush1.msra.mxu0 0.0
        %3025 = vmatprep.subr.mxu0 0.0
        %3026 = vmatpush1.msra.mxu0 0.0
        %3027 = vmatprep.subr.mxu0 0.0
        %3028 = vmatpush1.msra.mxu0 0.0
        %3029 = vmatprep.subr.mxu0 0.0
        %3030 = vmatpush1.msra.mxu0 0.0
        %3031 = vmatprep.subr.mxu0 0.0
        %3032 = vmatpush1.msra.mxu0 0.0
        %3033 = vmatprep.subr.mxu0 0.0
        %3034 = vmatpush1.msra.mxu0 0.0
        %3035 = vmatprep.subr.mxu0 0.0
        %3036 = vmatpush1.msra.mxu0 0.0
        %3037 = vmatprep.subr.mxu0 0.0
        %3038 = vmatpush1.msra.mxu0 0.0
        %3039 = vmatprep.subr.mxu0 0.0
        %3040 = vmatpush1.msra.mxu0 0.0
        %3041 = vmatprep.subr.mxu0 0.0
        %3042 = vmatpush1.msra.mxu0 0.0
        %3043 = vmatprep.subr.mxu0 0.0
        %3044 = vmatpush1.msra.mxu0 0.0
        %3045 = vmatprep.subr.mxu0 0.0
        %3046 = vmatpush1.msra.mxu0 0.0
        %3047 = vmatprep.subr.mxu0 0.0
        %3048 = vmatpush1.msra.mxu0 0.0
        %3049 = vmatprep.subr.mxu0 0.0
        %3050 = vmatpush1.msra.mxu0 0.0
        %3051 = vmatprep.subr.mxu0 0.0
        %3052 = vmatpush1.msra.mxu0 0.0
        %3053 = vmatprep.mubr.f32.mxu0 0.0
        %3054 = vmatmul.mubr.f32.gmra.mrb[0].mxu0 %v2978
        %v3055 = vpop.f32.mrb[0].mxu0
        %v3056 = vadd.f32 0.0, %v3055
        %v3057 = vpop.f32.mrb[0].mxu0
        %v3058 = vadd.f32 0.0, %v3057
        %3059 = vmatprep.mubr.f32.mxu0 0.0
        %3060 = vmatmul.mubr.f32.gmra.mrb[0].mxu0 %v2981
        %v3061 = vpop.f32.mrb[0].mxu0
        %v3062 = vadd.f32 0.0, %v3061
        %v3063 = vpop.f32.mrb[0].mxu0
        %v3064 = vadd.f32 0.0, %v3063
        %3065 = vmatprep.mubr.f32.mxu0 0.0
        %3066 = vmatmul.mubr.f32.gmra.mrb[0].mxu0 %v2984
        %v3067 = vpop.f32.mrb[0].mxu0
        %v3068 = vadd.f32 0.0, %v3067
        %v3069 = vpop.f32.mrb[0].mxu0
        %v3070 = vadd.f32 0.0, %v3069
        %3071 = vmatprep.mubr.f32.mxu0 0.0
        %3072 = vmatmul.mubr.f32.gmra.mrb[0].mxu0 %v2987
        %v3073 = vpop.f32.mrb[0].mxu0
        %v3074 = vadd.f32 0.0, %v3073
        %v3075 = vpop.f32.mrb[0].mxu0
        %v3076 = vadd.f32 0.0, %v3075
        %3077 = vdwg.mxu0
        %v3078 = vld [vmem:[%s14] sm:$0xff]
        %v3079 = vld [vmem:[%s14 + $0x8] sm:$0xff]
        %v3080 = vld [vmem:[%s14 + $0x10] sm:$0xff]
        %v3081 = vld [vmem:[%s14 + $0x18] sm:$0xff]
        %v3083 = vsel %vm700, %v3078, 0
        %v3086 = vsel %vm700, %v3079, 0
        %v3089 = vsel %vm700, %v3080, 0
        %v3092 = vsel %vm700, %v3081, 0
        %3094 = vmatprep.subr.mxu0 %v2970
        %3095 = vmatpush1.msra.mxu0 %v2969
        %3096 = vmatprep.subr.mxu0 %v2972
        %3097 = vmatpush1.msra.mxu0 %v2971
        %3098 = vmatprep.subr.mxu0 0.0
        %3099 = vmatpush1.msra.mxu0 0.0
        %3100 = vmatprep.subr.mxu0 0.0
        %3101 = vmatpush1.msra.mxu0 0.0
        %3102 = vmatprep.subr.mxu0 0.0
        %3103 = vmatpush1.msra.mxu0 0.0
        %3104 = vmatprep.subr.mxu0 0.0
        %3105 = vmatpush1.msra.mxu0 0.0
        %3106 = vmatprep.subr.mxu0 0.0
        %3107 = vmatpush1.msra.mxu0 0.0
        %3108 = vmatprep.subr.mxu0 0.0
        %3109 = vmatpush1.msra.mxu0 0.0
        %3110 = vmatprep.subr.mxu0 0.0
        %3111 = vmatpush1.msra.mxu0 0.0
        %3112 = vmatprep.subr.mxu0 0.0
        %3113 = vmatpush1.msra.mxu0 0.0
        %3114 = vmatprep.subr.mxu0 0.0
        %3115 = vmatpush1.msra.mxu0 0.0
        %3116 = vmatprep.subr.mxu0 0.0
        %3117 = vmatpush1.msra.mxu0 0.0
        %3118 = vmatprep.subr.mxu0 0.0
        %3119 = vmatpush1.msra.mxu0 0.0
        %3120 = vmatprep.subr.mxu0 0.0
        %3121 = vmatpush1.msra.mxu0 0.0
        %3122 = vmatprep.subr.mxu0 0.0
        %3123 = vmatpush1.msra.mxu0 0.0
        %3124 = vmatprep.subr.mxu0 0.0
        %3125 = vmatpush1.msra.mxu0 0.0
        %3126 = vmatprep.subr.mxu0 0.0
        %3127 = vmatpush1.msra.mxu0 0.0
        %3128 = vmatprep.subr.mxu0 0.0
        %3129 = vmatpush1.msra.mxu0 0.0
        %3130 = vmatprep.subr.mxu0 0.0
        %3131 = vmatpush1.msra.mxu0 0.0
        %3132 = vmatprep.subr.mxu0 0.0
        %3133 = vmatpush1.msra.mxu0 0.0
        %3134 = vmatprep.subr.mxu0 0.0
        %3135 = vmatpush1.msra.mxu0 0.0
        %3136 = vmatprep.subr.mxu0 0.0
        %3137 = vmatpush1.msra.mxu0 0.0
        %3138 = vmatprep.subr.mxu0 0.0
        %3139 = vmatpush1.msra.mxu0 0.0
        %3140 = vmatprep.subr.mxu0 0.0
        %3141 = vmatpush1.msra.mxu0 0.0
        %3142 = vmatprep.subr.mxu0 0.0
        %3143 = vmatpush1.msra.mxu0 0.0
        %3144 = vmatprep.subr.mxu0 0.0
        %3145 = vmatpush1.msra.mxu0 0.0
        %3146 = vmatprep.subr.mxu0 0.0
        %3147 = vmatpush1.msra.mxu0 0.0
        %3148 = vmatprep.subr.mxu0 0.0
        %3149 = vmatpush1.msra.mxu0 0.0
        %3150 = vmatprep.subr.mxu0 0.0
        %3151 = vmatpush1.msra.mxu0 0.0
        %3152 = vmatprep.subr.mxu0 0.0
        %3153 = vmatpush1.msra.mxu0 0.0
        %3154 = vmatprep.subr.mxu0 0.0
        %3155 = vmatpush1.msra.mxu0 0.0
        %3156 = vmatprep.subr.mxu0 0.0
        %3157 = vmatpush1.msra.mxu0 0.0
        %3158 = vmatprep.mubr.f32.mxu0 0.0
        %3159 = vmatmul.mubr.f32.gmra.mrb[0].mxu0 %v3083
        %v3160 = vpop.f32.mrb[0].mxu0
        %v3161 = vadd.f32 0.0, %v3160
        %v3162 = vpop.f32.mrb[0].mxu0
        %v3163 = vadd.f32 0.0, %v3162
        %3164 = vmatprep.mubr.f32.mxu0 0.0
        %3165 = vmatmul.mubr.f32.gmra.mrb[0].mxu0 %v3086
        %v3166 = vpop.f32.mrb[0].mxu0
        %v3167 = vadd.f32 0.0, %v3166
        %v3168 = vpop.f32.mrb[0].mxu0
        %v3169 = vadd.f32 0.0, %v3168
        %3170 = vmatprep.mubr.f32.mxu0 0.0
        %3171 = vmatmul.mubr.f32.gmra.mrb[0].mxu0 %v3089
        %v3172 = vpop.f32.mrb[0].mxu0
        %v3173 = vadd.f32 0.0, %v3172
        %v3174 = vpop.f32.mrb[0].mxu0
        %v3175 = vadd.f32 0.0, %v3174
        %3176 = vmatprep.mubr.f32.mxu0 0.0
        %3177 = vmatmul.mubr.f32.gmra.mrb[0].mxu0 %v3092
        %v3178 = vpop.f32.mrb[0].mxu0
        %v3179 = vadd.f32 0.0, %v3178
        %v3180 = vpop.f32.mrb[0].mxu0
        %v3181 = vadd.f32 0.0, %v3180
        %3182 = vdwg.mxu0
        %v3183 = vmul.f32 %v3056, 0.5
        %v3184 = vmul.f32 %v3058, 0.5
        %v3185 = vmul.f32 %v3062, 0.5
        %v3186 = vmul.f32 %v3064, 0.5
        %v3187 = vmul.f32 %v3068, 0.5
        %v3188 = vmul.f32 %v3070, 0.5
        %v3189 = vmul.f32 %v3074, 0.5
        %v3190 = vmul.f32 %v3076, 0.5
        %v3191 = vmul.f32 %v3056, 0.70710677
        %v3192 = vmul.f32 %v3058, 0.70710677
        %v3193 = vmul.f32 %v3062, 0.70710677
        %v3194 = vmul.f32 %v3064, 0.70710677
        %v3195 = vmul.f32 %v3068, 0.70710677
        %v3196 = vmul.f32 %v3070, 0.70710677
        %v3197 = vmul.f32 %v3074, 0.70710677
        %v3198 = vmul.f32 %v3076, 0.70710677
        %v3199 = verf.f32.pop %v3191
        %v3200 = verf.f32.pop %v3192
        %v3201 = verf.f32.pop %v3193
        %v3202 = verf.f32.pop %v3194
        %v3203 = verf.f32.pop %v3195
        %v3204 = verf.f32.pop %v3196
        %v3205 = verf.f32.pop %v3197
        %v3206 = verf.f32.pop %v3198
        %v3207 = vadd.f32 %v3199, 1.0
        %v3208 = vadd.f32 %v3200, 1.0
        %v3209 = vadd.f32 %v3201, 1.0
        %v3210 = vadd.f32 %v3202, 1.0
        %v3211 = vadd.f32 %v3203, 1.0
        %v3212 = vadd.f32 %v3204, 1.0
        %v3213 = vadd.f32 %v3205, 1.0
        %v3214 = vadd.f32 %v3206, 1.0
        %v3215 = vmul.f32 %v3183, %v3207
        %v3216 = vmul.f32 %v3184, %v3208
        %v3217 = vmul.f32 %v3185, %v3209
        %v3218 = vmul.f32 %v3186, %v3210
        %v3219 = vmul.f32 %v3187, %v3211
        %v3220 = vmul.f32 %v3188, %v3212
        %v3221 = vmul.f32 %v3189, %v3213
        %v3222 = vmul.f32 %v3190, %v3214
        %v3223 = vmul.f32 %v3215, %v3161
        %v3224 = vmul.f32 %v3216, %v3163
        %v3225 = vmul.f32 %v3217, %v3167
        %v3226 = vmul.f32 %v3218, %v3169
        %v3227 = vmul.f32 %v3219, %v3173
        %v3228 = vmul.f32 %v3220, %v3175
        %v3229 = vmul.f32 %v3221, %v3179
        %v3230 = vmul.f32 %v3222, %v3181
        %v3231 = vld [vmem:[%s15] sm:$0xff]
        %v3232 = vld [vmem:[%s15 + $0x8] sm:$0xff]
        %v3234 = vsel %vm2521, %v3231, 0
        %v3237 = vsel %vm2521, %v3232, 0
        %3239 = vmatprep.subr.mxu0 %v3224
        %3240 = vmatpush1.msra.mxu0 %v3223
        %3241 = vmatprep.subr.mxu0 %v3226
        %3242 = vmatpush1.msra.mxu0 %v3225
        %3243 = vmatprep.subr.mxu0 %v3228
        %3244 = vmatpush1.msra.mxu0 %v3227
        %3245 = vmatprep.subr.mxu0 %v3230
        %3246 = vmatpush1.msra.mxu0 %v3229
        %3247 = vmatprep.subr.mxu0 0.0
        %3248 = vmatpush1.msra.mxu0 0.0
        %3249 = vmatprep.subr.mxu0 0.0
        %3250 = vmatpush1.msra.mxu0 0.0
        %3251 = vmatprep.subr.mxu0 0.0
        %3252 = vmatpush1.msra.mxu0 0.0
        %3253 = vmatprep.subr.mxu0 0.0
        %3254 = vmatpush1.msra.mxu0 0.0
        %3255 = vmatprep.subr.mxu0 0.0
        %3256 = vmatpush1.msra.mxu0 0.0
        %3257 = vmatprep.subr.mxu0 0.0
        %3258 = vmatpush1.msra.mxu0 0.0
        %3259 = vmatprep.subr.mxu0 0.0
        %3260 = vmatpush1.msra.mxu0 0.0
        %3261 = vmatprep.subr.mxu0 0.0
        %3262 = vmatpush1.msra.mxu0 0.0
        %3263 = vmatprep.subr.mxu0 0.0
        %3264 = vmatpush1.msra.mxu0 0.0
        %3265 = vmatprep.subr.mxu0 0.0
        %3266 = vmatpush1.msra.mxu0 0.0
        %3267 = vmatprep.subr.mxu0 0.0
        %3268 = vmatpush1.msra.mxu0 0.0
        %3269 = vmatprep.subr.mxu0 0.0
        %3270 = vmatpush1.msra.mxu0 0.0
        %3271 = vmatprep.subr.mxu0 0.0
        %3272 = vmatpush1.msra.mxu0 0.0
        %3273 = vmatprep.subr.mxu0 0.0
        %3274 = vmatpush1.msra.mxu0 0.0
        %3275 = vmatprep.subr.mxu0 0.0
        %3276 = vmatpush1.msra.mxu0 0.0
        %3277 = vmatprep.subr.mxu0 0.0
        %3278 = vmatpush1.msra.mxu0 0.0
        %3279 = vmatprep.subr.mxu0 0.0
        %3280 = vmatpush1.msra.mxu0 0.0
        %3281 = vmatprep.subr.mxu0 0.0
        %3282 = vmatpush1.msra.mxu0 0.0
        %3283 = vmatprep.subr.mxu0 0.0
        %3284 = vmatpush1.msra.mxu0 0.0
        %3285 = vmatprep.subr.mxu0 0.0
        %3286 = vmatpush1.msra.mxu0 0.0
        %3287 = vmatprep.subr.mxu0 0.0
        %3288 = vmatpush1.msra.mxu0 0.0
        %3289 = vmatprep.subr.mxu0 0.0
        %3290 = vmatpush1.msra.mxu0 0.0
        %3291 = vmatprep.subr.mxu0 0.0
        %3292 = vmatpush1.msra.mxu0 0.0
        %3293 = vmatprep.subr.mxu0 0.0
        %3294 = vmatpush1.msra.mxu0 0.0
        %3295 = vmatprep.subr.mxu0 0.0
        %3296 = vmatpush1.msra.mxu0 0.0
        %3297 = vmatprep.subr.mxu0 0.0
        %3298 = vmatpush1.msra.mxu0 0.0
        %3299 = vmatprep.subr.mxu0 0.0
        %3300 = vmatpush1.msra.mxu0 0.0
        %3301 = vmatprep.subr.mxu0 0.0
        %3302 = vmatpush1.msra.mxu0 0.0
        %3303 = vmatprep.mubr.f32.mxu0 0.0
        %3304 = vmatmul.mubr.f32.gmra.mrb[0].mxu0 %v3234
        %v3305 = vpop.f32.mrb[0].mxu0
        %v3306 = vadd.f32 %v2742, %v3305
        %v3307 = vpop.f32.mrb[0].mxu0
        %v3308 = vadd.f32 %v2744, %v3307
        %3309 = vmatprep.mubr.f32.mxu0 0.0
        %3310 = vmatmul.mubr.f32.gmra.mrb[0].mxu0 %v3237
        %v3311 = vpop.f32.mrb[0].mxu0
        %v3312 = vadd.f32 %v2748, %v3311
        %v3313 = vpop.f32.mrb[0].mxu0
        %v3314 = vadd.f32 %v2750, %v3313
        %3315 = vdwg.mxu0
        %3316 = vst [vmem:[%s529] sm:$0xff] %v3306
        %3317 = vst.msk [vmem:[%s529 + $0x8] sm:$0xff] %vm559, %v3308
        %3318 = vst [vmem:[%s529 + $0x10] sm:$0xff] %v3312
        %3319 = vst.msk [vmem:[%s529 + $0x18] sm:$0xff] %vm559, %v3314
        %s3320 = sand.u32 %s384, 1
        %s3321 = scalar_lea.sflag [#allocation4], %s3320
        %s3322 = sand.u32 %s384, 1
        %s3323 = smul.addr %s3322, 32
        %s3324 = scalar_lea.vmem [#allocation3], %s3323
        // Predicated region
        $region85: #{tpu_custom_call.1} parent=83 // pred_check
          %p3325 = pneg %p394
        $region86: #{tpu_custom_call.1} parent=83 // pred_check_branch
          %3327 = sbr.rel (%p3325) target = $region88
        $region87: #{tpu_custom_call.1} parent=83 // pred_region
          %s3329 = ssub.s32 512, 512
          %3330 = vsyncadd %s3321, %s3329
          %s3331 = smul.addr %s30, 4
          %s3332 = smul.addr %s3331, 128
          %s3333 = scalar_lea.hbm %s16, %s3332
          %s3334 = sshll.u32 %s3324, 4
          %s3335 = int_to_ptr.vmem [resolvable:$true] %s3334
          %3340 = dma.vmem_to_hbm [thread:$0]  %s3335, 512, %s3333, %s3321, 256, 256, 16
        $region88: #{tpu_custom_call.1} parent=83 // pred_fallthru
          _
      $region84: #{tpu_custom_call.1} parent=5 // pred_fallthru
        _
      %p3341 = scmp.le.s32.totalorder 2, %s25
      // Predicated region
      $region89: #{tpu_custom_call.1} parent=5 // pred_check
        %p3342 = pneg %p3341
      $region90: #{tpu_custom_call.1} parent=5 // pred_check_branch
        %3344 = sbr.rel (%p3342) target = $region92
      $region91: #{tpu_custom_call.1} parent=5 // pred_region
        %s3345 = ssub.s32 %s25, 2
        // Predicated region
        $region93: #{tpu_custom_call.1} parent=91 // pred_check
          %p3346 = pneg %p400
        $region94: #{tpu_custom_call.1} parent=91 // pred_check_branch
          %3348 = sbr.rel (%p3346) target = $region96
        $region95: #{tpu_custom_call.1} parent=91 // pred_region
          %s3349 = sand.u32 %s385, 1
          %s3350 = scalar_lea.sflag [#allocation4], %s3349
          %s3351 = sand.u32 %s385, 1
          %s3352 = smul.addr %s3351, 32
          %s3353 = scalar_lea.vmem [#allocation3], %s3352
          %3354 = dma.done %s3350, 512
        $region96: #{tpu_custom_call.1} parent=91 // pred_fallthru
          _
      $region92: #{tpu_custom_call.1} parent=5 // pred_fallthru
        _
    $region6: #{tpu_custom_call.1} parent=1 // loop_footer
      %s29 = sadd.s32 1, %s25
    $region7: #{tpu_custom_call.1} parent=1 // loop_footer_branch
      %24 = sbr.rel target = $region3
    $region8: #{tpu_custom_call.1} parent=1 // loop_exit
      _
    %3355 = vsyncpa [#allocation4], 1
    %s3356 = scalar_lea.sflag [#allocation4], 1
    %3357 = vsyncpa %s3356, 1

</llo_original>
